<compile_context>
chip_gen: v7x
topology: tpu7x:2x2x1
jax: 0.10.0
libtpu: 0.0.40
codegen_flags: <defaults>
</compile_context>

<pallas_src>
import functools

import jax
import jax.numpy as jnp
from jax import lax
from jax.experimental import pallas as pl
from jax.experimental.pallas import tpu as pltpu


# ---------------------------------------------------------------------------
# Hardware rotate-direction probe (resolved once, outside any jit trace)
# ---------------------------------------------------------------------------

def _probe_roll_matches_jnp():
    """True iff pltpu.roll(x, s, a) == jnp.roll(x, s, a) on this backend."""
    def _kernel(x_ref, o_ref):
        o_ref[...] = pltpu.roll(x_ref[...], 3, 1)

    x = jnp.arange(8 * 128, dtype=jnp.float32).reshape(8, 128)
    try:
        out = pl.pallas_call(
            _kernel, out_shape=jax.ShapeDtypeStruct((8, 128), jnp.float32))(x)
        return bool(jnp.array_equal(out, jnp.roll(x, 3, axis=1)))
    except Exception:  # fall back to the jnp.roll convention
        return True


_ROLL_MATCHES_JNP = _probe_roll_matches_jnp()


def _roll_amount(s, size):
    """Shift for pltpu.roll so that out[..., m] == in[..., (m + s) % size]."""
    return (-s) % size if _ROLL_MATCHES_JNP else s % size


def _rel_shift_accumulate(coeff, src2, base, Hb, dk, Mp, step, L):
    """base[h,e,m] += sum_r coeff[h,r,m] * src2[h*dk+e, m + (r-(L-1))*step].

    Wrap-around / out-of-range shifted reads are already killed by the 0/1
    validity masks folded into `coeff`, so a circular lane rotation is exact.
    """
    R = 2 * L - 1
    acc = base
    for ridx in range(R):
        s = (ridx - (L - 1)) * step
        amt = _roll_amount(s, Mp)
        shifted = src2 if amt == 0 else pltpu.roll(src2, amt, 1)
        acc = acc + coeff[:, ridx:ridx + 1, :] * shifted.reshape(Hb, dk, Mp)
    return acc


# ---------------------------------------------------------------------------
# Pallas kernels
# ---------------------------------------------------------------------------

def _gsa_content_kernel(x_ref, wqkv_ref, rows_ref, maskr_ref,
                        content_ref, stats_ref,
                        *, Hb, dk, M, Mp, Y, L, norm_queries):
    """One (batch, head-block) step: fused to_qkv, content attention, and the
    per-channel BatchNorm statistics of the relative-row tensor Yh."""
    HD = Hb * dk
    f32 = jnp.float32

    x = x_ref[0]                                          # (cin_p, Mp)
    w = wqkv_ref[0]                                       # (3*HD, cin_p)

    # Fused to_qkv 1x1 conv (no bias). Rows are [q | k | v], head-major.
    qkv = jnp.dot(w, x, preferred_element_type=f32)       # (3*HD, Mp)
    q2 = qkv[0:HD]
    v2 = qkv[2 * HD:3 * HD]
    q = q2.reshape(Hb, dk, Mp)
    k = qkv[HD:2 * HD].reshape(Hb, dk, Mp)
    v = v2.reshape(Hb, dk, Mp)

    if Mp != M:  # mask padded spatial positions out of the key softmax
        lane = lax.broadcasted_iota(jnp.int32, (1, 1, Mp), 2)
        k = jnp.where(lane < M, k, -1e30)

    kmax = jnp.max(k, axis=-1, keepdims=True)
    ke = jnp.exp(k - kmax)
    ks = ke / jnp.sum(ke, axis=-1, keepdims=True)         # exact division

    # context^T[h, e, d] = sum_m v[h, e, m] * ks[h, d, m]      (batched, MXU)
    ctx_t = lax.dot_general(v, ks, (((2,), (2,)), ((0,), (0,))),
                            preferred_element_type=f32)   # (Hb, dk, dk)

    if norm_queries:
        qmax = jnp.max(q, axis=1, keepdims=True)
        qe = jnp.exp(q - qmax)
        cq = qe / jnp.sum(qe, axis=1, keepdims=True)
    else:
        cq = q

    # content[h, e, m] = sum_d context[h, d, e] * cq[h, d, m]   (batched, MXU)
    content = lax.dot_general(ctx_t, cq, (((2,), (1,)), ((0,), (0,))),
                              preferred_element_type=f32)  # (Hb, dk, Mp)
    content_ref[...] = content.astype(content_ref.dtype)

    # Qp[h, r, m] = sum_d rel_rows[r, d] * q[h, d, m]; validity mask folded in.
    qp = lax.dot_general(rows_ref[...], q, (((2,), (1,)), ((0,), (0,))),
                         preferred_element_type=f32)       # (Hb, R, Mp)
    qp = qp * maskr_ref[...]

    # Yh[h, e, m] = sum_r Qp[h, r, m] * v[h, e, m + r*Y] via lane rotations.
    yh = _rel_shift_accumulate(qp, v2, jnp.zeros((Hb, dk, Mp), f32),
                               Hb, dk, Mp, Y, L)

    # Per-block BatchNorm statistics (padded/invalid positions are zero).
    # TODO(synk): E[x^2]-mean^2 can cancel catastrophically for large means.
    ysum = jnp.sum(yh, axis=0)                             # (dk, Mp)
    ysq = jnp.sum(yh * yh, axis=0)
    stats_ref[0, :, 0:1] = jnp.sum(ysum, axis=-1, keepdims=True)
    stats_ref[0, :, 1:2] = jnp.sum(ysq, axis=-1, keepdims=True)


def _gsa_relpos_kernel(x_ref, wqv_ref, rows_ref, cols_ref, maskr_ref,
                       maskc_ref, content_ref, ss_ref, wout_ref, out_ref,
                       *, Hb, dk, M, Mp, Y, L):
    """One (batch, head-block) step: recompute q/v/Yh from the cheap fused
    1x1 conv, apply the BatchNorm affine, add the relative-column attention
    to the content output, and emit this head-block's to_out partial."""
    HD = Hb * dk
    f32 = jnp.float32

    x = x_ref[0]                                           # (cin_p, Mp)
    qv = jnp.dot(wqv_ref[0], x, preferred_element_type=f32)  # (2*HD, Mp)
    q2 = qv[0:HD]
    v2 = qv[HD:2 * HD]
    q = q2.reshape(Hb, dk, Mp)

    # Recompute Yh (identical math to kernel 1) instead of round-tripping it
    # through HBM; the BN affine uses the precomputed global batch stats.
    qp = lax.dot_general(rows_ref[...], q, (((2,), (1,)), ((0,), (0,))),
                         preferred_element_type=f32)       # (Hb, R, Mp)
    qp = qp * maskr_ref[...]
    yh = _rel_shift_accumulate(qp, v2, jnp.zeros((Hb, dk, Mp), f32),
                               Hb, dk, Mp, Y, L)

    scale = ss_ref[:, 0:1]                                 # (HD, 1)
    shift = ss_ref[:, 1:2]
    yhn2 = yh.reshape(HD, Mp) * scale + shift              # (HD, Mp)

    # Qc[h, r, m] = sum_d rel_columns[r, d] * q[h, d, m]; mask folded in.
    qc = lax.dot_general(cols_ref[...], q, (((2,), (1,)), ((0,), (0,))),
                         preferred_element_type=f32)       # (Hb, R, Mp)
    qc = qc * maskc_ref[...]

    # rel[h, e, m] = sum_r Qc[h, r, m] * Yhn[h, e, m + r]  (same image row).
    feat = _rel_shift_accumulate(qc, yhn2, content_ref[...].astype(f32),
                                 Hb, dk, Mp, 1, L)

    # Per-head-block partial of the fused to_out 1x1 conv (nhb-sum in JAX).
    out_ref[0] = jnp.dot(wout_ref[0], feat.reshape(HD, Mp),
                         preferred_element_type=f32)       # (dim_out, Mp)


# ---------------------------------------------------------------------------
# Parameter setup & wrapper
# ---------------------------------------------------------------------------

def calc_reindexing_tensor(l, L):
    x = jnp.arange(l)[:, None, None]
    i = jnp.arange(l)[None, :, None]
    r = jnp.arange(-(L - 1), L)[None, None, :]
    mask = ((i - x) == r) & (jnp.abs(i - x) <= L)
    return mask.astype(jnp.float32)


def init_params(key, dim, heads, dim_key, dim_out, rel_pos_length):
    dh = dim_key * heads
    k1, k2, k3, k4, k5 = jax.random.split(key, 5)
    return dict(
        w_qkv=0.1 * jax.random.normal(k1, (3 * dh, dim), jnp.float32),
        w_out=0.1 * jax.random.normal(k2, (dim_out, dh), jnp.float32),
        b_out=0.1 * jax.random.normal(k3, (dim_out,), jnp.float32),
        rel_rows=jax.random.normal(k4, (2 * rel_pos_length - 1, dim_key),
                                   jnp.float32),
        rel_columns=jax.random.normal(k5, (2 * rel_pos_length - 1, dim_key),
                                      jnp.float32),
        bn_gamma=jnp.ones((dim_key,), jnp.float32),
        bn_beta=jnp.zeros((dim_key,), jnp.float32),
    )


def _pick_heads_per_block(h, dk, Mp):
    # Largest divisor of h whose (Hb, dk, Mp) f32 block stays <= ~2 MiB; the
    # ~10 live working buffers per step then sit comfortably inside the
    # 48 MiB scoped-VMEM budget on v5e/v6e and v7x (64 MiB physical).
    cap = max(1, (2 * 1024 * 1024) // (4 * max(1, dk * Mp)))
    hb = 1
    for d in range(1, h + 1):
        if h % d == 0 and d <= cap:
            hb = d
    return hb


_VMEM_LIMIT_BYTES = 48 * 1024 * 1024


def gsa_forward_pallas(img, params, *, heads, dim_key, rel_pos_length,
                       norm_queries=False, heads_per_block=None):
    f32 = jnp.float32
    b, cin, X, Y = img.shape
    h, dk, L = heads, dim_key, rel_pos_length
    R = 2 * L - 1
    M = X * Y
    Mp = ((M + 127) // 128) * 128            # lane-dense spatial axis
    cin_p = ((cin + 7) // 8) * 8             # pad tiny contraction dim
    n = b * h
    dim_out = params['w_out'].shape[0]

    Hb = (heads_per_block if heads_per_block is not None
          else _pick_heads_per_block(h, dk, Mp))
    assert h % Hb == 0
    nhb = h // Hb
    HD = Hb * dk
    nblk = b * nhb

    # ---- inputs / parameters rearranged per head-block (tiny, one-off) ----
    x3 = jnp.pad(img.reshape(b, cin, M).astype(f32),
                 ((0, 0), (0, cin_p - cin), (0, Mp - M)))

    wqkv = params['w_qkv'].reshape(3, nhb, Hb, dk, cin)
    wqkv_r = jnp.pad(
        jnp.transpose(wqkv, (1, 0, 2, 3, 4)).reshape(nhb, 3 * HD, cin),
        ((0, 0), (0, 0), (0, cin_p - cin)))
    wqv_r = jnp.pad(
        jnp.concatenate([wqkv[0].reshape(nhb, HD, cin),
                         wqkv[2].reshape(nhb, HD, cin)], axis=1),
        ((0, 0), (0, 0), (0, cin_p - cin)))                # [q | v] rows
    wout_r = jnp.transpose(params['w_out'].reshape(dim_out, nhb, HD),
                           (1, 0, 2))                      # (nhb, dim_out, HD)

    rows_b = jnp.broadcast_to(params['rel_rows'][None], (Hb, R, dk))
    cols_b = jnp.broadcast_to(params['rel_columns'][None], (Hb, R, dk))

    # (1, R, Mp) 0/1 validity masks for the relative shifts; they also
    # exclude the lane-padding region from every contribution / statistic.
    rvals = jnp.arange(-(L - 1), L)
    mvec = jnp.arange(Mp)
    tgt_r = mvec[None, :] + rvals[:, None] * Y
    maskr = ((mvec[None, :] < M) & (tgt_r >= 0)
             & (tgt_r < M)).astype(f32)[None]
    tgt_c = (mvec % Y)[None, :] + rvals[:, None]
    maskc = ((mvec[None, :] < M) & (tgt_c >= 0)
             & (tgt_c < Y)).astype(f32)[None]

    nidx = lambda bi, g: (bi * nhb + g, 0, 0)
    cparams = pltpu.CompilerParams(
        dimension_semantics=("parallel", "parallel"),
        vmem_limit_bytes=_VMEM_LIMIT_BYTES)

    # ---- kernel 1: fused to_qkv + content attention + BN statistics ------
    content, stats = pl.pallas_call(
        functools.partial(_gsa_content_kernel, Hb=Hb, dk=dk, M=M, Mp=Mp,
                          Y=Y, L=L, norm_queries=norm_queries),
        out_shape=(jax.ShapeDtypeStruct((n, dk, Mp), jnp.bfloat16),
                   jax.ShapeDtypeStruct((nblk, dk, 2), f32)),
        grid=(b, nhb),
        in_specs=[
            pl.BlockSpec((1, cin_p, Mp), lambda bi, g: (bi, 0, 0)),
            pl.BlockSpec((1, 3 * HD, cin_p), lambda bi, g: (g, 0, 0)),
            pl.BlockSpec((Hb, R, dk), lambda bi, g: (0, 0, 0)),
            pl.BlockSpec((1, R, Mp), lambda bi, g: (0, 0, 0)),
        ],
        out_specs=(
            pl.BlockSpec((Hb, dk, Mp), nidx),
            pl.BlockSpec((1, dk, 2), nidx),
        ),
        compiler_params=cparams,
    )(x3, wqkv_r, rows_b, maskr)

    # ---- tiny cross-block BatchNorm2d(dim_key) stats (training mode) -----
    eps = 1e-5
    count = float(n * M)
    tot = jnp.sum(stats, axis=0)                            # (dk, 2)
    mean = tot[:, 0] / count
    var = tot[:, 1] / count - mean * mean                   # biased, like BN
    scale = params['bn_gamma'] * lax.rsqrt(var + eps)
    shift = params['bn_beta'] - mean * scale
    ss = jnp.tile(jnp.stack([scale, shift], axis=-1), (Hb, 1))   # (HD, 2)

    # ---- kernel 2: Yh recompute + BN-apply + rel columns + to_out partials
    out_part = pl.pallas_call(
        functools.partial(_gsa_relpos_kernel, Hb=Hb, dk=dk, M=M, Mp=Mp,
                          Y=Y, L=L),
        out_shape=jax.ShapeDtypeStruct((nblk, dim_out, Mp), f32),
        grid=(b, nhb),
        in_specs=[
            pl.BlockSpec((1, cin_p, Mp), lambda bi, g: (bi, 0, 0)),
            pl.BlockSpec((1, 2 * HD, cin_p), lambda bi, g: (g, 0, 0)),
            pl.BlockSpec((Hb, R, dk), lambda bi, g: (0, 0, 0)),
            pl.BlockSpec((Hb, R, dk), lambda bi, g: (0, 0, 0)),
            pl.BlockSpec((1, R, Mp), lambda bi, g: (0, 0, 0)),
            pl.BlockSpec((1, R, Mp), lambda bi, g: (0, 0, 0)),
            pl.BlockSpec((Hb, dk, Mp), nidx),
            pl.BlockSpec((HD, 2), lambda bi, g: (0, 0)),
            pl.BlockSpec((1, dim_out, HD), lambda bi, g: (g, 0, 0)),
        ],
        out_specs=pl.BlockSpec((1, dim_out, Mp), nidx),
        compiler_params=cparams,
    )(x3, wqv_r, rows_b, cols_b, maskr, maskc, content, ss, wout_r)

    # nhb-sum of per-head-block partials, bias, drop spatial lane padding.
    out3 = jnp.sum(out_part.reshape(b, nhb, dim_out, Mp), axis=1)
    out3 = out3 + params['b_out'][None, :, None]
    return out3[:, :, :M].reshape(b, dim_out, X, Y)


# ---------------------------------------------------------------------------
# Pure-JAX reference (direct transcription of the PyTorch forward)
# ---------------------------------------------------------------------------

def gsa_forward_reference(img, params, *, heads, dim_key, rel_pos_length,
                          norm_queries=False):
    b, c, X, Y = img.shape
    h, dk, L = heads, dim_key, rel_pos_length
    n = b * h
    hp = jax.lax.Precision.HIGHEST

    qkv = jnp.einsum('oc,bcxy->boxy', params['w_qkv'], img, precision=hp)
    q_, k_, v_ = jnp.split(qkv, 3, axis=1)

    def rearr(t):
        return t.reshape(b, h, dk, X, Y).reshape(n, dk, X * Y)

    q, k, v = rearr(q_), rearr(k_), rearr(v_)
    k = jax.nn.softmax(k, axis=-1)
    context = jnp.einsum('ndm,nem->nde', k, v, precision=hp)
    cq = jax.nn.softmax(q, axis=-2) if norm_queries else q
    content = jnp.einsum('nde,ndm->nem', context, cq, precision=hp)
    content4 = content.reshape(n, dk, X, Y)

    q4 = q.reshape(n, dk, X, Y)
    v4 = v.reshape(n, dk, X, Y)

    Ix = calc_reindexing_tensor(X, L)
    Px = jnp.einsum('xir,rd->xid', Ix, params['rel_rows'], precision=hp)
    Sx = jnp.einsum('ndxy,xid->nixy', q4, Px, precision=hp)
    Yh = jnp.einsum('nixy,neiy->nexy', Sx, v4, precision=hp)

    eps = 1e-5
    mean = Yh.mean(axis=(0, 2, 3), keepdims=True)
    var = Yh.var(axis=(0, 2, 3), keepdims=True)
    Yhn = ((Yh - mean) / jnp.sqrt(var + eps)
           * params['bn_gamma'][None, :, None, None]
           + params['bn_beta'][None, :, None, None])

    Iy = calc_reindexing_tensor(Y, L)
    Py = jnp.einsum('yir,rd->yid', Iy, params['rel_columns'], precision=hp)
    Sy = jnp.einsum('ndxy,yid->nixy', q4, Py, precision=hp)
    rel = jnp.einsum('nixy,nexi->nexy', Sy, Yhn, precision=hp)

    content4 = content4 + rel
    feat = content4.reshape(b, h * dk, X, Y)
    out = (jnp.einsum('oc,bcxy->boxy', params['w_out'], feat, precision=hp)
           + params['b_out'][None, :, None, None])
    return out


# ---------------------------------------------------------------------------

if __name__ == "__main__":
    key = jax.random.PRNGKey(0)
    b, dim, X, Y = 2, 4, 16, 16
    heads, dim_key, rel_pos_length = 2, 16, 3
    dim_out = dim

    kp, kx = jax.random.split(key)
    params = init_params(kp, dim, heads, dim_key, dim_out, rel_pos_length)
    img = jax.random.normal(kx, (b, dim, X, Y), jnp.float32)

    fwd = jax.jit(functools.partial(gsa_forward_pallas, heads=heads,
                                    dim_key=dim_key,
                                    rel_pos_length=rel_pos_length))
    out = jax.block_until_ready(fwd(img, params))

    ref_fn = jax.jit(functools.partial(gsa_forward_reference, heads=heads,
                                       dim_key=dim_key,
                                       rel_pos_length=rel_pos_length))
    ref = jax.block_until_ready(ref_fn(img, params))

    assert out.shape == (b, dim_out, X, Y)
    max_err = float(jnp.max(jnp.abs(out - ref)))
    if not bool(jnp.allclose(out, ref, atol=1e-2, rtol=1e-2)):
        raise AssertionError(f"Pallas/reference mismatch, max abs err={max_err}")
    print("KERNEL_OK")
</pallas_src>

<mosaic_0001>
module attributes {stable_mosaic.version = 11 : i64} {
  func.func @_kernel(%arg0: memref<8x128xf32, #tpu.memory_space<vmem>>, %arg1: memref<8x128xf32, #tpu.memory_space<vmem>>) attributes {dimension_semantics = [], scalar_prefetch = 0 : i64, scratch_operands = 0 : i64, tpu.core_type = #tpu.core_type<tc>} {
    %c0 = arith.constant 0 : index
    %c0_0 = arith.constant 0 : index
    %0 = vector.load %arg0[%c0, %c0_0] : memref<8x128xf32, #tpu.memory_space<vmem>>, vector<8x128xf32>
    %c3_i32 = arith.constant 3 : i32
    %1 = tpu.dynamic_rotate %0 by %c3_i32 dim 1 : vector<8x128xf32>, i32 -> vector<8x128xf32>
    %c0_1 = arith.constant 0 : index
    %c0_2 = arith.constant 0 : index
    %2 = vector.load %arg1[%c0_1, %c0_2] : memref<8x128xf32, #tpu.memory_space<vmem>>, vector<8x128xf32>
    tpu.vector_store %arg1[%c0_1, %c0_2], %1 {strides = array<i32>} : memref<8x128xf32, #tpu.memory_space<vmem>>, vector<8x128xf32>,
    return
  }
}

module attributes {stable_mosaic.version = 11 : i64} {
  func.func @_gsa_content_kernel(%arg0: i32, %arg1: i32, %arg2: memref<1x8x256xf32, #tpu.memory_space<vmem>>, %arg3: memref<1x96x8xf32, #tpu.memory_space<vmem>>, %arg4: memref<2x5x16xf32, #tpu.memory_space<vmem>>, %arg5: memref<1x5x256xf32, #tpu.memory_space<vmem>>, %arg6: memref<2x16x256xbf16, #tpu.memory_space<vmem>>, %arg7: memref<1x16x2xf32, #tpu.memory_space<vmem>>) attributes {dimension_semantics = [#tpu.dimension_semantics<parallel>, #tpu.dimension_semantics<parallel>], iteration_bounds = array<i64: 2, 1>, scalar_prefetch = 0 : i64, scratch_operands = 0 : i64, tpu.core_type = #tpu.core_type<tc>, window_params = [{transform_indices = @transform_0, window_bounds = array<i64: 1, 8, 256>}, {transform_indices = @transform_1, window_bounds = array<i64: 1, 96, 8>}, {pipeline_mode = #tpu.pipeline_mode<synchronous>, transform_indices = @transform_2, window_bounds = array<i64: 2, 5, 16>}, {pipeline_mode = #tpu.pipeline_mode<synchronous>, transform_indices = @transform_3, window_bounds = array<i64: 1, 5, 256>}, {transform_indices = @transform_4, window_bounds = array<i64: 2, 16, 256>}, {transform_indices = @transform_5, window_bounds = array<i64: 1, 16, 2>}]} {
    %c0 = arith.constant 0 : index
    %c0_0 = arith.constant 0 : index
    %c0_1 = arith.constant 0 : index
    %0 = vector.load %arg2[%c0, %c0_0, %c0_1] : memref<1x8x256xf32, #tpu.memory_space<vmem>>, vector<1x8x256xf32>
    %1 = vector.shape_cast %0 : vector<1x8x256xf32> to vector<8x256xf32>
    %c0_2 = arith.constant 0 : index
    %c0_3 = arith.constant 0 : index
    %c0_4 = arith.constant 0 : index
    %2 = vector.load %arg3[%c0_2, %c0_3, %c0_4] : memref<1x96x8xf32, #tpu.memory_space<vmem>>, vector<1x96x8xf32>
    %3 = vector.shape_cast %2 : vector<1x96x8xf32> to vector<96x8xf32>
    %cst = arith.constant dense<0.000000e+00> : vector<96x256xf32>
    %4 = tpu.matmul %3, %1, %cst {dimension_numbers = #tpu.dot_dimension_numbers<[1], [0], [0], [1], [0, 0, 1, 1], [], []>} : vector<96x8xf32>, vector<8x256xf32>, vector<96x256xf32> -> vector<96x256xf32>
    %5 = vector.extract_strided_slice %4 {offsets = [0, 0], sizes = [32, 256], strides = [1, 1]} : vector<96x256xf32> to vector<32x256xf32>
    %6 = vector.extract_strided_slice %4 {offsets = [64, 0], sizes = [32, 256], strides = [1, 1]} : vector<96x256xf32> to vector<32x256xf32>
    %7 = vector.shape_cast %5 : vector<32x256xf32> to vector<2x16x256xf32>
    %8 = vector.extract_strided_slice %4 {offsets = [32, 0], sizes = [32, 256], strides = [1, 1]} : vector<96x256xf32> to vector<32x256xf32>
    %9 = vector.shape_cast %8 : vector<32x256xf32> to vector<2x16x256xf32>
    %10 = vector.shape_cast %6 : vector<32x256xf32> to vector<2x16x256xf32>
    %cst_5 = arith.constant dense<0xFF800000> : vector<2x16xf32>
    %11 = vector.multi_reduction <maximumf>, %9, %cst_5 [2] : vector<2x16x256xf32> to vector<2x16xf32>
    %12 = vector.shape_cast %11 : vector<2x16xf32> to vector<2x16x1xf32>
    %13 = vector.broadcast %12 : vector<2x16x1xf32> to vector<2x16x256xf32>
    %14 = arith.subf %9, %13 : vector<2x16x256xf32>
    %15 = math.exp %14 : vector<2x16x256xf32>
    %cst_6 = arith.constant dense<0.000000e+00> : vector<2x16xf32>
    %16 = vector.multi_reduction <add>, %15, %cst_6 [2] : vector<2x16x256xf32> to vector<2x16xf32>
    %17 = vector.shape_cast %16 : vector<2x16xf32> to vector<2x16x1xf32>
    %18 = vector.broadcast %17 : vector<2x16x1xf32> to vector<2x16x256xf32>
    %19 = arith.divf %15, %18 : vector<2x16x256xf32>
    %cst_7 = arith.constant dense<0.000000e+00> : vector<2x16x16xf32>
    %20 = tpu.matmul %10, %19, %cst_7 {dimension_numbers = #tpu.dot_dimension_numbers<[2], [2], [1], [1], [0, 0, 0, 1, 1, 1], [0], [0]>} : vector<2x16x256xf32>, vector<2x16x256xf32>, vector<2x16x16xf32> -> vector<2x16x16xf32>
    %cst_8 = arith.constant dense<0.000000e+00> : vector<2x16x256xf32>
    %21 = tpu.matmul %20, %7, %cst_8 {dimension_numbers = #tpu.dot_dimension_numbers<[2], [1], [1], [2], [0, 0, 0, 1, 1, 2], [0], [0]>} : vector<2x16x16xf32>, vector<2x16x256xf32>, vector<2x16x256xf32> -> vector<2x16x256xf32>
    %22 = arith.truncf %21 : vector<2x16x256xf32> to vector<2x16x256xbf16>
    %c0_9 = arith.constant 0 : index
    %c0_10 = arith.constant 0 : index
    %c0_11 = arith.constant 0 : index
    %23 = vector.load %arg6[%c0_9, %c0_10, %c0_11] : memref<2x16x256xbf16, #tpu.memory_space<vmem>>, vector<2x16x256xbf16>
    tpu.vector_store %arg6[%c0_9, %c0_10, %c0_11], %22 {strides = array<i32>} : memref<2x16x256xbf16, #tpu.memory_space<vmem>>, vector<2x16x256xbf16>,
    %c0_12 = arith.constant 0 : index
    %c0_13 = arith.constant 0 : index
    %c0_14 = arith.constant 0 : index
    %24 = vector.load %arg4[%c0_12, %c0_13, %c0_14] : memref<2x5x16xf32, #tpu.memory_space<vmem>>, vector<2x5x16xf32>
    %cst_15 = arith.constant dense<0.000000e+00> : vector<2x5x256xf32>
    %25 = tpu.matmul %24, %7, %cst_15 {dimension_numbers = #tpu.dot_dimension_numbers<[2], [1], [1], [2], [0, 0, 0, 1, 1, 2], [0], [0]>} : vector<2x5x16xf32>, vector<2x16x256xf32>, vector<2x5x256xf32> -> vector<2x5x256xf32>
    %c0_16 = arith.constant 0 : index
    %c0_17 = arith.constant 0 : index
    %c0_18 = arith.constant 0 : index
    %26 = vector.load %arg5[%c0_16, %c0_17, %c0_18] : memref<1x5x256xf32, #tpu.memory_space<vmem>>, vector<1x5x256xf32>
    %27 = vector.broadcast %26 : vector<1x5x256xf32> to vector<2x5x256xf32>
    %28 = arith.mulf %25, %27 : vector<2x5x256xf32>
    %cst_19 = arith.constant 0.000000e+00 : f32
    %29 = vector.broadcast %cst_19 : f32 to vector<2x16x256xf32>
    %c32_i32 = arith.constant 32 : i32
    %30 = tpu.dynamic_rotate %6 by %c32_i32 dim 1 : vector<32x256xf32>, i32 -> vector<32x256xf32>
    %31 = vector.extract_strided_slice %28 {offsets = [0, 0, 0], sizes = [2, 1, 256], strides = [1, 1, 1]} : vector<2x5x256xf32> to vector<2x1x256xf32>
    %32 = vector.shape_cast %30 : vector<32x256xf32> to vector<2x16x256xf32>
    %33 = vector.broadcast %31 : vector<2x1x256xf32> to vector<2x16x256xf32>
    %34 = arith.mulf %33, %32 : vector<2x16x256xf32>
    %35 = arith.addf %29, %34 : vector<2x16x256xf32>
    %c16_i32 = arith.constant 16 : i32
    %36 = tpu.dynamic_rotate %6 by %c16_i32 dim 1 : vector<32x256xf32>, i32 -> vector<32x256xf32>
    %37 = vector.extract_strided_slice %28 {offsets = [0, 1, 0], sizes = [2, 1, 256], strides = [1, 1, 1]} : vector<2x5x256xf32> to vector<2x1x256xf32>
    %38 = vector.shape_cast %36 : vector<32x256xf32> to vector<2x16x256xf32>
    %39 = vector.broadcast %37 : vector<2x1x256xf32> to vector<2x16x256xf32>
    %40 = arith.mulf %39, %38 : vector<2x16x256xf32>
    %41 = arith.addf %35, %40 : vector<2x16x256xf32>
    %42 = vector.extract_strided_slice %28 {offsets = [0, 2, 0], sizes = [2, 1, 256], strides = [1, 1, 1]} : vector<2x5x256xf32> to vector<2x1x256xf32>
    %43 = vector.shape_cast %6 : vector<32x256xf32> to vector<2x16x256xf32>
    %44 = vector.broadcast %42 : vector<2x1x256xf32> to vector<2x16x256xf32>
    %45 = arith.mulf %44, %43 : vector<2x16x256xf32>
    %46 = arith.addf %41, %45 : vector<2x16x256xf32>
    %c240_i32 = arith.constant 240 : i32
    %47 = tpu.dynamic_rotate %6 by %c240_i32 dim 1 : vector<32x256xf32>, i32 -> vector<32x256xf32>
    %48 = vector.extract_strided_slice %28 {offsets = [0, 3, 0], sizes = [2, 1, 256], strides = [1, 1, 1]} : vector<2x5x256xf32> to vector<2x1x256xf32>
    %49 = vector.shape_cast %47 : vector<32x256xf32> to vector<2x16x256xf32>
    %50 = vector.broadcast %48 : vector<2x1x256xf32> to vector<2x16x256xf32>
    %51 = arith.mulf %50, %49 : vector<2x16x256xf32>
    %52 = arith.addf %46, %51 : vector<2x16x256xf32>
    %c224_i32 = arith.constant 224 : i32
    %53 = tpu.dynamic_rotate %6 by %c224_i32 dim 1 : vector<32x256xf32>, i32 -> vector<32x256xf32>
    %54 = vector.extract_strided_slice %28 {offsets = [0, 4, 0], sizes = [2, 1, 256], strides = [1, 1, 1]} : vector<2x5x256xf32> to vector<2x1x256xf32>
    %55 = vector.shape_cast %53 : vector<32x256xf32> to vector<2x16x256xf32>
    %56 = vector.broadcast %54 : vector<2x1x256xf32> to vector<2x16x256xf32>
    %57 = arith.mulf %56, %55 : vector<2x16x256xf32>
    %58 = arith.addf %52, %57 : vector<2x16x256xf32>
    %cst_20 = arith.constant dense<0.000000e+00> : vector<16x256xf32>
    %59 = vector.multi_reduction <add>, %58, %cst_20 [0] : vector<2x16x256xf32> to vector<16x256xf32>
    %60 = arith.mulf %58, %58 : vector<2x16x256xf32>
    %cst_21 = arith.constant dense<0.000000e+00> : vector<16x256xf32>
    %61 = vector.multi_reduction <add>, %60, %cst_21 [0] : vector<2x16x256xf32> to vector<16x256xf32>
    %cst_22 = arith.constant dense<0.000000e+00> : vector<16xf32>
    %62 = vector.multi_reduction <add>, %59, %cst_22 [1] : vector<16x256xf32> to vector<16xf32>
    %63 = vector.shape_cast %62 : vector<16xf32> to vector<16x1xf32>
    %c0_23 = arith.constant 0 : index
    %c0_24 = arith.constant 0 : index
    %c0_25 = arith.constant 0 : index
    %64 = vector.load %arg7[%c0_23, %c0_24, %c0_25] : memref<1x16x2xf32, #tpu.memory_space<vmem>>, vector<1x16x1xf32>
    %65 = vector.shape_cast %64 : vector<1x16x1xf32> to vector<16x1xf32>
    %66 = vector.shape_cast %63 : vector<16x1xf32> to vector<1x16x1xf32>
    tpu.vector_store %arg7[%c0_23, %c0_24, %c0_25], %66 {strides = array<i32>} : memref<1x16x2xf32, #tpu.memory_space<vmem>>, vector<1x16x1xf32>,
    %cst_26 = arith.constant dense<0.000000e+00> : vector<16xf32>
    %67 = vector.multi_reduction <add>, %61, %cst_26 [1] : vector<16x256xf32> to vector<16xf32>
    %68 = vector.shape_cast %67 : vector<16xf32> to vector<16x1xf32>
    %c0_27 = arith.constant 0 : index
    %c0_28 = arith.constant 0 : index
    %c1 = arith.constant 1 : index
    %69 = vector.load %arg7[%c0_27, %c0_28, %c1] : memref<1x16x2xf32, #tpu.memory_space<vmem>>, vector<1x16x1xf32>
    %70 = vector.shape_cast %69 : vector<1x16x1xf32> to vector<16x1xf32>
    %71 = vector.shape_cast %68 : vector<16x1xf32> to vector<1x16x1xf32>
    tpu.vector_store %arg7[%c0_27, %c0_28, %c1], %71 {strides = array<i32>} : memref<1x16x2xf32, #tpu.memory_space<vmem>>, vector<1x16x1xf32>,
    return
  }
  func.func @transform_0(%arg0: i32, %arg1: i32) -> (i32, i32, i32) {
    %c0_i32 = arith.constant 0 : i32
    %c0_i32_0 = arith.constant 0 : i32
    %c0_i32_1 = arith.constant 0 : i32
    return %arg0, %c0_i32, %c0_i32_0 : i32, i32, i32
  }
  func.func @transform_1(%arg0: i32, %arg1: i32) -> (i32, i32, i32) {
    %c0_i32 = arith.constant 0 : i32
    %c0_i32_0 = arith.constant 0 : i32
    %c0_i32_1 = arith.constant 0 : i32
    return %arg1, %c0_i32, %c0_i32_0 : i32, i32, i32
  }
  func.func @transform_2(%arg0: i32, %arg1: i32) -> (i32, i32, i32) {
    %c0_i32 = arith.constant 0 : i32
    %c0_i32_0 = arith.constant 0 : i32
    %c0_i32_1 = arith.constant 0 : i32
    %c0_i32_2 = arith.constant 0 : i32
    return %c0_i32, %c0_i32_0, %c0_i32_1 : i32, i32, i32
  }
  func.func @transform_3(%arg0: i32, %arg1: i32) -> (i32, i32, i32) {
    %c0_i32 = arith.constant 0 : i32
    %c0_i32_0 = arith.constant 0 : i32
    %c0_i32_1 = arith.constant 0 : i32
    %c0_i32_2 = arith.constant 0 : i32
    return %c0_i32, %c0_i32_0, %c0_i32_1 : i32, i32, i32
  }
  func.func @transform_4(%arg0: i32, %arg1: i32) -> (i32, i32, i32) {
    %c1_i32 = arith.constant 1 : i32
    %0 = arith.muli %arg0, %c1_i32 : i32
    %1 = arith.addi %0, %arg1 : i32
    %c0_i32 = arith.constant 0 : i32
    %c0_i32_0 = arith.constant 0 : i32
    %c0_i32_1 = arith.constant 0 : i32
    return %1, %c0_i32, %c0_i32_0 : i32, i32, i32
  }
  func.func @transform_5(%arg0: i32, %arg1: i32) -> (i32, i32, i32) {
    %c1_i32 = arith.constant 1 : i32
    %0 = arith.muli %arg0, %c1_i32 : i32
    %1 = arith.addi %0, %arg1 : i32
    %c0_i32 = arith.constant 0 : i32
    %c0_i32_0 = arith.constant 0 : i32
    %c0_i32_1 = arith.constant 0 : i32
    return %1, %c0_i32, %c0_i32_0 : i32, i32, i32
  }
}

module attributes {stable_mosaic.version = 11 : i64} {
  func.func @_gsa_relpos_kernel(%arg0: i32, %arg1: i32, %arg2: memref<1x8x256xf32, #tpu.memory_space<vmem>>, %arg3: memref<1x64x8xf32, #tpu.memory_space<vmem>>, %arg4: memref<2x5x16xf32, #tpu.memory_space<vmem>>, %arg5: memref<2x5x16xf32, #tpu.memory_space<vmem>>, %arg6: memref<1x5x256xf32, #tpu.memory_space<vmem>>, %arg7: memref<1x5x256xf32, #tpu.memory_space<vmem>>, %arg8: memref<2x16x256xbf16, #tpu.memory_space<vmem>>, %arg9: memref<32x2xf32, #tpu.memory_space<vmem>>, %arg10: memref<1x4x32xf32, #tpu.memory_space<vmem>>, %arg11: memref<1x4x256xf32, #tpu.memory_space<vmem>>) attributes {dimension_semantics = [#tpu.dimension_semantics<parallel>, #tpu.dimension_semantics<parallel>], iteration_bounds = array<i64: 2, 1>, scalar_prefetch = 0 : i64, scratch_operands = 0 : i64, tpu.core_type = #tpu.core_type<tc>, window_params = [{transform_indices = @transform_0, window_bounds = array<i64: 1, 8, 256>}, {transform_indices = @transform_1, window_bounds = array<i64: 1, 64, 8>}, {pipeline_mode = #tpu.pipeline_mode<synchronous>, transform_indices = @transform_2, window_bounds = array<i64: 2, 5, 16>}, {pipeline_mode = #tpu.pipeline_mode<synchronous>, transform_indices = @transform_3, window_bounds = array<i64: 2, 5, 16>}, {pipeline_mode = #tpu.pipeline_mode<synchronous>, transform_indices = @transform_4, window_bounds = array<i64: 1, 5, 256>}, {pipeline_mode = #tpu.pipeline_mode<synchronous>, transform_indices = @transform_5, window_bounds = array<i64: 1, 5, 256>}, {transform_indices = @transform_6, window_bounds = array<i64: 2, 16, 256>}, {pipeline_mode = #tpu.pipeline_mode<synchronous>, transform_indices = @transform_7, window_bounds = array<i64: 32, 2>}, {transform_indices = @transform_8, window_bounds = array<i64: 1, 4, 32>}, {transform_indices = @transform_9, window_bounds = array<i64: 1, 4, 256>}]} {
    %c0 = arith.constant 0 : index
    %c0_0 = arith.constant 0 : index
    %c0_1 = arith.constant 0 : index
    %0 = vector.load %arg2[%c0, %c0_0, %c0_1] : memref<1x8x256xf32, #tpu.memory_space<vmem>>, vector<1x8x256xf32>
    %1 = vector.shape_cast %0 : vector<1x8x256xf32> to vector<8x256xf32>
    %c0_2 = arith.constant 0 : index
    %c0_3 = arith.constant 0 : index
    %c0_4 = arith.constant 0 : index
    %2 = vector.load %arg3[%c0_2, %c0_3, %c0_4] : memref<1x64x8xf32, #tpu.memory_space<vmem>>, vector<1x64x8xf32>
    %3 = vector.shape_cast %2 : vector<1x64x8xf32> to vector<64x8xf32>
    %cst = arith.constant dense<0.000000e+00> : vector<64x256xf32>
    %4 = tpu.matmul %3, %1, %cst {dimension_numbers = #tpu.dot_dimension_numbers<[1], [0], [0], [1], [0, 0, 1, 1], [], []>} : vector<64x8xf32>, vector<8x256xf32>, vector<64x256xf32> -> vector<64x256xf32>
    %5 = vector.extract_strided_slice %4 {offsets = [0, 0], sizes = [32, 256], strides = [1, 1]} : vector<64x256xf32> to vector<32x256xf32>
    %6 = vector.extract_strided_slice %4 {offsets = [32, 0], sizes = [32, 256], strides = [1, 1]} : vector<64x256xf32> to vector<32x256xf32>
    %7 = vector.shape_cast %5 : vector<32x256xf32> to vector<2x16x256xf32>
    %c0_5 = arith.constant 0 : index
    %c0_6 = arith.constant 0 : index
    %c0_7 = arith.constant 0 : index
    %8 = vector.load %arg4[%c0_5, %c0_6, %c0_7] : memref<2x5x16xf32, #tpu.memory_space<vmem>>, vector<2x5x16xf32>
    %cst_8 = arith.constant dense<0.000000e+00> : vector<2x5x256xf32>
    %9 = tpu.matmul %8, %7, %cst_8 {dimension_numbers = #tpu.dot_dimension_numbers<[2], [1], [1], [2], [0, 0, 0, 1, 1, 2], [0], [0]>} : vector<2x5x16xf32>, vector<2x16x256xf32>, vector<2x5x256xf32> -> vector<2x5x256xf32>
    %c0_9 = arith.constant 0 : index
    %c0_10 = arith.constant 0 : index
    %c0_11 = arith.constant 0 : index
    %10 = vector.load %arg6[%c0_9, %c0_10, %c0_11] : memref<1x5x256xf32, #tpu.memory_space<vmem>>, vector<1x5x256xf32>
    %11 = vector.broadcast %10 : vector<1x5x256xf32> to vector<2x5x256xf32>
    %12 = arith.mulf %9, %11 : vector<2x5x256xf32>
    %cst_12 = arith.constant 0.000000e+00 : f32
    %13 = vector.broadcast %cst_12 : f32 to vector<2x16x256xf32>
    %c32_i32 = arith.constant 32 : i32
    %14 = tpu.dynamic_rotate %6 by %c32_i32 dim 1 : vector<32x256xf32>, i32 -> vector<32x256xf32>
    %15 = vector.extract_strided_slice %12 {offsets = [0, 0, 0], sizes = [2, 1, 256], strides = [1, 1, 1]} : vector<2x5x256xf32> to vector<2x1x256xf32>
    %16 = vector.shape_cast %14 : vector<32x256xf32> to vector<2x16x256xf32>
    %17 = vector.broadcast %15 : vector<2x1x256xf32> to vector<2x16x256xf32>
    %18 = arith.mulf %17, %16 : vector<2x16x256xf32>
    %19 = arith.addf %13, %18 : vector<2x16x256xf32>
    %c16_i32 = arith.constant 16 : i32
    %20 = tpu.dynamic_rotate %6 by %c16_i32 dim 1 : vector<32x256xf32>, i32 -> vector<32x256xf32>
    %21 = vector.extract_strided_slice %12 {offsets = [0, 1, 0], sizes = [2, 1, 256], strides = [1, 1, 1]} : vector<2x5x256xf32> to vector<2x1x256xf32>
    %22 = vector.shape_cast %20 : vector<32x256xf32> to vector<2x16x256xf32>
    %23 = vector.broadcast %21 : vector<2x1x256xf32> to vector<2x16x256xf32>
    %24 = arith.mulf %23, %22 : vector<2x16x256xf32>
    %25 = arith.addf %19, %24 : vector<2x16x256xf32>
    %26 = vector.extract_strided_slice %12 {offsets = [0, 2, 0], sizes = [2, 1, 256], strides = [1, 1, 1]} : vector<2x5x256xf32> to vector<2x1x256xf32>
    %27 = vector.shape_cast %6 : vector<32x256xf32> to vector<2x16x256xf32>
    %28 = vector.broadcast %26 : vector<2x1x256xf32> to vector<2x16x256xf32>
    %29 = arith.mulf %28, %27 : vector<2x16x256xf32>
    %30 = arith.addf %25, %29 : vector<2x16x256xf32>
    %c240_i32 = arith.constant 240 : i32
    %31 = tpu.dynamic_rotate %6 by %c240_i32 dim 1 : vector<32x256xf32>, i32 -> vector<32x256xf32>
    %32 = vector.extract_strided_slice %12 {offsets = [0, 3, 0], sizes = [2, 1, 256], strides = [1, 1, 1]} : vector<2x5x256xf32> to vector<2x1x256xf32>
    %33 = vector.shape_cast %31 : vector<32x256xf32> to vector<2x16x256xf32>
    %34 = vector.broadcast %32 : vector<2x1x256xf32> to vector<2x16x256xf32>
    %35 = arith.mulf %34, %33 : vector<2x16x256xf32>
    %36 = arith.addf %30, %35 : vector<2x16x256xf32>
    %c224_i32 = arith.constant 224 : i32
    %37 = tpu.dynamic_rotate %6 by %c224_i32 dim 1 : vector<32x256xf32>, i32 -> vector<32x256xf32>
    %38 = vector.extract_strided_slice %12 {offsets = [0, 4, 0], sizes = [2, 1, 256], strides = [1, 1, 1]} : vector<2x5x256xf32> to vector<2x1x256xf32>
    %39 = vector.shape_cast %37 : vector<32x256xf32> to vector<2x16x256xf32>
    %40 = vector.broadcast %38 : vector<2x1x256xf32> to vector<2x16x256xf32>
    %41 = arith.mulf %40, %39 : vector<2x16x256xf32>
    %42 = arith.addf %36, %41 : vector<2x16x256xf32>
    %c0_13 = arith.constant 0 : index
    %c0_14 = arith.constant 0 : index
    %43 = vector.load %arg9[%c0_13, %c0_14] : memref<32x2xf32, #tpu.memory_space<vmem>>, vector<32x1xf32>
    %c0_15 = arith.constant 0 : index
    %c1 = arith.constant 1 : index
    %44 = vector.load %arg9[%c0_15, %c1] : memref<32x2xf32, #tpu.memory_space<vmem>>, vector<32x1xf32>
    %45 = vector.shape_cast %42 : vector<2x16x256xf32> to vector<32x256xf32>
    %46 = vector.broadcast %43 : vector<32x1xf32> to vector<32x256xf32>
    %47 = arith.mulf %45, %46 : vector<32x256xf32>
    %48 = vector.broadcast %44 : vector<32x1xf32> to vector<32x256xf32>
    %49 = arith.addf %47, %48 : vector<32x256xf32>
    %c0_16 = arith.constant 0 : index
    %c0_17 = arith.constant 0 : index
    %c0_18 = arith.constant 0 : index
    %50 = vector.load %arg5[%c0_16, %c0_17, %c0_18] : memref<2x5x16xf32, #tpu.memory_space<vmem>>, vector<2x5x16xf32>
    %cst_19 = arith.constant dense<0.000000e+00> : vector<2x5x256xf32>
    %51 = tpu.matmul %50, %7, %cst_19 {dimension_numbers = #tpu.dot_dimension_numbers<[2], [1], [1], [2], [0, 0, 0, 1, 1, 2], [0], [0]>} : vector<2x5x16xf32>, vector<2x16x256xf32>, vector<2x5x256xf32> -> vector<2x5x256xf32>
    %c0_20 = arith.constant 0 : index
    %c0_21 = arith.constant 0 : index
    %c0_22 = arith.constant 0 : index
    %52 = vector.load %arg7[%c0_20, %c0_21, %c0_22] : memref<1x5x256xf32, #tpu.memory_space<vmem>>, vector<1x5x256xf32>
    %53 = vector.broadcast %52 : vector<1x5x256xf32> to vector<2x5x256xf32>
    %54 = arith.mulf %51, %53 : vector<2x5x256xf32>
    %c0_23 = arith.constant 0 : index
    %c0_24 = arith.constant 0 : index
    %c0_25 = arith.constant 0 : index
    %55 = vector.load %arg8[%c0_23, %c0_24, %c0_25] : memref<2x16x256xbf16, #tpu.memory_space<vmem>>, vector<2x16x256xbf16>
    %56 = arith.extf %55 : vector<2x16x256xbf16> to vector<2x16x256xf32>
    %c2_i32 = arith.constant 2 : i32
    %57 = tpu.dynamic_rotate %49 by %c2_i32 dim 1 : vector<32x256xf32>, i32 -> vector<32x256xf32>
    %58 = vector.extract_strided_slice %54 {offsets = [0, 0, 0], sizes = [2, 1, 256], strides = [1, 1, 1]} : vector<2x5x256xf32> to vector<2x1x256xf32>
    %59 = vector.shape_cast %57 : vector<32x256xf32> to vector<2x16x256xf32>
    %60 = vector.broadcast %58 : vector<2x1x256xf32> to vector<2x16x256xf32>
    %61 = arith.mulf %60, %59 : vector<2x16x256xf32>
    %62 = arith.addf %56, %61 : vector<2x16x256xf32>
    %c1_i32 = arith.constant 1 : i32
    %63 = tpu.dynamic_rotate %49 by %c1_i32 dim 1 : vector<32x256xf32>, i32 -> vector<32x256xf32>
    %64 = vector.extract_strided_slice %54 {offsets = [0, 1, 0], sizes = [2, 1, 256], strides = [1, 1, 1]} : vector<2x5x256xf32> to vector<2x1x256xf32>
    %65 = vector.shape_cast %63 : vector<32x256xf32> to vector<2x16x256xf32>
    %66 = vector.broadcast %64 : vector<2x1x256xf32> to vector<2x16x256xf32>
    %67 = arith.mulf %66, %65 : vector<2x16x256xf32>
    %68 = arith.addf %62, %67 : vector<2x16x256xf32>
    %69 = vector.extract_strided_slice %54 {offsets = [0, 2, 0], sizes = [2, 1, 256], strides = [1, 1, 1]} : vector<2x5x256xf32> to vector<2x1x256xf32>
    %70 = vector.shape_cast %49 : vector<32x256xf32> to vector<2x16x256xf32>
    %71 = vector.broadcast %69 : vector<2x1x256xf32> to vector<2x16x256xf32>
    %72 = arith.mulf %71, %70 : vector<2x16x256xf32>
    %73 = arith.addf %68, %72 : vector<2x16x256xf32>
    %c255_i32 = arith.constant 255 : i32
    %74 = tpu.dynamic_rotate %49 by %c255_i32 dim 1 : vector<32x256xf32>, i32 -> vector<32x256xf32>
    %75 = vector.extract_strided_slice %54 {offsets = [0, 3, 0], sizes = [2, 1, 256], strides = [1, 1, 1]} : vector<2x5x256xf32> to vector<2x1x256xf32>
    %76 = vector.shape_cast %74 : vector<32x256xf32> to vector<2x16x256xf32>
    %77 = vector.broadcast %75 : vector<2x1x256xf32> to vector<2x16x256xf32>
    %78 = arith.mulf %77, %76 : vector<2x16x256xf32>
    %79 = arith.addf %73, %78 : vector<2x16x256xf32>
    %c254_i32 = arith.constant 254 : i32
    %80 = tpu.dynamic_rotate %49 by %c254_i32 dim 1 : vector<32x256xf32>, i32 -> vector<32x256xf32>
    %81 = vector.extract_strided_slice %54 {offsets = [0, 4, 0], sizes = [2, 1, 256], strides = [1, 1, 1]} : vector<2x5x256xf32> to vector<2x1x256xf32>
    %82 = vector.shape_cast %80 : vector<32x256xf32> to vector<2x16x256xf32>
    %83 = vector.broadcast %81 : vector<2x1x256xf32> to vector<2x16x256xf32>
    %84 = arith.mulf %83, %82 : vector<2x16x256xf32>
    %85 = arith.addf %79, %84 : vector<2x16x256xf32>
    %c0_26 = arith.constant 0 : index
    %c0_27 = arith.constant 0 : index
    %c0_28 = arith.constant 0 : index
    %86 = vector.load %arg10[%c0_26, %c0_27, %c0_28] : memref<1x4x32xf32, #tpu.memory_space<vmem>>, vector<1x4x32xf32>
    %87 = vector.shape_cast %86 : vector<1x4x32xf32> to vector<4x32xf32>
    %88 = vector.shape_cast %85 : vector<2x16x256xf32> to vector<32x256xf32>
    %cst_29 = arith.constant dense<0.000000e+00> : vector<4x256xf32>
    %89 = tpu.matmul %87, %88, %cst_29 {dimension_numbers = #tpu.dot_dimension_numbers<[1], [0], [0], [1], [0, 0, 1, 1], [], []>} : vector<4x32xf32>, vector<32x256xf32>, vector<4x256xf32> -> vector<4x256xf32>
    %c0_30 = arith.constant 0 : index
    %c0_31 = arith.constant 0 : index
    %c0_32 = arith.constant 0 : index
    %90 = vector.load %arg11[%c0_30, %c0_31, %c0_32] : memref<1x4x256xf32, #tpu.memory_space<vmem>>, vector<1x4x256xf32>
    %91 = vector.shape_cast %90 : vector<1x4x256xf32> to vector<4x256xf32>
    %92 = vector.shape_cast %89 : vector<4x256xf32> to vector<1x4x256xf32>
    tpu.vector_store %arg11[%c0_30, %c0_31, %c0_32], %92 {strides = array<i32>} : memref<1x4x256xf32, #tpu.memory_space<vmem>>, vector<1x4x256xf32>,
    return
  }
  func.func @transform_0(%arg0: i32, %arg1: i32) -> (i32, i32, i32) {
    %c0_i32 = arith.constant 0 : i32
    %c0_i32_0 = arith.constant 0 : i32
    %c0_i32_1 = arith.constant 0 : i32
    return %arg0, %c0_i32, %c0_i32_0 : i32, i32, i32
  }
  func.func @transform_1(%arg0: i32, %arg1: i32) -> (i32, i32, i32) {
    %c0_i32 = arith.constant 0 : i32
    %c0_i32_0 = arith.constant 0 : i32
    %c0_i32_1 = arith.constant 0 : i32
    return %arg1, %c0_i32, %c0_i32_0 : i32, i32, i32
  }
  func.func @transform_2(%arg0: i32, %arg1: i32) -> (i32, i32, i32) {
    %c0_i32 = arith.constant 0 : i32
    %c0_i32_0 = arith.constant 0 : i32
    %c0_i32_1 = arith.constant 0 : i32
    %c0_i32_2 = arith.constant 0 : i32
    return %c0_i32, %c0_i32_0, %c0_i32_1 : i32, i32, i32
  }
  func.func @transform_3(%arg0: i32, %arg1: i32) -> (i32, i32, i32) {
    %c0_i32 = arith.constant 0 : i32
    %c0_i32_0 = arith.constant 0 : i32
    %c0_i32_1 = arith.constant 0 : i32
    %c0_i32_2 = arith.constant 0 : i32
    return %c0_i32, %c0_i32_0, %c0_i32_1 : i32, i32, i32
  }
  func.func @transform_4(%arg0: i32, %arg1: i32) -> (i32, i32, i32) {
    %c0_i32 = arith.constant 0 : i32
    %c0_i32_0 = arith.constant 0 : i32
    %c0_i32_1 = arith.constant 0 : i32
    %c0_i32_2 = arith.constant 0 : i32
    return %c0_i32, %c0_i32_0, %c0_i32_1 : i32, i32, i32
  }
  func.func @transform_5(%arg0: i32, %arg1: i32) -> (i32, i32, i32) {
    %c0_i32 = arith.constant 0 : i32
    %c0_i32_0 = arith.constant 0 : i32
    %c0_i32_1 = arith.constant 0 : i32
    %c0_i32_2 = arith.constant 0 : i32
    return %c0_i32, %c0_i32_0, %c0_i32_1 : i32, i32, i32
  }
  func.func @transform_6(%arg0: i32, %arg1: i32) -> (i32, i32, i32) {
    %c1_i32 = arith.constant 1 : i32
    %0 = arith.muli %arg0, %c1_i32 : i32
    %1 = arith.addi %0, %arg1 : i32
    %c0_i32 = arith.constant 0 : i32
    %c0_i32_0 = arith.constant 0 : i32
    %c0_i32_1 = arith.constant 0 : i32
    return %1, %c0_i32, %c0_i32_0 : i32, i32, i32
  }
  func.func @transform_7(%arg0: i32, %arg1: i32) -> (i32, i32) {
    %c0_i32 = arith.constant 0 : i32
    %c0_i32_0 = arith.constant 0 : i32
    %c0_i32_1 = arith.constant 0 : i32
    return %c0_i32, %c0_i32_0 : i32, i32
  }
  func.func @transform_8(%arg0: i32, %arg1: i32) -> (i32, i32, i32) {
    %c0_i32 = arith.constant 0 : i32
    %c0_i32_0 = arith.constant 0 : i32
    %c0_i32_1 = arith.constant 0 : i32
    return %arg1, %c0_i32, %c0_i32_0 : i32, i32, i32
  }
  func.func @transform_9(%arg0: i32, %arg1: i32) -> (i32, i32, i32) {
    %c1_i32 = arith.constant 1 : i32
    %0 = arith.muli %arg0, %c1_i32 : i32
    %1 = arith.addi %0, %arg1 : i32
    %c0_i32 = arith.constant 0 : i32
    %c0_i32_0 = arith.constant 0 : i32
    %c0_i32_1 = arith.constant 0 : i32
    return %1, %c0_i32, %c0_i32_0 : i32, i32, i32
  }
}

</mosaic_0001>

<llo_original>
// kernel: tpu_custom_call.1
$region0: #{tpu_custom_call.1}
  #allocation0 [shape = 'u32[]', space=smem, size = 0x4, offset = 0x4, fixed_abs, tag = 'smem constant byte address 0x4 - core index']
  #allocation1 [shape = 'u32[144,128]{1,0:T(1,128)}', space=vmem, size = 0x12000, scoped, tag = 'internal scratch']
  %s0 = inlined_call_operand.hbm [shape: f32[8,128], index: 0, kind: input, shape index: {}]
  %s1 = inlined_call_operand.hbm [shape: f32[8,128], index: 1, kind: output, shape index: {}]
  %s2 = sld [smem:[#allocation0]]
  $region18: #{tpu_custom_call.1} parent=0
    _
  %s4 = ssub.s32 1, %s2
  %s5 = scalar_select 0, %s4, %s2
  $region1: #{tpu_custom_call.1} parent=0
    #allocation2 [shape = 'u8[4096]{0}', space=vmem, size = 0x1000, scoped, tag = 'input window, operand 0, single buffered']
    #allocation3 [shape = 's32[1]{0}', space=sflag, size = 0x4, scoped, tag = 'scoped memory for tpu_custom_call.1']
    #allocation4 [shape = 's32[1]{0}', space=sflag, size = 0x4, scoped, tag = 'scoped memory for tpu_custom_call.1']
    #allocation5 [shape = 'u8[4096]{0}', space=vmem, size = 0x1000, scoped, tag = 'output window, operand 0, single buffered']
    %6 = vsyncpa [#allocation3], 0
    %7 = vsyncpa [#allocation4], 0
    // Predicated region
    $region2: #{tpu_custom_call.1} parent=1 // pred_check
      _
    $region3: #{tpu_custom_call.1} parent=1 // pred_check_branch
      %9 = sbr.rel (0) target = $region5
    $region4: #{tpu_custom_call.1} parent=1 // pred_region
      %s11 = ssub.s32 128, 128
      %12 = vsyncadd [#allocation3], %s11
      %s14 = sshll.u32 [#allocation2], 4
      %s15 = int_to_ptr.vmem [resolvable:$true] %s14
      %17 = dma.hbm_to_vmem [thread:$0]  %s0, 128, %s15, [#allocation3]
    $region5: #{tpu_custom_call.1} parent=1 // pred_fallthru
      _
    // Predicated region
    $region6: #{tpu_custom_call.1} parent=1 // pred_check
      _
    $region7: #{tpu_custom_call.1} parent=1 // pred_check_branch
      %19 = sbr.rel (0) target = $region9
    $region8: #{tpu_custom_call.1} parent=1 // pred_region
      %20 = dma.done [#allocation3], 128
    $region9: #{tpu_custom_call.1} parent=1 // pred_fallthru
      _
    %v21 = vld [vmem:[#allocation2] sm:$0xff]
    %22 = vrot.lane.b32.xlu0 %v21, 3
    %v23 = vpop.permute.xlu0 %22
    %24 = vst [vmem:[#allocation5] sm:$0xff] %v23
    // Predicated region
    $region10: #{tpu_custom_call.1} parent=1 // pred_check
      _
    $region11: #{tpu_custom_call.1} parent=1 // pred_check_branch
      %26 = sbr.rel (0) target = $region13
    $region12: #{tpu_custom_call.1} parent=1 // pred_region
      %s28 = ssub.s32 128, 128
      %29 = vsyncadd [#allocation4], %s28
      %s31 = sshll.u32 [#allocation5], 4
      %s32 = int_to_ptr.vmem [resolvable:$true] %s31
      %34 = dma.vmem_to_hbm [thread:$0]  %s32, 128, %s1, [#allocation4]
    $region13: #{tpu_custom_call.1} parent=1 // pred_fallthru
      _
    // Predicated region
    $region14: #{tpu_custom_call.1} parent=1 // pred_check
      _
    $region15: #{tpu_custom_call.1} parent=1 // pred_check_branch
      %36 = sbr.rel (0) target = $region17
    $region16: #{tpu_custom_call.1} parent=1 // pred_region
      %37 = dma.done [#allocation4], 128
    $region17: #{tpu_custom_call.1} parent=1 // pred_fallthru
      _
    %38 = vsyncpa [#allocation3], 1
    %39 = vsyncpa [#allocation4], 1

// kernel: squeeze.5
$region0: #{squeeze.5}
  %s0 = inlined_call_operand.vmem [shape: f32[1,1,2,16,4], index: 0, kind: input, shape index: {}]
  %s1 = inlined_call_operand.vmem [shape: f32[1,32,4], index: 1, kind: output, shape index: {}]
  $region1: #{squeeze.5} parent=0
    #allocation0 [shape = 'u8[4096]{0}', space=vmem, size = 0x1000, scoped, tag = 'scoped mem for output reshape']
    #allocation1 [shape = 'u8[16384]{0}', space=vmem, size = 0x4000, scoped, tag = 'scoped mem for input reshape']
    %s3 = sshllo.u32 0, 2
    %s4 = smul.addr 2, 3
    %s5 = scalar_lea.vmem %s0, %s4
    %v6 = vld [vmem:[%s5] sm:%s3]
    %s7 = scalar_lea.vmem [#allocation1], 24
    %8 = vst [vmem:[%s7] sm:%s3] %v6
    %s9 = smul.addr 2, 2
    %s10 = scalar_lea.vmem %s0, %s9
    %v11 = vld [vmem:[%s10] sm:%s3]
    %s12 = scalar_lea.vmem [#allocation1], 16
    %13 = vst [vmem:[%s12] sm:%s3] %v11
    %s14 = scalar_lea.vmem %s0, 2
    %v15 = vld [vmem:[%s14] sm:%s3]
    %s16 = scalar_lea.vmem [#allocation1], 8
    %17 = vst [vmem:[%s16] sm:%s3] %v15
    %v18 = vld [vmem:[%s0] sm:%s3]
    %19 = vst [vmem:[#allocation1] sm:%s3] %v18
    %v20 = vld [vmem:[#allocation1] ss:$8 sm:$0xf]
    %vm21 = vcmask 130048
    %22 = vst.msk [vmem:[#allocation0] sm:$0xf] %vm21, %v20
    %s23 = scalar_lea.vmem [#allocation1], 1
    %v24 = vld [vmem:[%s23] ss:$8 sm:$0xf]
    %25 = vrot.lane.b32.xlu0 %v24, 16
    %v26 = vpop.permute.xlu0 %25
    %vm27 = vcmask 261248
    %28 = vst.msk [vmem:[#allocation0] sm:$0xf] %vm27, %v26
    %s30 = sshllo.u32 0, 4
    %v32 = vld [vmem:[#allocation0] sm:%s30]
    %s33 = sshllo.u32 0, 4
    %34 = vst [vmem:[%s1] sm:%s33] %v32

// kernel: gsa_forward_pallas.2
$region0: #{gsa_forward_pallas.2}
  #allocation0 [shape = 'u32[]', space=smem, size = 0x4, offset = 0x4, fixed_abs, tag = 'smem constant byte address 0x4 - core index']
  #allocation1 [shape = 'u32[144,128]{1,0:T(1,128)}', space=vmem, size = 0x12000, scoped, tag = 'internal scratch']
  %s0 = inlined_call_operand.vmem [shape: f32[2,8,256], index: 0, kind: input, shape index: {}]
  %s1 = inlined_call_operand.vmem [shape: f32[1,96,8], index: 1, kind: input, shape index: {}]
  %s2 = inlined_call_operand.vmem [shape: f32[2,5,16], index: 2, kind: input, shape index: {}]
  %s3 = inlined_call_operand.vmem [shape: f32[1,5,256], index: 3, kind: input, shape index: {}]
  %s4 = inlined_call_operand.vmem [shape: bf16[4,16,256], index: 4, kind: output, shape index: {0}]
  %s5 = inlined_call_operand.vmem [shape: f32[2,16,2], index: 5, kind: output, shape index: {1}]
  %6 = xla_tuple %s4, %s5
  %s7 = sld [smem:[#allocation0]]
  $region57: #{gsa_forward_pallas.2} parent=0
    _
  %s9 = ssub.s32 1, %s7
  %s10 = scalar_select 0, %s9, %s7
  loop: start=0, step=1, limit=4
  $region2: #{gsa_forward_pallas.2} parent=0 // loop_pre_header
    _
  $region3: #{gsa_forward_pallas.2} parent=0 // loop_header
    %s12 = sphi 0, %s16
    %p13 = scmp.ge.s32.totalorder %s12, 4
    %s19 = sphi 0, %s31
    %s20 = sphi 0, %s27
    %s21 = sphi 0, %s19
    %s22 = sphi 0, %s20
    %s23 = sphi 0, %s21
    %s24 = sphi 0, %s22
    %s34 = sphi 0, %s36
    %s37 = sphi 0, %s34
    %s38 = sphi 0, %s37
    %s54 = sphi 0, %s38
    %s60 = sphi 0, %s62
    %s63 = sphi 0, %s60
    %s64 = sphi 0, %s63
    %s80 = sphi 0, %s64
    %s84 = sphi 0, %s84
    %s86 = sphi 0, %s84
    %s87 = sphi 0, %s86
    %s101 = sphi 0, %s87
    %s105 = sphi 0, %s105
    %s107 = sphi 0, %s105
    %s108 = sphi 0, %s107
    %s122 = sphi 0, %s108
    %s130 = sphi 0, %s132
    %s133 = sphi 0, %s130
    %s134 = sphi 0, %s133
    %s150 = sphi 0, %s134
    %s158 = sphi 0, %s160
    %s161 = sphi 0, %s158
    %s162 = sphi 0, %s161
    %s178 = sphi 0, %s162
  $region4: #{gsa_forward_pallas.2} parent=0 // loop_header_branch
    %15 = sbr.rel (%p13) target = $region8
  $region5: #{gsa_forward_pallas.2} parent=0 // loop_body
    %s17 = ssub.s32 %s12, 1
    %s18 = ssub.s32 %s12, 2
    %s25 = sadd.s32 1, %s20
    %p26 = scmp.ge.s32.totalorder %s25, 1
    %s27 = scalar_select %p26, 0, %s25
    %s28 = sadd.s32 1, %s19
    %s29 = scalar_select %p26, %s28, %s19
    %p30 = scmp.ge.s32.totalorder %s29, 2
    %s31 = scalar_select %p30, 0, %s29
    %s32 = ssub.s32 %s19, %s31
    %p33 = scmp.eq.s32.totalorder %s32, 0
    %s35 = sadd.s32 %s34, 1
    %s36 = scalar_select %p33, %s34, %s35
    %p39 = pneg %p33
    %p40 = scmp.eq.s32.totalorder %s12, 1
    %p41 = por %p39, %p40
    %p42 = scmp.ne.s32.totalorder %s34, %s37
    %p43 = scmp.eq.s32.totalorder %s12, 0
    %p44 = por %p42, %p43
    %p45 = scmp.ne.s32.totalorder %s34, %s37
    %p46 = scmp.eq.s32.totalorder %s17, 1
    %p47 = por %p45, %p46
    %p48 = scmp.ne.s32.totalorder %s37, %s38
    %p49 = scmp.eq.s32.totalorder %s17, 0
    %p50 = por %p48, %p49
    %p51 = scmp.ne.s32.totalorder %s37, %s38
    %p52 = scmp.eq.s32.totalorder %s18, 1
    %p53 = por %p51, %p52
    %p55 = scmp.ne.s32.totalorder %s38, %s54
    %p56 = scmp.eq.s32.totalorder %s18, 0
    %p57 = por %p55, %p56
    %s58 = ssub.s32 %s20, %s27
    %p59 = scmp.eq.s32.totalorder %s58, 0
    %s61 = sadd.s32 %s60, 1
    %s62 = scalar_select %p59, %s60, %s61
    %p65 = pneg %p59
    %p66 = scmp.eq.s32.totalorder %s12, 1
    %p67 = por %p65, %p66
    %p68 = scmp.ne.s32.totalorder %s60, %s63
    %p69 = scmp.eq.s32.totalorder %s12, 0
    %p70 = por %p68, %p69
    %p71 = scmp.ne.s32.totalorder %s60, %s63
    %p72 = scmp.eq.s32.totalorder %s17, 1
    %p73 = por %p71, %p72
    %p74 = scmp.ne.s32.totalorder %s63, %s64
    %p75 = scmp.eq.s32.totalorder %s17, 0
    %p76 = por %p74, %p75
    %p77 = scmp.ne.s32.totalorder %s63, %s64
    %p78 = scmp.eq.s32.totalorder %s18, 1
    %p79 = por %p77, %p78
    %p81 = scmp.ne.s32.totalorder %s64, %s80
    %p82 = scmp.eq.s32.totalorder %s18, 0
    %p83 = por %p81, %p82
    %s85 = sadd.s32 %s84, 1
    %p88 = scmp.eq.s32.totalorder %s12, 1
    %p89 = scmp.ne.s32.totalorder %s84, %s86
    %p90 = scmp.eq.s32.totalorder %s12, 0
    %p91 = por %p89, %p90
    %p92 = scmp.ne.s32.totalorder %s84, %s86
    %p93 = scmp.eq.s32.totalorder %s17, 1
    %p94 = por %p92, %p93
    %p95 = scmp.ne.s32.totalorder %s86, %s87
    %p96 = scmp.eq.s32.totalorder %s17, 0
    %p97 = por %p95, %p96
    %p98 = scmp.ne.s32.totalorder %s86, %s87
    %p99 = scmp.eq.s32.totalorder %s18, 1
    %p100 = por %p98, %p99
    %p102 = scmp.ne.s32.totalorder %s87, %s101
    %p103 = scmp.eq.s32.totalorder %s18, 0
    %p104 = por %p102, %p103
    %s106 = sadd.s32 %s105, 1
    %p109 = scmp.eq.s32.totalorder %s12, 1
    %p110 = scmp.ne.s32.totalorder %s105, %s107
    %p111 = scmp.eq.s32.totalorder %s12, 0
    %p112 = por %p110, %p111
    %p113 = scmp.ne.s32.totalorder %s105, %s107
    %p114 = scmp.eq.s32.totalorder %s17, 1
    %p115 = por %p113, %p114
    %p116 = scmp.ne.s32.totalorder %s107, %s108
    %p117 = scmp.eq.s32.totalorder %s17, 0
    %p118 = por %p116, %p117
    %p119 = scmp.ne.s32.totalorder %s107, %s108
    %p120 = scmp.eq.s32.totalorder %s18, 1
    %p121 = por %p119, %p120
    %p123 = scmp.ne.s32.totalorder %s108, %s122
    %p124 = scmp.eq.s32.totalorder %s18, 0
    %p125 = por %p123, %p124
    %s126 = sadd.s32 %s19, %s20
    %s127 = sadd.s32 %s31, %s27
    %s128 = ssub.s32 %s126, %s127
    %p129 = scmp.eq.s32.totalorder %s128, 0
    %s131 = sadd.s32 %s130, 1
    %s132 = scalar_select %p129, %s130, %s131
    %p135 = pneg %p129
    %p136 = scmp.eq.s32.totalorder %s12, 1
    %p137 = por %p135, %p136
    %p138 = scmp.ne.s32.totalorder %s130, %s133
    %p139 = scmp.eq.s32.totalorder %s12, 0
    %p140 = por %p138, %p139
    %p141 = scmp.ne.s32.totalorder %s130, %s133
    %p142 = scmp.eq.s32.totalorder %s17, 1
    %p143 = por %p141, %p142
    %p144 = scmp.ne.s32.totalorder %s133, %s134
    %p145 = scmp.eq.s32.totalorder %s17, 0
    %p146 = por %p144, %p145
    %p147 = scmp.ne.s32.totalorder %s133, %s134
    %p148 = scmp.eq.s32.totalorder %s18, 1
    %p149 = por %p147, %p148
    %p151 = scmp.ne.s32.totalorder %s134, %s150
    %p152 = scmp.eq.s32.totalorder %s18, 0
    %p153 = por %p151, %p152
    %s154 = sadd.s32 %s19, %s20
    %s155 = sadd.s32 %s31, %s27
    %s156 = ssub.s32 %s154, %s155
    %p157 = scmp.eq.s32.totalorder %s156, 0
    %s159 = sadd.s32 %s158, 1
    %s160 = scalar_select %p157, %s158, %s159
    %p163 = pneg %p157
    %p164 = scmp.eq.s32.totalorder %s12, 1
    %p165 = por %p163, %p164
    %p166 = scmp.ne.s32.totalorder %s158, %s161
    %p167 = scmp.eq.s32.totalorder %s12, 0
    %p168 = por %p166, %p167
    %p169 = scmp.ne.s32.totalorder %s158, %s161
    %p170 = scmp.eq.s32.totalorder %s17, 1
    %p171 = por %p169, %p170
    %p172 = scmp.ne.s32.totalorder %s161, %s162
    %p173 = scmp.eq.s32.totalorder %s17, 0
    %p174 = por %p172, %p173
    %p175 = scmp.ne.s32.totalorder %s161, %s162
    %p176 = scmp.eq.s32.totalorder %s18, 1
    %p177 = por %p175, %p176
    %p179 = scmp.ne.s32.totalorder %s162, %s178
    %p180 = scmp.eq.s32.totalorder %s18, 0
    %p181 = por %p179, %p180
    %p182 = scmp.le.s32.totalorder 1, %s12
    %p183 = scmp.lt.s32.totalorder %s12, 3
    %p184 = pnand %p182, %p183
    %p185 = pneg %p184
    // Predicated region
    $region9: #{gsa_forward_pallas.2} parent=5 // pred_check
      _
    $region10: #{gsa_forward_pallas.2} parent=5 // pred_check_branch
      %187 = sbr.rel (%p184) target = $region12
    $region11: #{gsa_forward_pallas.2} parent=5 // pred_region
      %s188 = ssub.s32 %s12, 1
      // Predicated region
      $region13: #{gsa_forward_pallas.2} parent=11 // pred_check
        %p189 = pneg %p76
      $region14: #{gsa_forward_pallas.2} parent=11 // pred_check_branch
        %191 = sbr.rel (%p189) target = $region16
      $region15: #{gsa_forward_pallas.2} parent=11 // pred_region
        %p192 = scmp.lt.s32.totalorder %s22, 0
        %s193 = scalar_select %p192, %s22, 0
        %s194 = smul.addr %s193, 12
        %s195 = smul.addr %s194, 8
        %s196 = scalar_lea.vmem %s1, %s195
      $region16: #{gsa_forward_pallas.2} parent=11 // pred_fallthru
        _
      // Predicated region
      $region17: #{gsa_forward_pallas.2} parent=11 // pred_check
        %p197 = pneg %p97
      $region18: #{gsa_forward_pallas.2} parent=11 // pred_check_branch
        %199 = sbr.rel (%p197) target = $region20
      $region19: #{gsa_forward_pallas.2} parent=11 // pred_region
        _
      $region20: #{gsa_forward_pallas.2} parent=11 // pred_fallthru
        _
      // Predicated region
      $region21: #{gsa_forward_pallas.2} parent=11 // pred_check
        %p200 = pneg %p118
      $region22: #{gsa_forward_pallas.2} parent=11 // pred_check_branch
        %202 = sbr.rel (%p200) target = $region24
      $region23: #{gsa_forward_pallas.2} parent=11 // pred_region
        _
      $region24: #{gsa_forward_pallas.2} parent=11 // pred_fallthru
        _
    $region12: #{gsa_forward_pallas.2} parent=5 // pred_fallthru
      _
    %p203 = scmp.lt.s32.totalorder %s12, 2
    // Predicated region
    $region25: #{gsa_forward_pallas.2} parent=5 // pred_check
      %p204 = pneg %p203
    $region26: #{gsa_forward_pallas.2} parent=5 // pred_check_branch
      %206 = sbr.rel (%p204) target = $region28
    $region27: #{gsa_forward_pallas.2} parent=5 // pred_region
      // Predicated region
      $region29: #{gsa_forward_pallas.2} parent=27 // pred_check
        %p207 = pneg %p44
      $region30: #{gsa_forward_pallas.2} parent=27 // pred_check_branch
        %209 = sbr.rel (%p207) target = $region32
      $region31: #{gsa_forward_pallas.2} parent=27 // pred_region
        %p210 = scmp.lt.s32.totalorder %s19, 1
        %s211 = scalar_select %p210, %s19, 1
        %s212 = smul.addr %s211, 2
        %s213 = smul.addr %s212, 8
        %s214 = scalar_lea.vmem %s0, %s213
      $region32: #{gsa_forward_pallas.2} parent=27 // pred_fallthru
        _
    $region28: #{gsa_forward_pallas.2} parent=5 // pred_fallthru
      _
    %p215 = scmp.le.s32.totalorder 1, %s12
    %p216 = scmp.lt.s32.totalorder %s12, 3
    %p217 = pnand %p215, %p216
    %p218 = pneg %p217
    // Predicated region
    $region33: #{gsa_forward_pallas.2} parent=5 // pred_check
      _
    $region34: #{gsa_forward_pallas.2} parent=5 // pred_check_branch
      %220 = sbr.rel (%p217) target = $region36
    $region35: #{gsa_forward_pallas.2} parent=5 // pred_region
      %s221 = ssub.s32 %s12, 1
      %p222 = scmp.lt.s32.totalorder %s21, 1
      %s223 = scalar_select %p222, %s21, 1
      %s224 = smul.addr %s223, 2
      %s225 = smul.addr %s224, 8
      %s226 = scalar_lea.vmem %s0, %s225
      %p227 = pneg %p50
      %p228 = pneg %p47
      %p229 = scmp.lt.s32.totalorder %s22, 0
      %s230 = scalar_select %p229, %s22, 0
      %s231 = smul.addr %s230, 12
      %s232 = smul.addr %s231, 8
      %s233 = scalar_lea.vmem %s1, %s232
      %p234 = pneg %p76
      %p235 = pneg %p73
      %p236 = pneg %p97
      %p237 = pneg %p94
      %p238 = pneg %p118
      %p239 = pneg %p115
      %p240 = pneg %p146
      %p241 = pneg %p143
      %s242 = sadd.s32 %s21, %s22
      %s243 = smul.u32 2, %s242
      %p244 = scmp.lt.s32.totalorder %s243, 3
      %s245 = scalar_select %p244, %s243, 3
      %s246 = smul.addr %s245, 4
      %s247 = smul.addr %s246, 4
      %s248 = scalar_lea.vmem %s4, %s247
      %p249 = pneg %p174
      %p250 = pneg %p171
      %s251 = sadd.s32 %s21, %s22
      %p252 = scmp.lt.s32.totalorder %s251, 1
      %s253 = scalar_select %p252, %s251, 1
      %s254 = smul.addr %s253, 2
      %s255 = smul.addr %s254, 8
      %s256 = scalar_lea.vmem %s5, %s255
      %p257 = scmp.lt.s32.totalorder %s21, 1
      %s258 = scalar_select %p257, %s21, 1
      %s259 = smul.addr %s258, 2
      %s260 = smul.addr %s259, 8
      %s261 = scalar_lea.vmem %s0, %s260
      %p262 = scmp.lt.s32.totalorder %s22, 0
      %s263 = scalar_select %p262, %s22, 0
      %s264 = smul.addr %s263, 12
      %s265 = smul.addr %s264, 8
      %s266 = scalar_lea.vmem %s1, %s265
      %s267 = sadd.s32 %s21, %s22
      %s268 = smul.u32 2, %s267
      %p269 = scmp.lt.s32.totalorder %s268, 3
      %s270 = scalar_select %p269, %s268, 3
      %s271 = smul.addr %s270, 4
      %s272 = smul.addr %s271, 4
      %s273 = scalar_lea.vmem %s4, %s272
      %s274 = sadd.s32 %s21, %s22
      %s275 = smul.u32 2, %s274
      %s276 = sadd.s32 %s21, %s22
      %p277 = scmp.lt.s32.totalorder %s276, 1
      %s278 = scalar_select %p277, %s276, 1
      %s279 = smul.addr %s278, 2
      %s280 = smul.addr %s279, 8
      %s281 = scalar_lea.vmem %s5, %s280
      %s282 = sadd.s32 %s21, %s22
      %v283 = vld [vmem:[%s261] sm:$0xff]
      %v284 = vld [vmem:[%s261 + $0x8] sm:$0xff]
      %v285 = vld [vmem:[%s266] sm:$0xff]
      %v286 = vld [vmem:[%s266 + $0x8] sm:$0xff]
      %v287 = vld [vmem:[%s266 + $0x10] sm:$0xff]
      %v288 = vld [vmem:[%s266 + $0x18] sm:$0xff]
      %v289 = vld [vmem:[%s266 + $0x20] sm:$0xff]
      %v290 = vld [vmem:[%s266 + $0x28] sm:$0xff]
      %v291 = vld [vmem:[%s266 + $0x30] sm:$0xff]
      %v292 = vld [vmem:[%s266 + $0x38] sm:$0xff]
      %v293 = vld [vmem:[%s266 + $0x40] sm:$0xff]
      %v294 = vld [vmem:[%s266 + $0x48] sm:$0xff]
      %v295 = vld [vmem:[%s266 + $0x50] sm:$0xff]
      %v296 = vld [vmem:[%s266 + $0x58] sm:$0xff]
      %vm297 = vcmask 64512
      %v299 = vsel %vm297, %v285, 0
      %v302 = vsel %vm297, %v286, 0
      %v305 = vsel %vm297, %v287, 0
      %v308 = vsel %vm297, %v288, 0
      %v311 = vsel %vm297, %v289, 0
      %v314 = vsel %vm297, %v290, 0
      %v317 = vsel %vm297, %v291, 0
      %v320 = vsel %vm297, %v292, 0
      %v323 = vsel %vm297, %v293, 0
      %v326 = vsel %vm297, %v294, 0
      %v329 = vsel %vm297, %v295, 0
      %v332 = vsel %vm297, %v296, 0
      %334 = vmatprep.subr.mxu0 %v284
      %335 = vmatpush1.msra.mxu0 %v283
      %336 = vmatprep.subr.mxu0 0.0
      %337 = vmatpush1.msra.mxu0 0.0
      %338 = vmatprep.subr.mxu0 0.0
      %339 = vmatpush1.msra.mxu0 0.0
      %340 = vmatprep.subr.mxu0 0.0
      %341 = vmatpush1.msra.mxu0 0.0
      %342 = vmatprep.subr.mxu0 0.0
      %343 = vmatpush1.msra.mxu0 0.0
      %344 = vmatprep.subr.mxu0 0.0
      %345 = vmatpush1.msra.mxu0 0.0
      %346 = vmatprep.subr.mxu0 0.0
      %347 = vmatpush1.msra.mxu0 0.0
      %348 = vmatprep.subr.mxu0 0.0
      %349 = vmatpush1.msra.mxu0 0.0
      %350 = vmatprep.subr.mxu0 0.0
      %351 = vmatpush1.msra.mxu0 0.0
      %352 = vmatprep.subr.mxu0 0.0
      %353 = vmatpush1.msra.mxu0 0.0
      %354 = vmatprep.subr.mxu0 0.0
      %355 = vmatpush1.msra.mxu0 0.0
      %356 = vmatprep.subr.mxu0 0.0
      %357 = vmatpush1.msra.mxu0 0.0
      %358 = vmatprep.subr.mxu0 0.0
      %359 = vmatpush1.msra.mxu0 0.0
      %360 = vmatprep.subr.mxu0 0.0
      %361 = vmatpush1.msra.mxu0 0.0
      %362 = vmatprep.subr.mxu0 0.0
      %363 = vmatpush1.msra.mxu0 0.0
      %364 = vmatprep.subr.mxu0 0.0
      %365 = vmatpush1.msra.mxu0 0.0
      %366 = vmatprep.subr.mxu0 0.0
      %367 = vmatpush1.msra.mxu0 0.0
      %368 = vmatprep.subr.mxu0 0.0
      %369 = vmatpush1.msra.mxu0 0.0
      %370 = vmatprep.subr.mxu0 0.0
      %371 = vmatpush1.msra.mxu0 0.0
      %372 = vmatprep.subr.mxu0 0.0
      %373 = vmatpush1.msra.mxu0 0.0
      %374 = vmatprep.subr.mxu0 0.0
      %375 = vmatpush1.msra.mxu0 0.0
      %376 = vmatprep.subr.mxu0 0.0
      %377 = vmatpush1.msra.mxu0 0.0
      %378 = vmatprep.subr.mxu0 0.0
      %379 = vmatpush1.msra.mxu0 0.0
      %380 = vmatprep.subr.mxu0 0.0
      %381 = vmatpush1.msra.mxu0 0.0
      %382 = vmatprep.subr.mxu0 0.0
      %383 = vmatpush1.msra.mxu0 0.0
      %384 = vmatprep.subr.mxu0 0.0
      %385 = vmatpush1.msra.mxu0 0.0
      %386 = vmatprep.subr.mxu0 0.0
      %387 = vmatpush1.msra.mxu0 0.0
      %388 = vmatprep.subr.mxu0 0.0
      %389 = vmatpush1.msra.mxu0 0.0
      %390 = vmatprep.subr.mxu0 0.0
      %391 = vmatpush1.msra.mxu0 0.0
      %392 = vmatprep.subr.mxu0 0.0
      %393 = vmatpush1.msra.mxu0 0.0
      %394 = vmatprep.subr.mxu0 0.0
      %395 = vmatpush1.msra.mxu0 0.0
      %396 = vmatprep.subr.mxu0 0.0
      %397 = vmatpush1.msra.mxu0 0.0
      %398 = vmatprep.mubr.f32.mxu0 0.0
      %399 = vmatmul.mubr.f32.gmra.mrb[0].mxu0 %v299
      %v400 = vpop.f32.mrb[0].mxu0
      %v401 = vadd.f32 0.0, %v400
      %v402 = vpop.f32.mrb[0].mxu0
      %v403 = vadd.f32 0.0, %v402
      %404 = vmatprep.mubr.f32.mxu0 0.0
      %405 = vmatmul.mubr.f32.gmra.mrb[0].mxu0 %v302
      %v406 = vpop.f32.mrb[0].mxu0
      %v407 = vadd.f32 0.0, %v406
      %v408 = vpop.f32.mrb[0].mxu0
      %v409 = vadd.f32 0.0, %v408
      %410 = vmatprep.mubr.f32.mxu0 0.0
      %411 = vmatmul.mubr.f32.gmra.mrb[0].mxu0 %v305
      %v412 = vpop.f32.mrb[0].mxu0
      %v413 = vadd.f32 0.0, %v412
      %v414 = vpop.f32.mrb[0].mxu0
      %v415 = vadd.f32 0.0, %v414
      %416 = vmatprep.mubr.f32.mxu0 0.0
      %417 = vmatmul.mubr.f32.gmra.mrb[0].mxu0 %v308
      %v418 = vpop.f32.mrb[0].mxu0
      %v419 = vadd.f32 0.0, %v418
      %v420 = vpop.f32.mrb[0].mxu0
      %v421 = vadd.f32 0.0, %v420
      %422 = vmatprep.mubr.f32.mxu0 0.0
      %423 = vmatmul.mubr.f32.gmra.mrb[0].mxu0 %v311
      %v424 = vpop.f32.mrb[0].mxu0
      %v425 = vadd.f32 0.0, %v424
      %v426 = vpop.f32.mrb[0].mxu0
      %v427 = vadd.f32 0.0, %v426
      %428 = vmatprep.mubr.f32.mxu0 0.0
      %429 = vmatmul.mubr.f32.gmra.mrb[0].mxu0 %v314
      %v430 = vpop.f32.mrb[0].mxu0
      %v431 = vadd.f32 0.0, %v430
      %v432 = vpop.f32.mrb[0].mxu0
      %v433 = vadd.f32 0.0, %v432
      %434 = vmatprep.mubr.f32.mxu0 0.0
      %435 = vmatmul.mubr.f32.gmra.mrb[0].mxu0 %v317
      %v436 = vpop.f32.mrb[0].mxu0
      %v437 = vadd.f32 0.0, %v436
      %v438 = vpop.f32.mrb[0].mxu0
      %v439 = vadd.f32 0.0, %v438
      %440 = vmatprep.mubr.f32.mxu0 0.0
      %441 = vmatmul.mubr.f32.gmra.mrb[0].mxu0 %v320
      %v442 = vpop.f32.mrb[0].mxu0
      %v443 = vadd.f32 0.0, %v442
      %v444 = vpop.f32.mrb[0].mxu0
      %v445 = vadd.f32 0.0, %v444
      %446 = vmatprep.mubr.f32.mxu0 0.0
      %447 = vmatmul.mubr.f32.gmra.mrb[0].mxu0 %v323
      %v448 = vpop.f32.mrb[0].mxu0
      %v449 = vadd.f32 0.0, %v448
      %v450 = vpop.f32.mrb[0].mxu0
      %v451 = vadd.f32 0.0, %v450
      %452 = vmatprep.mubr.f32.mxu0 0.0
      %453 = vmatmul.mubr.f32.gmra.mrb[0].mxu0 %v326
      %v454 = vpop.f32.mrb[0].mxu0
      %v455 = vadd.f32 0.0, %v454
      %v456 = vpop.f32.mrb[0].mxu0
      %v457 = vadd.f32 0.0, %v456
      %458 = vmatprep.mubr.f32.mxu0 0.0
      %459 = vmatmul.mubr.f32.gmra.mrb[0].mxu0 %v329
      %v460 = vpop.f32.mrb[0].mxu0
      %v461 = vadd.f32 0.0, %v460
      %v462 = vpop.f32.mrb[0].mxu0
      %v463 = vadd.f32 0.0, %v462
      %464 = vmatprep.mubr.f32.mxu0 0.0
      %465 = vmatmul.mubr.f32.gmra.mrb[0].mxu0 %v332
      %v466 = vpop.f32.mrb[0].mxu0
      %v467 = vadd.f32 0.0, %v466
      %v468 = vpop.f32.mrb[0].mxu0
      %v469 = vadd.f32 0.0, %v468
      %470 = vdwg.mxu0
      %v471 = vmax.f32 %v425, %v427
      %472 = vmax.xlane.f32.xlu0 %v471
      %v473 = vpop.xlane.xlu0 %472
      %v474 = vmax.f32 %v431, %v433
      %475 = vmax.xlane.f32.xlu0 %v474
      %v476 = vpop.xlane.xlu0 %475
      %v477 = vmax.f32 %v437, %v439
      %478 = vmax.xlane.f32.xlu0 %v477
      %v479 = vpop.xlane.xlu0 %478
      %v480 = vmax.f32 %v443, %v445
      %481 = vmax.xlane.f32.xlu0 %v480
      %v482 = vpop.xlane.xlu0 %481
      %v483 = vsub.f32 %v425, %v473
      %v484 = vsub.f32 %v427, %v473
      %v485 = vsub.f32 %v431, %v476
      %v486 = vsub.f32 %v433, %v476
      %v487 = vsub.f32 %v437, %v479
      %v488 = vsub.f32 %v439, %v479
      %v489 = vsub.f32 %v443, %v482
      %v490 = vsub.f32 %v445, %v482
      %v491 = vmul.f32 %v483, 1.442695
      %v492 = vpow.pop %v491
      %v493 = vmul.f32 %v484, 1.442695
      %v494 = vpow.pop %v493
      %v495 = vmul.f32 %v485, 1.442695
      %v496 = vpow.pop %v495
      %v497 = vmul.f32 %v486, 1.442695
      %v498 = vpow.pop %v497
      %v499 = vmul.f32 %v487, 1.442695
      %v500 = vpow.pop %v499
      %v501 = vmul.f32 %v488, 1.442695
      %v502 = vpow.pop %v501
      %v503 = vmul.f32 %v489, 1.442695
      %v504 = vpow.pop %v503
      %v505 = vmul.f32 %v490, 1.442695
      %v506 = vpow.pop %v505
      %v507 = vadd.f32 %v492, %v494
      %508 = vadd.xlane.f32.xlu0 %v507
      %v509 = vpop.xlane.xlu0 %508
      %v510 = vadd.f32 %v496, %v498
      %511 = vadd.xlane.f32.xlu0 %v510
      %v512 = vpop.xlane.xlu0 %511
      %v513 = vadd.f32 %v500, %v502
      %514 = vadd.xlane.f32.xlu0 %v513
      %v515 = vpop.xlane.xlu0 %514
      %v516 = vadd.f32 %v504, %v506
      %517 = vadd.xlane.f32.xlu0 %v516
      %v518 = vpop.xlane.xlu0 %517
      %v519 = vrcp.pop %v509
      %v520 = vmul.f32 %v492, %v519
      %v521 = vmul.f32 %v494, %v519
      %v522 = vrcp.pop %v512
      %v523 = vmul.f32 %v496, %v522
      %v524 = vmul.f32 %v498, %v522
      %v525 = vrcp.pop %v515
      %v526 = vmul.f32 %v500, %v525
      %v527 = vmul.f32 %v502, %v525
      %v528 = vrcp.pop %v518
      %v529 = vmul.f32 %v504, %v528
      %v530 = vmul.f32 %v506, %v528
      %531 = vmatprep.subr.mxu0 %v521
      %532 = vmatpush1.xpose.msra.mxu0 %v520
      %533 = vmatprep.subr.mxu0 %v524
      %534 = vmatpush1.xpose.msra.mxu0 %v523
      %535 = vmatprep.subr.mxu0 0.0
      %536 = vmatpush1.xpose.msra.mxu0 0.0
      %537 = vmatprep.subr.mxu0 0.0
      %538 = vmatpush1.xpose.msra.mxu0 0.0
      %539 = vmatprep.subr.mxu0 0.0
      %540 = vmatpush1.xpose.msra.mxu0 0.0
      %541 = vmatprep.subr.mxu0 0.0
      %542 = vmatpush1.xpose.msra.mxu0 0.0
      %543 = vmatprep.subr.mxu0 0.0
      %544 = vmatpush1.xpose.msra.mxu0 0.0
      %545 = vmatprep.subr.mxu0 0.0
      %546 = vmatpush1.xpose.msra.mxu0 0.0
      %547 = vmatprep.subr.mxu0 0.0
      %548 = vmatpush1.xpose.msra.mxu0 0.0
      %549 = vmatprep.subr.mxu0 0.0
      %550 = vmatpush1.xpose.msra.mxu0 0.0
      %551 = vmatprep.subr.mxu0 0.0
      %552 = vmatpush1.xpose.msra.mxu0 0.0
      %553 = vmatprep.subr.mxu0 0.0
      %554 = vmatpush1.xpose.msra.mxu0 0.0
      %555 = vmatprep.subr.mxu0 0.0
      %556 = vmatpush1.xpose.msra.mxu0 0.0
      %557 = vmatprep.subr.mxu0 0.0
      %558 = vmatpush1.xpose.msra.mxu0 0.0
      %559 = vmatprep.subr.mxu0 0.0
      %560 = vmatpush1.xpose.msra.mxu0 0.0
      %561 = vmatprep.subr.mxu0 0.0
      %562 = vmatpush1.xpose.msra.mxu0 0.0
      %563 = vmatprep.subr.mxu0 0.0
      %564 = vmatpush1.xpose.msra.mxu0 0.0
      %565 = vmatprep.subr.mxu0 0.0
      %566 = vmatpush1.xpose.msra.mxu0 0.0
      %567 = vmatprep.subr.mxu0 0.0
      %568 = vmatpush1.xpose.msra.mxu0 0.0
      %569 = vmatprep.subr.mxu0 0.0
      %570 = vmatpush1.xpose.msra.mxu0 0.0
      %571 = vmatprep.subr.mxu0 0.0
      %572 = vmatpush1.xpose.msra.mxu0 0.0
      %573 = vmatprep.subr.mxu0 0.0
      %574 = vmatpush1.xpose.msra.mxu0 0.0
      %575 = vmatprep.subr.mxu0 0.0
      %576 = vmatpush1.xpose.msra.mxu0 0.0
      %577 = vmatprep.subr.mxu0 0.0
      %578 = vmatpush1.xpose.msra.mxu0 0.0
      %579 = vmatprep.subr.mxu0 0.0
      %580 = vmatpush1.xpose.msra.mxu0 0.0
      %581 = vmatprep.subr.mxu0 0.0
      %582 = vmatpush1.xpose.msra.mxu0 0.0
      %583 = vmatprep.subr.mxu0 0.0
      %584 = vmatpush1.xpose.msra.mxu0 0.0
      %585 = vmatprep.subr.mxu0 0.0
      %586 = vmatpush1.xpose.msra.mxu0 0.0
      %587 = vmatprep.subr.mxu0 0.0
      %588 = vmatpush1.xpose.msra.mxu0 0.0
      %589 = vmatprep.subr.mxu0 0.0
      %590 = vmatpush1.xpose.msra.mxu0 0.0
      %591 = vmatprep.subr.mxu0 0.0
      %592 = vmatpush1.xpose.msra.mxu0 0.0
      %593 = vmatprep.subr.mxu0 0.0
      %594 = vmatpush1.xpose.msra.mxu0 0.0
      %595 = vmatprep.mubr.f32.mxu0 %v451
      %596 = vmatmul.mubr.f32.gmra.mrb[0].mxu0 %v449
      %v597 = vpop.f32.mrb[0].mxu0
      %v598 = vadd.f32 0.0, %v597
      %v599 = vpop.f32.mrb[0].mxu0
      %600 = vmatprep.mubr.f32.mxu0 %v457
      %601 = vmatmul.mubr.f32.gmra.mrb[0].mxu0 %v455
      %v602 = vpop.f32.mrb[0].mxu0
      %v603 = vadd.f32 0.0, %v602
      %v604 = vpop.f32.mrb[0].mxu0
      %605 = vdwg.mxu0
      %606 = vmatprep.subr.mxu0 %v527
      %607 = vmatpush1.xpose.msra.mxu0 %v526
      %608 = vmatprep.subr.mxu0 %v530
      %609 = vmatpush1.xpose.msra.mxu0 %v529
      %610 = vmatprep.subr.mxu0 0.0
      %611 = vmatpush1.xpose.msra.mxu0 0.0
      %612 = vmatprep.subr.mxu0 0.0
      %613 = vmatpush1.xpose.msra.mxu0 0.0
      %614 = vmatprep.subr.mxu0 0.0
      %615 = vmatpush1.xpose.msra.mxu0 0.0
      %616 = vmatprep.subr.mxu0 0.0
      %617 = vmatpush1.xpose.msra.mxu0 0.0
      %618 = vmatprep.subr.mxu0 0.0
      %619 = vmatpush1.xpose.msra.mxu0 0.0
      %620 = vmatprep.subr.mxu0 0.0
      %621 = vmatpush1.xpose.msra.mxu0 0.0
      %622 = vmatprep.subr.mxu0 0.0
      %623 = vmatpush1.xpose.msra.mxu0 0.0
      %624 = vmatprep.subr.mxu0 0.0
      %625 = vmatpush1.xpose.msra.mxu0 0.0
      %626 = vmatprep.subr.mxu0 0.0
      %627 = vmatpush1.xpose.msra.mxu0 0.0
      %628 = vmatprep.subr.mxu0 0.0
      %629 = vmatpush1.xpose.msra.mxu0 0.0
      %630 = vmatprep.subr.mxu0 0.0
      %631 = vmatpush1.xpose.msra.mxu0 0.0
      %632 = vmatprep.subr.mxu0 0.0
      %633 = vmatpush1.xpose.msra.mxu0 0.0
      %634 = vmatprep.subr.mxu0 0.0
      %635 = vmatpush1.xpose.msra.mxu0 0.0
      %636 = vmatprep.subr.mxu0 0.0
      %637 = vmatpush1.xpose.msra.mxu0 0.0
      %638 = vmatprep.subr.mxu0 0.0
      %639 = vmatpush1.xpose.msra.mxu0 0.0
      %640 = vmatprep.subr.mxu0 0.0
      %641 = vmatpush1.xpose.msra.mxu0 0.0
      %642 = vmatprep.subr.mxu0 0.0
      %643 = vmatpush1.xpose.msra.mxu0 0.0
      %644 = vmatprep.subr.mxu0 0.0
      %645 = vmatpush1.xpose.msra.mxu0 0.0
      %646 = vmatprep.subr.mxu0 0.0
      %647 = vmatpush1.xpose.msra.mxu0 0.0
      %648 = vmatprep.subr.mxu0 0.0
      %649 = vmatpush1.xpose.msra.mxu0 0.0
      %650 = vmatprep.subr.mxu0 0.0
      %651 = vmatpush1.xpose.msra.mxu0 0.0
      %652 = vmatprep.subr.mxu0 0.0
      %653 = vmatpush1.xpose.msra.mxu0 0.0
      %654 = vmatprep.subr.mxu0 0.0
      %655 = vmatpush1.xpose.msra.mxu0 0.0
      %656 = vmatprep.subr.mxu0 0.0
      %657 = vmatpush1.xpose.msra.mxu0 0.0
      %658 = vmatprep.subr.mxu0 0.0
      %659 = vmatpush1.xpose.msra.mxu0 0.0
      %660 = vmatprep.subr.mxu0 0.0
      %661 = vmatpush1.xpose.msra.mxu0 0.0
      %662 = vmatprep.subr.mxu0 0.0
      %663 = vmatpush1.xpose.msra.mxu0 0.0
      %664 = vmatprep.subr.mxu0 0.0
      %665 = vmatpush1.xpose.msra.mxu0 0.0
      %666 = vmatprep.subr.mxu0 0.0
      %667 = vmatpush1.xpose.msra.mxu0 0.0
      %668 = vmatprep.subr.mxu0 0.0
      %669 = vmatpush1.xpose.msra.mxu0 0.0
      %670 = vmatprep.mubr.f32.mxu0 %v463
      %671 = vmatmul.mubr.f32.gmra.mrb[0].mxu0 %v461
      %v672 = vpop.f32.mrb[0].mxu0
      %v673 = vadd.f32 0.0, %v672
      %v674 = vpop.f32.mrb[0].mxu0
      %675 = vmatprep.mubr.f32.mxu0 %v469
      %676 = vmatmul.mubr.f32.gmra.mrb[0].mxu0 %v467
      %v677 = vpop.f32.mrb[0].mxu0
      %v678 = vadd.f32 0.0, %v677
      %v679 = vpop.f32.mrb[0].mxu0
      %680 = vdwg.mxu0
      %vm681 = vcmask 130048
      %v683 = vsel %vm681, %v598, 0
      %v686 = vsel %vm681, %v603, 0
      %688 = vmatprep.subr.mxu0 %v403
      %689 = vmatpush1.msra.mxu0 %v401
      %690 = vmatprep.subr.mxu0 %v409
      %691 = vmatpush1.msra.mxu0 %v407
      %692 = vmatprep.subr.mxu0 0.0
      %693 = vmatpush1.msra.mxu0 0.0
      %694 = vmatprep.subr.mxu0 0.0
      %695 = vmatpush1.msra.mxu0 0.0
      %696 = vmatprep.subr.mxu0 0.0
      %697 = vmatpush1.msra.mxu0 0.0
      %698 = vmatprep.subr.mxu0 0.0
      %699 = vmatpush1.msra.mxu0 0.0
      %700 = vmatprep.subr.mxu0 0.0
      %701 = vmatpush1.msra.mxu0 0.0
      %702 = vmatprep.subr.mxu0 0.0
      %703 = vmatpush1.msra.mxu0 0.0
      %704 = vmatprep.subr.mxu0 0.0
      %705 = vmatpush1.msra.mxu0 0.0
      %706 = vmatprep.subr.mxu0 0.0
      %707 = vmatpush1.msra.mxu0 0.0
      %708 = vmatprep.subr.mxu0 0.0
      %709 = vmatpush1.msra.mxu0 0.0
      %710 = vmatprep.subr.mxu0 0.0
      %711 = vmatpush1.msra.mxu0 0.0
      %712 = vmatprep.subr.mxu0 0.0
      %713 = vmatpush1.msra.mxu0 0.0
      %714 = vmatprep.subr.mxu0 0.0
      %715 = vmatpush1.msra.mxu0 0.0
      %716 = vmatprep.subr.mxu0 0.0
      %717 = vmatpush1.msra.mxu0 0.0
      %718 = vmatprep.subr.mxu0 0.0
      %719 = vmatpush1.msra.mxu0 0.0
      %720 = vmatprep.subr.mxu0 0.0
      %721 = vmatpush1.msra.mxu0 0.0
      %722 = vmatprep.subr.mxu0 0.0
      %723 = vmatpush1.msra.mxu0 0.0
      %724 = vmatprep.subr.mxu0 0.0
      %725 = vmatpush1.msra.mxu0 0.0
      %726 = vmatprep.subr.mxu0 0.0
      %727 = vmatpush1.msra.mxu0 0.0
      %728 = vmatprep.subr.mxu0 0.0
      %729 = vmatpush1.msra.mxu0 0.0
      %730 = vmatprep.subr.mxu0 0.0
      %731 = vmatpush1.msra.mxu0 0.0
      %732 = vmatprep.subr.mxu0 0.0
      %733 = vmatpush1.msra.mxu0 0.0
      %734 = vmatprep.subr.mxu0 0.0
      %735 = vmatpush1.msra.mxu0 0.0
      %736 = vmatprep.subr.mxu0 0.0
      %737 = vmatpush1.msra.mxu0 0.0
      %738 = vmatprep.subr.mxu0 0.0
      %739 = vmatpush1.msra.mxu0 0.0
      %740 = vmatprep.subr.mxu0 0.0
      %741 = vmatpush1.msra.mxu0 0.0
      %742 = vmatprep.subr.mxu0 0.0
      %743 = vmatpush1.msra.mxu0 0.0
      %744 = vmatprep.subr.mxu0 0.0
      %745 = vmatpush1.msra.mxu0 0.0
      %746 = vmatprep.subr.mxu0 0.0
      %747 = vmatpush1.msra.mxu0 0.0
      %748 = vmatprep.subr.mxu0 0.0
      %749 = vmatpush1.msra.mxu0 0.0
      %750 = vmatprep.subr.mxu0 0.0
      %751 = vmatpush1.msra.mxu0 0.0
      %752 = vmatprep.mubr.f32.mxu0 0.0
      %753 = vmatmul.mubr.f32.gmra.mrb[0].mxu0 %v683
      %v754 = vpop.f32.mrb[0].mxu0
      %v755 = vadd.f32 0.0, %v754
      %v756 = vpop.f32.mrb[0].mxu0
      %v757 = vadd.f32 0.0, %v756
      %758 = vmatprep.mubr.f32.mxu0 0.0
      %759 = vmatmul.mubr.f32.gmra.mrb[0].mxu0 %v686
      %v760 = vpop.f32.mrb[0].mxu0
      %v761 = vadd.f32 0.0, %v760
      %v762 = vpop.f32.mrb[0].mxu0
      %v763 = vadd.f32 0.0, %v762
      %764 = vdwg.mxu0
      %v766 = vsel %vm681, %v673, 0
      %v769 = vsel %vm681, %v678, 0
      %771 = vmatprep.subr.mxu0 %v415
      %772 = vmatpush1.msra.mxu0 %v413
      %773 = vmatprep.subr.mxu0 %v421
      %774 = vmatpush1.msra.mxu0 %v419
      %775 = vmatprep.subr.mxu0 0.0
      %776 = vmatpush1.msra.mxu0 0.0
      %777 = vmatprep.subr.mxu0 0.0
      %778 = vmatpush1.msra.mxu0 0.0
      %779 = vmatprep.subr.mxu0 0.0
      %780 = vmatpush1.msra.mxu0 0.0
      %781 = vmatprep.subr.mxu0 0.0
      %782 = vmatpush1.msra.mxu0 0.0
      %783 = vmatprep.subr.mxu0 0.0
      %784 = vmatpush1.msra.mxu0 0.0
      %785 = vmatprep.subr.mxu0 0.0
      %786 = vmatpush1.msra.mxu0 0.0
      %787 = vmatprep.subr.mxu0 0.0
      %788 = vmatpush1.msra.mxu0 0.0
      %789 = vmatprep.subr.mxu0 0.0
      %790 = vmatpush1.msra.mxu0 0.0
      %791 = vmatprep.subr.mxu0 0.0
      %792 = vmatpush1.msra.mxu0 0.0
      %793 = vmatprep.subr.mxu0 0.0
      %794 = vmatpush1.msra.mxu0 0.0
      %795 = vmatprep.subr.mxu0 0.0
      %796 = vmatpush1.msra.mxu0 0.0
      %797 = vmatprep.subr.mxu0 0.0
      %798 = vmatpush1.msra.mxu0 0.0
      %799 = vmatprep.subr.mxu0 0.0
      %800 = vmatpush1.msra.mxu0 0.0
      %801 = vmatprep.subr.mxu0 0.0
      %802 = vmatpush1.msra.mxu0 0.0
      %803 = vmatprep.subr.mxu0 0.0
      %804 = vmatpush1.msra.mxu0 0.0
      %805 = vmatprep.subr.mxu0 0.0
      %806 = vmatpush1.msra.mxu0 0.0
      %807 = vmatprep.subr.mxu0 0.0
      %808 = vmatpush1.msra.mxu0 0.0
      %809 = vmatprep.subr.mxu0 0.0
      %810 = vmatpush1.msra.mxu0 0.0
      %811 = vmatprep.subr.mxu0 0.0
      %812 = vmatpush1.msra.mxu0 0.0
      %813 = vmatprep.subr.mxu0 0.0
      %814 = vmatpush1.msra.mxu0 0.0
      %815 = vmatprep.subr.mxu0 0.0
      %816 = vmatpush1.msra.mxu0 0.0
      %817 = vmatprep.subr.mxu0 0.0
      %818 = vmatpush1.msra.mxu0 0.0
      %819 = vmatprep.subr.mxu0 0.0
      %820 = vmatpush1.msra.mxu0 0.0
      %821 = vmatprep.subr.mxu0 0.0
      %822 = vmatpush1.msra.mxu0 0.0
      %823 = vmatprep.subr.mxu0 0.0
      %824 = vmatpush1.msra.mxu0 0.0
      %825 = vmatprep.subr.mxu0 0.0
      %826 = vmatpush1.msra.mxu0 0.0
      %827 = vmatprep.subr.mxu0 0.0
      %828 = vmatpush1.msra.mxu0 0.0
      %829 = vmatprep.subr.mxu0 0.0
      %830 = vmatpush1.msra.mxu0 0.0
      %831 = vmatprep.subr.mxu0 0.0
      %832 = vmatpush1.msra.mxu0 0.0
      %833 = vmatprep.subr.mxu0 0.0
      %834 = vmatpush1.msra.mxu0 0.0
      %835 = vmatprep.mubr.f32.mxu0 0.0
      %836 = vmatmul.mubr.f32.gmra.mrb[0].mxu0 %v766
      %v837 = vpop.f32.mrb[0].mxu0
      %v838 = vadd.f32 0.0, %v837
      %v839 = vpop.f32.mrb[0].mxu0
      %v840 = vadd.f32 0.0, %v839
      %841 = vmatprep.mubr.f32.mxu0 0.0
      %842 = vmatmul.mubr.f32.gmra.mrb[0].mxu0 %v769
      %v843 = vpop.f32.mrb[0].mxu0
      %v844 = vadd.f32 0.0, %v843
      %v845 = vpop.f32.mrb[0].mxu0
      %v846 = vadd.f32 0.0, %v845
      %847 = vdwg.mxu0
      %v848 = vpack.c.bf16 %v761, %v755
      %v849 = vpack.c.bf16 %v763, %v757
      %v850 = vpack.c.bf16 %v844, %v838
      %v851 = vpack.c.bf16 %v846, %v840
      %v856 = vunpack.c.l.b16 %v848
      %v857 = vunpack.c.l.b16 %v849
      %v858 = vunpack.c.h.b16 %v848
      %v859 = vunpack.c.h.b16 %v849
      %v860 = vunpack.c.l.b16 %v850
      %v861 = vunpack.c.l.b16 %v851
      %v862 = vunpack.c.h.b16 %v850
      %v863 = vunpack.c.h.b16 %v851
      %v864 = vpack.c.b16 %v857, %v856
      %v865 = vpack.c.b16 %v859, %v858
      %v866 = vpack.c.b16 %v861, %v860
      %v867 = vpack.c.b16 %v863, %v862
      %872 = vst [vmem:[%s273] sm:$0xff] %v864
      %873 = vst [vmem:[%s273 + $0x8] sm:$0xff] %v865
      %874 = vst [vmem:[%s273 + $0x10] sm:$0xff] %v866
      %875 = vst [vmem:[%s273 + $0x18] sm:$0xff] %v867
      %v876 = vld [vmem:[%s2] sm:$0x1f]
      %v877 = vld [vmem:[%s2 + $0x8] sm:$0x1f]
      %v879 = vsel %vm681, %v876, 0
      %881 = vmatprep.subr.mxu0 %v403
      %882 = vmatpush1.msra.mxu0 %v401
      %883 = vmatprep.subr.mxu0 %v409
      %884 = vmatpush1.msra.mxu0 %v407
      %885 = vmatprep.subr.mxu0 0.0
      %886 = vmatpush1.msra.mxu0 0.0
      %887 = vmatprep.subr.mxu0 0.0
      %888 = vmatpush1.msra.mxu0 0.0
      %889 = vmatprep.subr.mxu0 0.0
      %890 = vmatpush1.msra.mxu0 0.0
      %891 = vmatprep.subr.mxu0 0.0
      %892 = vmatpush1.msra.mxu0 0.0
      %893 = vmatprep.subr.mxu0 0.0
      %894 = vmatpush1.msra.mxu0 0.0
      %895 = vmatprep.subr.mxu0 0.0
      %896 = vmatpush1.msra.mxu0 0.0
      %897 = vmatprep.subr.mxu0 0.0
      %898 = vmatpush1.msra.mxu0 0.0
      %899 = vmatprep.subr.mxu0 0.0
      %900 = vmatpush1.msra.mxu0 0.0
      %901 = vmatprep.subr.mxu0 0.0
      %902 = vmatpush1.msra.mxu0 0.0
      %903 = vmatprep.subr.mxu0 0.0
      %904 = vmatpush1.msra.mxu0 0.0
      %905 = vmatprep.subr.mxu0 0.0
      %906 = vmatpush1.msra.mxu0 0.0
      %907 = vmatprep.subr.mxu0 0.0
      %908 = vmatpush1.msra.mxu0 0.0
      %909 = vmatprep.subr.mxu0 0.0
      %910 = vmatpush1.msra.mxu0 0.0
      %911 = vmatprep.subr.mxu0 0.0
      %912 = vmatpush1.msra.mxu0 0.0
      %913 = vmatprep.subr.mxu0 0.0
      %914 = vmatpush1.msra.mxu0 0.0
      %915 = vmatprep.subr.mxu0 0.0
      %916 = vmatpush1.msra.mxu0 0.0
      %917 = vmatprep.subr.mxu0 0.0
      %918 = vmatpush1.msra.mxu0 0.0
      %919 = vmatprep.subr.mxu0 0.0
      %920 = vmatpush1.msra.mxu0 0.0
      %921 = vmatprep.subr.mxu0 0.0
      %922 = vmatpush1.msra.mxu0 0.0
      %923 = vmatprep.subr.mxu0 0.0
      %924 = vmatpush1.msra.mxu0 0.0
      %925 = vmatprep.subr.mxu0 0.0
      %926 = vmatpush1.msra.mxu0 0.0
      %927 = vmatprep.subr.mxu0 0.0
      %928 = vmatpush1.msra.mxu0 0.0
      %929 = vmatprep.subr.mxu0 0.0
      %930 = vmatpush1.msra.mxu0 0.0
      %931 = vmatprep.subr.mxu0 0.0
      %932 = vmatpush1.msra.mxu0 0.0
      %933 = vmatprep.subr.mxu0 0.0
      %934 = vmatpush1.msra.mxu0 0.0
      %935 = vmatprep.subr.mxu0 0.0
      %936 = vmatpush1.msra.mxu0 0.0
      %937 = vmatprep.subr.mxu0 0.0
      %938 = vmatpush1.msra.mxu0 0.0
      %939 = vmatprep.subr.mxu0 0.0
      %940 = vmatpush1.msra.mxu0 0.0
      %941 = vmatprep.subr.mxu0 0.0
      %942 = vmatpush1.msra.mxu0 0.0
      %943 = vmatprep.subr.mxu0 0.0
      %944 = vmatpush1.msra.mxu0 0.0
      %945 = vmatprep.mubr.f32.mxu0 0.0
      %946 = vmatmul.mubr.f32.gmra.mrb[0].mxu0 %v879
      %v947 = vpop.f32.mrb[0].mxu0
      %v948 = vadd.f32 0.0, %v947
      %v949 = vpop.f32.mrb[0].mxu0
      %v950 = vadd.f32 0.0, %v949
      %951 = vdwg.mxu0
      %v953 = vsel %vm681, %v877, 0
      %955 = vmatprep.subr.mxu0 %v415
      %956 = vmatpush1.msra.mxu0 %v413
      %957 = vmatprep.subr.mxu0 %v421
      %958 = vmatpush1.msra.mxu0 %v419
      %959 = vmatprep.subr.mxu0 0.0
      %960 = vmatpush1.msra.mxu0 0.0
      %961 = vmatprep.subr.mxu0 0.0
      %962 = vmatpush1.msra.mxu0 0.0
      %963 = vmatprep.subr.mxu0 0.0
      %964 = vmatpush1.msra.mxu0 0.0
      %965 = vmatprep.subr.mxu0 0.0
      %966 = vmatpush1.msra.mxu0 0.0
      %967 = vmatprep.subr.mxu0 0.0
      %968 = vmatpush1.msra.mxu0 0.0
      %969 = vmatprep.subr.mxu0 0.0
      %970 = vmatpush1.msra.mxu0 0.0
      %971 = vmatprep.subr.mxu0 0.0
      %972 = vmatpush1.msra.mxu0 0.0
      %973 = vmatprep.subr.mxu0 0.0
      %974 = vmatpush1.msra.mxu0 0.0
      %975 = vmatprep.subr.mxu0 0.0
      %976 = vmatpush1.msra.mxu0 0.0
      %977 = vmatprep.subr.mxu0 0.0
      %978 = vmatpush1.msra.mxu0 0.0
      %979 = vmatprep.subr.mxu0 0.0
      %980 = vmatpush1.msra.mxu0 0.0
      %981 = vmatprep.subr.mxu0 0.0
      %982 = vmatpush1.msra.mxu0 0.0
      %983 = vmatprep.subr.mxu0 0.0
      %984 = vmatpush1.msra.mxu0 0.0
      %985 = vmatprep.subr.mxu0 0.0
      %986 = vmatpush1.msra.mxu0 0.0
      %987 = vmatprep.subr.mxu0 0.0
      %988 = vmatpush1.msra.mxu0 0.0
      %989 = vmatprep.subr.mxu0 0.0
      %990 = vmatpush1.msra.mxu0 0.0
      %991 = vmatprep.subr.mxu0 0.0
      %992 = vmatpush1.msra.mxu0 0.0
      %993 = vmatprep.subr.mxu0 0.0
      %994 = vmatpush1.msra.mxu0 0.0
      %995 = vmatprep.subr.mxu0 0.0
      %996 = vmatpush1.msra.mxu0 0.0
      %997 = vmatprep.subr.mxu0 0.0
      %998 = vmatpush1.msra.mxu0 0.0
      %999 = vmatprep.subr.mxu0 0.0
      %1000 = vmatpush1.msra.mxu0 0.0
      %1001 = vmatprep.subr.mxu0 0.0
      %1002 = vmatpush1.msra.mxu0 0.0
      %1003 = vmatprep.subr.mxu0 0.0
      %1004 = vmatpush1.msra.mxu0 0.0
      %1005 = vmatprep.subr.mxu0 0.0
      %1006 = vmatpush1.msra.mxu0 0.0
      %1007 = vmatprep.subr.mxu0 0.0
      %1008 = vmatpush1.msra.mxu0 0.0
      %1009 = vmatprep.subr.mxu0 0.0
      %1010 = vmatpush1.msra.mxu0 0.0
      %1011 = vmatprep.subr.mxu0 0.0
      %1012 = vmatpush1.msra.mxu0 0.0
      %1013 = vmatprep.subr.mxu0 0.0
      %1014 = vmatpush1.msra.mxu0 0.0
      %1015 = vmatprep.subr.mxu0 0.0
      %1016 = vmatpush1.msra.mxu0 0.0
      %1017 = vmatprep.subr.mxu0 0.0
      %1018 = vmatpush1.msra.mxu0 0.0
      %1019 = vmatprep.mubr.f32.mxu0 0.0
      %1020 = vmatmul.mubr.f32.gmra.mrb[0].mxu0 %v953
      %v1021 = vpop.f32.mrb[0].mxu0
      %v1022 = vadd.f32 0.0, %v1021
      %v1023 = vpop.f32.mrb[0].mxu0
      %v1024 = vadd.f32 0.0, %v1023
      %1025 = vdwg.mxu0
      %v1026 = vld [vmem:[%s3] sm:$0x1f]
      %v1027 = vld [vmem:[%s3 + $0x8] sm:$0x1f]
      %v1028 = vmul.f32 %v948, %v1026
      %v1029 = vmul.f32 %v950, %v1027
      %v1030 = vmul.f32 %v1022, %v1026
      %v1031 = vmul.f32 %v1024, %v1027
      %1032 = vrot.lane.b32.xlu0 %v449, 32
      %v1033 = vpop.permute.xlu0 %1032
      %1034 = vrot.lane.b32.xlu0 %v455, 32
      %v1035 = vpop.permute.xlu0 %1034
      %1036 = vrot.lane.b32.xlu0 %v461, 32
      %v1037 = vpop.permute.xlu0 %1036
      %1038 = vrot.lane.b32.xlu0 %v467, 32
      %v1039 = vpop.permute.xlu0 %1038
      %1040 = vrot.lane.b32.xlu0 %v451, 32
      %v1041 = vpop.permute.xlu0 %1040
      %1042 = vrot.lane.b32.xlu0 %v457, 32
      %v1043 = vpop.permute.xlu0 %1042
      %1044 = vrot.lane.b32.xlu0 %v463, 32
      %v1045 = vpop.permute.xlu0 %1044
      %1046 = vrot.lane.b32.xlu0 %v469, 32
      %v1047 = vpop.permute.xlu0 %1046
      %v1048 = vlaneseq
      %v1049 = vand.u32 %v1048, 127
      %vm1050 = vcmp.lt.s32.totalorder %v1049, 32
      %v1051 = vsel %vm1050, %v1033, %v1041
      %v1052 = vsel %vm1050, %v1035, %v1043
      %v1053 = vsel %vm1050, %v1037, %v1045
      %v1054 = vsel %vm1050, %v1039, %v1047
      %v1055 = vsel %vm1050, %v1041, %v1033
      %v1056 = vsel %vm1050, %v1043, %v1035
      %v1057 = vsel %vm1050, %v1045, %v1037
      %v1058 = vsel %vm1050, %v1047, %v1039
      %v1059 = vlaneseq
      %v1060 = vshrl.u32 %v1059, 7
      %v1061 = vsub.s32 0, %v1060
      %v1062 = vrot.slane %v1028, %v1061
      %v1063 = vlaneseq
      %v1064 = vshrl.u32 %v1063, 7
      %v1065 = vsub.s32 0, %v1064
      %v1066 = vrot.slane %v1029, %v1065
      %v1067 = vlaneseq
      %v1068 = vshrl.u32 %v1067, 7
      %v1069 = vsub.s32 0, %v1068
      %v1070 = vrot.slane %v1030, %v1069
      %v1071 = vlaneseq
      %v1072 = vshrl.u32 %v1071, 7
      %v1073 = vsub.s32 0, %v1072
      %v1074 = vrot.slane %v1031, %v1073
      %v1075 = vmul.f32 %v1062, %v1055
      %v1076 = vmul.f32 %v1066, %v1051
      %v1077 = vmul.f32 %v1062, %v1056
      %v1078 = vmul.f32 %v1066, %v1052
      %v1079 = vmul.f32 %v1070, %v1057
      %v1080 = vmul.f32 %v1074, %v1053
      %v1081 = vmul.f32 %v1070, %v1058
      %v1082 = vmul.f32 %v1074, %v1054
      %v1083 = vadd.f32 %v1075, 0.0
      %v1084 = vadd.f32 %v1076, 0.0
      %v1085 = vadd.f32 %v1077, 0.0
      %v1086 = vadd.f32 %v1078, 0.0
      %v1087 = vadd.f32 %v1079, 0.0
      %v1088 = vadd.f32 %v1080, 0.0
      %v1089 = vadd.f32 %v1081, 0.0
      %v1090 = vadd.f32 %v1082, 0.0
      %1091 = vrot.lane.b32.xlu0 %v449, 16
      %v1092 = vpop.permute.xlu0 %1091
      %1093 = vrot.lane.b32.xlu0 %v455, 16
      %v1094 = vpop.permute.xlu0 %1093
      %1095 = vrot.lane.b32.xlu0 %v461, 16
      %v1096 = vpop.permute.xlu0 %1095
      %1097 = vrot.lane.b32.xlu0 %v467, 16
      %v1098 = vpop.permute.xlu0 %1097
      %1099 = vrot.lane.b32.xlu0 %v451, 16
      %v1100 = vpop.permute.xlu0 %1099
      %1101 = vrot.lane.b32.xlu0 %v457, 16
      %v1102 = vpop.permute.xlu0 %1101
      %1103 = vrot.lane.b32.xlu0 %v463, 16
      %v1104 = vpop.permute.xlu0 %1103
      %1105 = vrot.lane.b32.xlu0 %v469, 16
      %v1106 = vpop.permute.xlu0 %1105
      %vm1107 = vcmp.lt.s32.totalorder %v1049, 16
      %v1108 = vsel %vm1107, %v1092, %v1100
      %v1109 = vsel %vm1107, %v1094, %v1102
      %v1110 = vsel %vm1107, %v1096, %v1104
      %v1111 = vsel %vm1107, %v1098, %v1106
      %v1112 = vsel %vm1107, %v1100, %v1092
      %v1113 = vsel %vm1107, %v1102, %v1094
      %v1114 = vsel %vm1107, %v1104, %v1096
      %v1115 = vsel %vm1107, %v1106, %v1098
      %v1116 = vlaneseq
      %v1117 = vshrl.u32 %v1116, 7
      %v1118 = vsub.s32 1, %v1117
      %v1119 = vrot.slane %v1028, %v1118
      %v1120 = vlaneseq
      %v1121 = vshrl.u32 %v1120, 7
      %v1122 = vsub.s32 1, %v1121
      %v1123 = vrot.slane %v1029, %v1122
      %v1124 = vlaneseq
      %v1125 = vshrl.u32 %v1124, 7
      %v1126 = vsub.s32 1, %v1125
      %v1127 = vrot.slane %v1030, %v1126
      %v1128 = vlaneseq
      %v1129 = vshrl.u32 %v1128, 7
      %v1130 = vsub.s32 1, %v1129
      %v1131 = vrot.slane %v1031, %v1130
      %v1132 = vmul.f32 %v1119, %v1112
      %v1133 = vmul.f32 %v1123, %v1108
      %v1134 = vmul.f32 %v1119, %v1113
      %v1135 = vmul.f32 %v1123, %v1109
      %v1136 = vmul.f32 %v1127, %v1114
      %v1137 = vmul.f32 %v1131, %v1110
      %v1138 = vmul.f32 %v1127, %v1115
      %v1139 = vmul.f32 %v1131, %v1111
      %v1140 = vadd.f32 %v1083, %v1132
      %v1141 = vadd.f32 %v1084, %v1133
      %v1142 = vadd.f32 %v1085, %v1134
      %v1143 = vadd.f32 %v1086, %v1135
      %v1144 = vadd.f32 %v1087, %v1136
      %v1145 = vadd.f32 %v1088, %v1137
      %v1146 = vadd.f32 %v1089, %v1138
      %v1147 = vadd.f32 %v1090, %v1139
      %v1148 = vlaneseq
      %v1149 = vshrl.u32 %v1148, 7
      %v1150 = vsub.s32 2, %v1149
      %v1151 = vrot.slane %v1028, %v1150
      %v1152 = vlaneseq
      %v1153 = vshrl.u32 %v1152, 7
      %v1154 = vsub.s32 2, %v1153
      %v1155 = vrot.slane %v1029, %v1154
      %v1156 = vlaneseq
      %v1157 = vshrl.u32 %v1156, 7
      %v1158 = vsub.s32 2, %v1157
      %v1159 = vrot.slane %v1030, %v1158
      %v1160 = vlaneseq
      %v1161 = vshrl.u32 %v1160, 7
      %v1162 = vsub.s32 2, %v1161
      %v1163 = vrot.slane %v1031, %v1162
      %v1164 = vmul.f32 %v1151, %v449
      %v1165 = vmul.f32 %v1155, %v451
      %v1166 = vmul.f32 %v1151, %v455
      %v1167 = vmul.f32 %v1155, %v457
      %v1168 = vmul.f32 %v1159, %v461
      %v1169 = vmul.f32 %v1163, %v463
      %v1170 = vmul.f32 %v1159, %v467
      %v1171 = vmul.f32 %v1163, %v469
      %v1172 = vadd.f32 %v1140, %v1164
      %v1173 = vadd.f32 %v1141, %v1165
      %v1174 = vadd.f32 %v1142, %v1166
      %v1175 = vadd.f32 %v1143, %v1167
      %v1176 = vadd.f32 %v1144, %v1168
      %v1177 = vadd.f32 %v1145, %v1169
      %v1178 = vadd.f32 %v1146, %v1170
      %v1179 = vadd.f32 %v1147, %v1171
      %1180 = vrot.lane.b32.xlu0 %v449, 112
      %v1181 = vpop.permute.xlu0 %1180
      %1182 = vrot.lane.b32.xlu0 %v455, 112
      %v1183 = vpop.permute.xlu0 %1182
      %1184 = vrot.lane.b32.xlu0 %v461, 112
      %v1185 = vpop.permute.xlu0 %1184
      %1186 = vrot.lane.b32.xlu0 %v467, 112
      %v1187 = vpop.permute.xlu0 %1186
      %1188 = vrot.lane.b32.xlu0 %v451, 112
      %v1189 = vpop.permute.xlu0 %1188
      %1190 = vrot.lane.b32.xlu0 %v457, 112
      %v1191 = vpop.permute.xlu0 %1190
      %1192 = vrot.lane.b32.xlu0 %v463, 112
      %v1193 = vpop.permute.xlu0 %1192
      %1194 = vrot.lane.b32.xlu0 %v469, 112
      %v1195 = vpop.permute.xlu0 %1194
      %vm1196 = vcmp.lt.s32.totalorder %v1049, 112
      %v1197 = vsel %vm1196, %v1181, %v1189
      %v1198 = vsel %vm1196, %v1183, %v1191
      %v1199 = vsel %vm1196, %v1185, %v1193
      %v1200 = vsel %vm1196, %v1187, %v1195
      %v1201 = vsel %vm1196, %v1189, %v1181
      %v1202 = vsel %vm1196, %v1191, %v1183
      %v1203 = vsel %vm1196, %v1193, %v1185
      %v1204 = vsel %vm1196, %v1195, %v1187
      %v1205 = vlaneseq
      %v1206 = vshrl.u32 %v1205, 7
      %v1207 = vsub.s32 3, %v1206
      %v1208 = vrot.slane %v1028, %v1207
      %v1209 = vlaneseq
      %v1210 = vshrl.u32 %v1209, 7
      %v1211 = vsub.s32 3, %v1210
      %v1212 = vrot.slane %v1029, %v1211
      %v1213 = vlaneseq
      %v1214 = vshrl.u32 %v1213, 7
      %v1215 = vsub.s32 3, %v1214
      %v1216 = vrot.slane %v1030, %v1215
      %v1217 = vlaneseq
      %v1218 = vshrl.u32 %v1217, 7
      %v1219 = vsub.s32 3, %v1218
      %v1220 = vrot.slane %v1031, %v1219
      %v1221 = vmul.f32 %v1208, %v1197
      %v1222 = vmul.f32 %v1212, %v1201
      %v1223 = vmul.f32 %v1208, %v1198
      %v1224 = vmul.f32 %v1212, %v1202
      %v1225 = vmul.f32 %v1216, %v1199
      %v1226 = vmul.f32 %v1220, %v1203
      %v1227 = vmul.f32 %v1216, %v1200
      %v1228 = vmul.f32 %v1220, %v1204
      %v1229 = vadd.f32 %v1172, %v1221
      %v1230 = vadd.f32 %v1173, %v1222
      %v1231 = vadd.f32 %v1174, %v1223
      %v1232 = vadd.f32 %v1175, %v1224
      %v1233 = vadd.f32 %v1176, %v1225
      %v1234 = vadd.f32 %v1177, %v1226
      %v1235 = vadd.f32 %v1178, %v1227
      %v1236 = vadd.f32 %v1179, %v1228
      %1237 = vrot.lane.b32.xlu0 %v449, 96
      %v1238 = vpop.permute.xlu0 %1237
      %1239 = vrot.lane.b32.xlu0 %v455, 96
      %v1240 = vpop.permute.xlu0 %1239
      %1241 = vrot.lane.b32.xlu0 %v461, 96
      %v1242 = vpop.permute.xlu0 %1241
      %1243 = vrot.lane.b32.xlu0 %v467, 96
      %v1244 = vpop.permute.xlu0 %1243
      %1245 = vrot.lane.b32.xlu0 %v451, 96
      %v1246 = vpop.permute.xlu0 %1245
      %1247 = vrot.lane.b32.xlu0 %v457, 96
      %v1248 = vpop.permute.xlu0 %1247
      %1249 = vrot.lane.b32.xlu0 %v463, 96
      %v1250 = vpop.permute.xlu0 %1249
      %1251 = vrot.lane.b32.xlu0 %v469, 96
      %v1252 = vpop.permute.xlu0 %1251
      %vm1253 = vcmp.lt.s32.totalorder %v1049, 96
      %v1254 = vsel %vm1253, %v1238, %v1246
      %v1255 = vsel %vm1253, %v1240, %v1248
      %v1256 = vsel %vm1253, %v1242, %v1250
      %v1257 = vsel %vm1253, %v1244, %v1252
      %v1258 = vsel %vm1253, %v1246, %v1238
      %v1259 = vsel %vm1253, %v1248, %v1240
      %v1260 = vsel %vm1253, %v1250, %v1242
      %v1261 = vsel %vm1253, %v1252, %v1244
      %v1262 = vlaneseq
      %v1263 = vshrl.u32 %v1262, 7
      %v1264 = vsub.s32 4, %v1263
      %v1265 = vrot.slane %v1028, %v1264
      %v1266 = vlaneseq
      %v1267 = vshrl.u32 %v1266, 7
      %v1268 = vsub.s32 4, %v1267
      %v1269 = vrot.slane %v1029, %v1268
      %v1270 = vlaneseq
      %v1271 = vshrl.u32 %v1270, 7
      %v1272 = vsub.s32 4, %v1271
      %v1273 = vrot.slane %v1030, %v1272
      %v1274 = vlaneseq
      %v1275 = vshrl.u32 %v1274, 7
      %v1276 = vsub.s32 4, %v1275
      %v1277 = vrot.slane %v1031, %v1276
      %v1278 = vmul.f32 %v1265, %v1254
      %v1279 = vmul.f32 %v1269, %v1258
      %v1280 = vmul.f32 %v1265, %v1255
      %v1281 = vmul.f32 %v1269, %v1259
      %v1282 = vmul.f32 %v1273, %v1256
      %v1283 = vmul.f32 %v1277, %v1260
      %v1284 = vmul.f32 %v1273, %v1257
      %v1285 = vmul.f32 %v1277, %v1261
      %v1286 = vadd.f32 %v1229, %v1278
      %v1287 = vadd.f32 %v1230, %v1279
      %v1288 = vadd.f32 %v1231, %v1280
      %v1289 = vadd.f32 %v1232, %v1281
      %v1290 = vadd.f32 %v1233, %v1282
      %v1291 = vadd.f32 %v1234, %v1283
      %v1292 = vadd.f32 %v1235, %v1284
      %v1293 = vadd.f32 %v1236, %v1285
      %v1294 = vadd.f32 %v1286, %v1290
      %v1295 = vadd.f32 %v1287, %v1291
      %v1296 = vadd.f32 %v1288, %v1292
      %v1297 = vadd.f32 %v1289, %v1293
      %v1298 = vmul.f32 %v1286, %v1286
      %v1299 = vmul.f32 %v1287, %v1287
      %v1300 = vmul.f32 %v1288, %v1288
      %v1301 = vmul.f32 %v1289, %v1289
      %v1302 = vmul.f32 %v1290, %v1290
      %v1303 = vmul.f32 %v1291, %v1291
      %v1304 = vmul.f32 %v1292, %v1292
      %v1305 = vmul.f32 %v1293, %v1293
      %v1306 = vadd.f32 %v1298, %v1302
      %v1307 = vadd.f32 %v1299, %v1303
      %v1308 = vadd.f32 %v1300, %v1304
      %v1309 = vadd.f32 %v1301, %v1305
      %v1310 = vadd.f32 %v1294, %v1295
      %1311 = vadd.xlane.f32.xlu0 %v1310
      %v1312 = vpop.xlane.xlu0 %1311
      %v1313 = vadd.f32 %v1296, %v1297
      %1314 = vadd.xlane.f32.xlu0 %v1313
      %v1315 = vpop.xlane.xlu0 %1314
      %vm1316 = vcmask 7168
      %1317 = vst.msk [vmem:[%s281] sm:$0xff] %vm1316, %v1312
      %1318 = vst.msk [vmem:[%s281 + $0x8] sm:$0xff] %vm1316, %v1315
      %v1319 = vadd.f32 %v1306, %v1307
      %1320 = vadd.xlane.f32.xlu0 %v1319
      %v1321 = vpop.xlane.xlu0 %1320
      %v1322 = vadd.f32 %v1308, %v1309
      %1323 = vadd.xlane.f32.xlu0 %v1322
      %v1324 = vpop.xlane.xlu0 %1323
      %vm1325 = vcmask 15368
      %1326 = vst.msk [vmem:[%s281] sm:$0xff] %vm1325, %v1321
      %1327 = vst.msk [vmem:[%s281 + $0x8] sm:$0xff] %vm1325, %v1324
      %s1328 = sadd.s32 %s21, %s22
      %s1329 = smul.u32 2, %s1328
      %p1330 = scmp.lt.s32.totalorder %s1329, 3
      %s1331 = scalar_select %p1330, %s1329, 3
      %s1332 = smul.addr %s1331, 4
      %s1333 = smul.addr %s1332, 4
      %s1334 = scalar_lea.vmem %s4, %s1333
      %s1335 = sadd.s32 %s21, %s22
      %p1336 = scmp.lt.s32.totalorder %s1335, 1
      %s1337 = scalar_select %p1336, %s1335, 1
      %s1338 = smul.addr %s1337, 2
      %s1339 = smul.addr %s1338, 8
      %s1340 = scalar_lea.vmem %s5, %s1339
      // Predicated region
      $region37: #{gsa_forward_pallas.2} parent=35 // pred_check
        %p1341 = pneg %p143
      $region38: #{gsa_forward_pallas.2} parent=35 // pred_check_branch
        %1343 = sbr.rel (%p1341) target = $region40
      $region39: #{gsa_forward_pallas.2} parent=35 // pred_region
        %s1344 = sadd.s32 %s21, %s22
        %s1345 = smul.u32 2, %s1344
      $region40: #{gsa_forward_pallas.2} parent=35 // pred_fallthru
        _
      // Predicated region
      $region41: #{gsa_forward_pallas.2} parent=35 // pred_check
        %p1346 = pneg %p171
      $region42: #{gsa_forward_pallas.2} parent=35 // pred_check_branch
        %1348 = sbr.rel (%p1346) target = $region44
      $region43: #{gsa_forward_pallas.2} parent=35 // pred_region
        %s1349 = sadd.s32 %s21, %s22
      $region44: #{gsa_forward_pallas.2} parent=35 // pred_fallthru
        _
    $region36: #{gsa_forward_pallas.2} parent=5 // pred_fallthru
      _
    %p1350 = scmp.le.s32.totalorder 2, %s12
    // Predicated region
    $region45: #{gsa_forward_pallas.2} parent=5 // pred_check
      %p1351 = pneg %p1350
    $region46: #{gsa_forward_pallas.2} parent=5 // pred_check_branch
      %1353 = sbr.rel (%p1351) target = $region48
    $region47: #{gsa_forward_pallas.2} parent=5 // pred_region
      %s1354 = ssub.s32 %s12, 2
      // Predicated region
      $region49: #{gsa_forward_pallas.2} parent=47 // pred_check
        %p1355 = pneg %p149
      $region50: #{gsa_forward_pallas.2} parent=47 // pred_check_branch
        %1357 = sbr.rel (%p1355) target = $region52
      $region51: #{gsa_forward_pallas.2} parent=47 // pred_region
        %s1358 = sadd.s32 %s23, %s24
        %s1359 = smul.u32 2, %s1358
        %p1360 = scmp.lt.s32.totalorder %s1359, 3
        %s1361 = scalar_select %p1360, %s1359, 3
        %s1362 = smul.addr %s1361, 4
        %s1363 = smul.addr %s1362, 4
        %s1364 = scalar_lea.vmem %s4, %s1363
      $region52: #{gsa_forward_pallas.2} parent=47 // pred_fallthru
        _
      // Predicated region
      $region53: #{gsa_forward_pallas.2} parent=47 // pred_check
        %p1365 = pneg %p177
      $region54: #{gsa_forward_pallas.2} parent=47 // pred_check_branch
        %1367 = sbr.rel (%p1365) target = $region56
      $region55: #{gsa_forward_pallas.2} parent=47 // pred_region
        %s1368 = sadd.s32 %s23, %s24
        %p1369 = scmp.lt.s32.totalorder %s1368, 1
        %s1370 = scalar_select %p1369, %s1368, 1
        %s1371 = smul.addr %s1370, 2
        %s1372 = smul.addr %s1371, 8
        %s1373 = scalar_lea.vmem %s5, %s1372
      $region56: #{gsa_forward_pallas.2} parent=47 // pred_fallthru
        _
    $region48: #{gsa_forward_pallas.2} parent=5 // pred_fallthru
      _
  $region6: #{gsa_forward_pallas.2} parent=0 // loop_footer
    %s16 = sadd.s32 1, %s12
  $region7: #{gsa_forward_pallas.2} parent=0 // loop_footer_branch
    %11 = sbr.rel target = $region3
  $region8: #{gsa_forward_pallas.2} parent=0 // loop_exit
    _

// kernel: gsa_forward_pallas.3
$region0: #{gsa_forward_pallas.3}
  #allocation0 [shape = 'u32[]', space=smem, size = 0x4, offset = 0x4, fixed_abs, tag = 'smem constant byte address 0x4 - core index']
  #allocation1 [shape = 'u32[144,128]{1,0:T(1,128)}', space=vmem, size = 0x12000, scoped, tag = 'internal scratch']
  %s0 = inlined_call_operand.vmem [shape: f32[2,8,256], index: 0, kind: input, shape index: {}]
  %s1 = inlined_call_operand.vmem [shape: f32[1,64,8], index: 1, kind: input, shape index: {}]
  %s2 = inlined_call_operand.vmem [shape: f32[2,5,16], index: 2, kind: input, shape index: {}]
  %s3 = inlined_call_operand.vmem [shape: f32[2,5,16], index: 3, kind: input, shape index: {}]
  %s4 = inlined_call_operand.vmem [shape: f32[1,5,256], index: 4, kind: input, shape index: {}]
  %s5 = inlined_call_operand.vmem [shape: f32[1,5,256], index: 5, kind: input, shape index: {}]
  %s6 = inlined_call_operand.vmem [shape: bf16[4,16,256], index: 6, kind: input, shape index: {}]
  %s7 = inlined_call_operand.vmem [shape: f32[32,2], index: 7, kind: input, shape index: {}]
  %s8 = inlined_call_operand.vmem [shape: f32[1,4,32], index: 8, kind: input, shape index: {}]
  %s9 = inlined_call_operand.vmem [shape: f32[2,4,256], index: 9, kind: output, shape index: {}]
  %s10 = sld [smem:[#allocation0]]
  $region69: #{gsa_forward_pallas.3} parent=0
    _
  %s12 = ssub.s32 1, %s10
  %s13 = scalar_select 0, %s12, %s10
  loop: start=0, step=1, limit=4
  $region2: #{gsa_forward_pallas.3} parent=0 // loop_pre_header
    _
  $region3: #{gsa_forward_pallas.3} parent=0 // loop_header
    %s15 = sphi 0, %s19
    %p16 = scmp.ge.s32.totalorder %s15, 4
    %s22 = sphi 0, %s34
    %s23 = sphi 0, %s30
    %s24 = sphi 0, %s22
    %s25 = sphi 0, %s23
    %s26 = sphi 0, %s24
    %s27 = sphi 0, %s25
    %s37 = sphi 0, %s39
    %s40 = sphi 0, %s37
    %s41 = sphi 0, %s40
    %s57 = sphi 0, %s41
    %s63 = sphi 0, %s65
    %s66 = sphi 0, %s63
    %s67 = sphi 0, %s66
    %s83 = sphi 0, %s67
    %s87 = sphi 0, %s87
    %s89 = sphi 0, %s87
    %s90 = sphi 0, %s89
    %s104 = sphi 0, %s90
    %s108 = sphi 0, %s108
    %s110 = sphi 0, %s108
    %s111 = sphi 0, %s110
    %s125 = sphi 0, %s111
    %s129 = sphi 0, %s129
    %s131 = sphi 0, %s129
    %s132 = sphi 0, %s131
    %s146 = sphi 0, %s132
    %s150 = sphi 0, %s150
    %s152 = sphi 0, %s150
    %s153 = sphi 0, %s152
    %s167 = sphi 0, %s153
    %s175 = sphi 0, %s177
    %s178 = sphi 0, %s175
    %s179 = sphi 0, %s178
    %s195 = sphi 0, %s179
    %s199 = sphi 0, %s199
    %s201 = sphi 0, %s199
    %s202 = sphi 0, %s201
    %s216 = sphi 0, %s202
    %s222 = sphi 0, %s224
    %s225 = sphi 0, %s222
    %s226 = sphi 0, %s225
    %s242 = sphi 0, %s226
    %s250 = sphi 0, %s252
    %s253 = sphi 0, %s250
    %s254 = sphi 0, %s253
    %s270 = sphi 0, %s254
  $region4: #{gsa_forward_pallas.3} parent=0 // loop_header_branch
    %18 = sbr.rel (%p16) target = $region8
  $region5: #{gsa_forward_pallas.3} parent=0 // loop_body
    %s20 = ssub.s32 %s15, 1
    %s21 = ssub.s32 %s15, 2
    %s28 = sadd.s32 1, %s23
    %p29 = scmp.ge.s32.totalorder %s28, 1
    %s30 = scalar_select %p29, 0, %s28
    %s31 = sadd.s32 1, %s22
    %s32 = scalar_select %p29, %s31, %s22
    %p33 = scmp.ge.s32.totalorder %s32, 2
    %s34 = scalar_select %p33, 0, %s32
    %s35 = ssub.s32 %s22, %s34
    %p36 = scmp.eq.s32.totalorder %s35, 0
    %s38 = sadd.s32 %s37, 1
    %s39 = scalar_select %p36, %s37, %s38
    %p42 = pneg %p36
    %p43 = scmp.eq.s32.totalorder %s15, 1
    %p44 = por %p42, %p43
    %p45 = scmp.ne.s32.totalorder %s37, %s40
    %p46 = scmp.eq.s32.totalorder %s15, 0
    %p47 = por %p45, %p46
    %p48 = scmp.ne.s32.totalorder %s37, %s40
    %p49 = scmp.eq.s32.totalorder %s20, 1
    %p50 = por %p48, %p49
    %p51 = scmp.ne.s32.totalorder %s40, %s41
    %p52 = scmp.eq.s32.totalorder %s20, 0
    %p53 = por %p51, %p52
    %p54 = scmp.ne.s32.totalorder %s40, %s41
    %p55 = scmp.eq.s32.totalorder %s21, 1
    %p56 = por %p54, %p55
    %p58 = scmp.ne.s32.totalorder %s41, %s57
    %p59 = scmp.eq.s32.totalorder %s21, 0
    %p60 = por %p58, %p59
    %s61 = ssub.s32 %s23, %s30
    %p62 = scmp.eq.s32.totalorder %s61, 0
    %s64 = sadd.s32 %s63, 1
    %s65 = scalar_select %p62, %s63, %s64
    %p68 = pneg %p62
    %p69 = scmp.eq.s32.totalorder %s15, 1
    %p70 = por %p68, %p69
    %p71 = scmp.ne.s32.totalorder %s63, %s66
    %p72 = scmp.eq.s32.totalorder %s15, 0
    %p73 = por %p71, %p72
    %p74 = scmp.ne.s32.totalorder %s63, %s66
    %p75 = scmp.eq.s32.totalorder %s20, 1
    %p76 = por %p74, %p75
    %p77 = scmp.ne.s32.totalorder %s66, %s67
    %p78 = scmp.eq.s32.totalorder %s20, 0
    %p79 = por %p77, %p78
    %p80 = scmp.ne.s32.totalorder %s66, %s67
    %p81 = scmp.eq.s32.totalorder %s21, 1
    %p82 = por %p80, %p81
    %p84 = scmp.ne.s32.totalorder %s67, %s83
    %p85 = scmp.eq.s32.totalorder %s21, 0
    %p86 = por %p84, %p85
    %s88 = sadd.s32 %s87, 1
    %p91 = scmp.eq.s32.totalorder %s15, 1
    %p92 = scmp.ne.s32.totalorder %s87, %s89
    %p93 = scmp.eq.s32.totalorder %s15, 0
    %p94 = por %p92, %p93
    %p95 = scmp.ne.s32.totalorder %s87, %s89
    %p96 = scmp.eq.s32.totalorder %s20, 1
    %p97 = por %p95, %p96
    %p98 = scmp.ne.s32.totalorder %s89, %s90
    %p99 = scmp.eq.s32.totalorder %s20, 0
    %p100 = por %p98, %p99
    %p101 = scmp.ne.s32.totalorder %s89, %s90
    %p102 = scmp.eq.s32.totalorder %s21, 1
    %p103 = por %p101, %p102
    %p105 = scmp.ne.s32.totalorder %s90, %s104
    %p106 = scmp.eq.s32.totalorder %s21, 0
    %p107 = por %p105, %p106
    %s109 = sadd.s32 %s108, 1
    %p112 = scmp.eq.s32.totalorder %s15, 1
    %p113 = scmp.ne.s32.totalorder %s108, %s110
    %p114 = scmp.eq.s32.totalorder %s15, 0
    %p115 = por %p113, %p114
    %p116 = scmp.ne.s32.totalorder %s108, %s110
    %p117 = scmp.eq.s32.totalorder %s20, 1
    %p118 = por %p116, %p117
    %p119 = scmp.ne.s32.totalorder %s110, %s111
    %p120 = scmp.eq.s32.totalorder %s20, 0
    %p121 = por %p119, %p120
    %p122 = scmp.ne.s32.totalorder %s110, %s111
    %p123 = scmp.eq.s32.totalorder %s21, 1
    %p124 = por %p122, %p123
    %p126 = scmp.ne.s32.totalorder %s111, %s125
    %p127 = scmp.eq.s32.totalorder %s21, 0
    %p128 = por %p126, %p127
    %s130 = sadd.s32 %s129, 1
    %p133 = scmp.eq.s32.totalorder %s15, 1
    %p134 = scmp.ne.s32.totalorder %s129, %s131
    %p135 = scmp.eq.s32.totalorder %s15, 0
    %p136 = por %p134, %p135
    %p137 = scmp.ne.s32.totalorder %s129, %s131
    %p138 = scmp.eq.s32.totalorder %s20, 1
    %p139 = por %p137, %p138
    %p140 = scmp.ne.s32.totalorder %s131, %s132
    %p141 = scmp.eq.s32.totalorder %s20, 0
    %p142 = por %p140, %p141
    %p143 = scmp.ne.s32.totalorder %s131, %s132
    %p144 = scmp.eq.s32.totalorder %s21, 1
    %p145 = por %p143, %p144
    %p147 = scmp.ne.s32.totalorder %s132, %s146
    %p148 = scmp.eq.s32.totalorder %s21, 0
    %p149 = por %p147, %p148
    %s151 = sadd.s32 %s150, 1
    %p154 = scmp.eq.s32.totalorder %s15, 1
    %p155 = scmp.ne.s32.totalorder %s150, %s152
    %p156 = scmp.eq.s32.totalorder %s15, 0
    %p157 = por %p155, %p156
    %p158 = scmp.ne.s32.totalorder %s150, %s152
    %p159 = scmp.eq.s32.totalorder %s20, 1
    %p160 = por %p158, %p159
    %p161 = scmp.ne.s32.totalorder %s152, %s153
    %p162 = scmp.eq.s32.totalorder %s20, 0
    %p163 = por %p161, %p162
    %p164 = scmp.ne.s32.totalorder %s152, %s153
    %p165 = scmp.eq.s32.totalorder %s21, 1
    %p166 = por %p164, %p165
    %p168 = scmp.ne.s32.totalorder %s153, %s167
    %p169 = scmp.eq.s32.totalorder %s21, 0
    %p170 = por %p168, %p169
    %s171 = sadd.s32 %s22, %s23
    %s172 = sadd.s32 %s34, %s30
    %s173 = ssub.s32 %s171, %s172
    %p174 = scmp.eq.s32.totalorder %s173, 0
    %s176 = sadd.s32 %s175, 1
    %s177 = scalar_select %p174, %s175, %s176
    %p180 = pneg %p174
    %p181 = scmp.eq.s32.totalorder %s15, 1
    %p182 = por %p180, %p181
    %p183 = scmp.ne.s32.totalorder %s175, %s178
    %p184 = scmp.eq.s32.totalorder %s15, 0
    %p185 = por %p183, %p184
    %p186 = scmp.ne.s32.totalorder %s175, %s178
    %p187 = scmp.eq.s32.totalorder %s20, 1
    %p188 = por %p186, %p187
    %p189 = scmp.ne.s32.totalorder %s178, %s179
    %p190 = scmp.eq.s32.totalorder %s20, 0
    %p191 = por %p189, %p190
    %p192 = scmp.ne.s32.totalorder %s178, %s179
    %p193 = scmp.eq.s32.totalorder %s21, 1
    %p194 = por %p192, %p193
    %p196 = scmp.ne.s32.totalorder %s179, %s195
    %p197 = scmp.eq.s32.totalorder %s21, 0
    %p198 = por %p196, %p197
    %s200 = sadd.s32 %s199, 1
    %p203 = scmp.eq.s32.totalorder %s15, 1
    %p204 = scmp.ne.s32.totalorder %s199, %s201
    %p205 = scmp.eq.s32.totalorder %s15, 0
    %p206 = por %p204, %p205
    %p207 = scmp.ne.s32.totalorder %s199, %s201
    %p208 = scmp.eq.s32.totalorder %s20, 1
    %p209 = por %p207, %p208
    %p210 = scmp.ne.s32.totalorder %s201, %s202
    %p211 = scmp.eq.s32.totalorder %s20, 0
    %p212 = por %p210, %p211
    %p213 = scmp.ne.s32.totalorder %s201, %s202
    %p214 = scmp.eq.s32.totalorder %s21, 1
    %p215 = por %p213, %p214
    %p217 = scmp.ne.s32.totalorder %s202, %s216
    %p218 = scmp.eq.s32.totalorder %s21, 0
    %p219 = por %p217, %p218
    %s220 = ssub.s32 %s23, %s30
    %p221 = scmp.eq.s32.totalorder %s220, 0
    %s223 = sadd.s32 %s222, 1
    %s224 = scalar_select %p221, %s222, %s223
    %p227 = pneg %p221
    %p228 = scmp.eq.s32.totalorder %s15, 1
    %p229 = por %p227, %p228
    %p230 = scmp.ne.s32.totalorder %s222, %s225
    %p231 = scmp.eq.s32.totalorder %s15, 0
    %p232 = por %p230, %p231
    %p233 = scmp.ne.s32.totalorder %s222, %s225
    %p234 = scmp.eq.s32.totalorder %s20, 1
    %p235 = por %p233, %p234
    %p236 = scmp.ne.s32.totalorder %s225, %s226
    %p237 = scmp.eq.s32.totalorder %s20, 0
    %p238 = por %p236, %p237
    %p239 = scmp.ne.s32.totalorder %s225, %s226
    %p240 = scmp.eq.s32.totalorder %s21, 1
    %p241 = por %p239, %p240
    %p243 = scmp.ne.s32.totalorder %s226, %s242
    %p244 = scmp.eq.s32.totalorder %s21, 0
    %p245 = por %p243, %p244
    %s246 = sadd.s32 %s22, %s23
    %s247 = sadd.s32 %s34, %s30
    %s248 = ssub.s32 %s246, %s247
    %p249 = scmp.eq.s32.totalorder %s248, 0
    %s251 = sadd.s32 %s250, 1
    %s252 = scalar_select %p249, %s250, %s251
    %p255 = pneg %p249
    %p256 = scmp.eq.s32.totalorder %s15, 1
    %p257 = por %p255, %p256
    %p258 = scmp.ne.s32.totalorder %s250, %s253
    %p259 = scmp.eq.s32.totalorder %s15, 0
    %p260 = por %p258, %p259
    %p261 = scmp.ne.s32.totalorder %s250, %s253
    %p262 = scmp.eq.s32.totalorder %s20, 1
    %p263 = por %p261, %p262
    %p264 = scmp.ne.s32.totalorder %s253, %s254
    %p265 = scmp.eq.s32.totalorder %s20, 0
    %p266 = por %p264, %p265
    %p267 = scmp.ne.s32.totalorder %s253, %s254
    %p268 = scmp.eq.s32.totalorder %s21, 1
    %p269 = por %p267, %p268
    %p271 = scmp.ne.s32.totalorder %s254, %s270
    %p272 = scmp.eq.s32.totalorder %s21, 0
    %p273 = por %p271, %p272
    %p274 = scmp.le.s32.totalorder 1, %s15
    %p275 = scmp.lt.s32.totalorder %s15, 3
    %p276 = pnand %p274, %p275
    %p277 = pneg %p276
    // Predicated region
    $region9: #{gsa_forward_pallas.3} parent=5 // pred_check
      _
    $region10: #{gsa_forward_pallas.3} parent=5 // pred_check_branch
      %279 = sbr.rel (%p276) target = $region12
    $region11: #{gsa_forward_pallas.3} parent=5 // pred_region
      %s280 = ssub.s32 %s15, 1
      // Predicated region
      $region13: #{gsa_forward_pallas.3} parent=11 // pred_check
        %p281 = pneg %p79
      $region14: #{gsa_forward_pallas.3} parent=11 // pred_check_branch
        %283 = sbr.rel (%p281) target = $region16
      $region15: #{gsa_forward_pallas.3} parent=11 // pred_region
        %p284 = scmp.lt.s32.totalorder %s25, 0
        %s285 = scalar_select %p284, %s25, 0
        %s286 = smul.addr %s285, 8
        %s287 = smul.addr %s286, 8
        %s288 = scalar_lea.vmem %s1, %s287
      $region16: #{gsa_forward_pallas.3} parent=11 // pred_fallthru
        _
      // Predicated region
      $region17: #{gsa_forward_pallas.3} parent=11 // pred_check
        %p289 = pneg %p100
      $region18: #{gsa_forward_pallas.3} parent=11 // pred_check_branch
        %291 = sbr.rel (%p289) target = $region20
      $region19: #{gsa_forward_pallas.3} parent=11 // pred_region
        _
      $region20: #{gsa_forward_pallas.3} parent=11 // pred_fallthru
        _
      // Predicated region
      $region21: #{gsa_forward_pallas.3} parent=11 // pred_check
        %p292 = pneg %p121
      $region22: #{gsa_forward_pallas.3} parent=11 // pred_check_branch
        %294 = sbr.rel (%p292) target = $region24
      $region23: #{gsa_forward_pallas.3} parent=11 // pred_region
        _
      $region24: #{gsa_forward_pallas.3} parent=11 // pred_fallthru
        _
      // Predicated region
      $region25: #{gsa_forward_pallas.3} parent=11 // pred_check
        %p295 = pneg %p142
      $region26: #{gsa_forward_pallas.3} parent=11 // pred_check_branch
        %297 = sbr.rel (%p295) target = $region28
      $region27: #{gsa_forward_pallas.3} parent=11 // pred_region
        _
      $region28: #{gsa_forward_pallas.3} parent=11 // pred_fallthru
        _
      // Predicated region
      $region29: #{gsa_forward_pallas.3} parent=11 // pred_check
        %p298 = pneg %p163
      $region30: #{gsa_forward_pallas.3} parent=11 // pred_check_branch
        %300 = sbr.rel (%p298) target = $region32
      $region31: #{gsa_forward_pallas.3} parent=11 // pred_region
        _
      $region32: #{gsa_forward_pallas.3} parent=11 // pred_fallthru
        _
      // Predicated region
      $region33: #{gsa_forward_pallas.3} parent=11 // pred_check
        %p301 = pneg %p212
      $region34: #{gsa_forward_pallas.3} parent=11 // pred_check_branch
        %303 = sbr.rel (%p301) target = $region36
      $region35: #{gsa_forward_pallas.3} parent=11 // pred_region
        _
      $region36: #{gsa_forward_pallas.3} parent=11 // pred_fallthru
        _
      // Predicated region
      $region37: #{gsa_forward_pallas.3} parent=11 // pred_check
        %p304 = pneg %p238
      $region38: #{gsa_forward_pallas.3} parent=11 // pred_check_branch
        %306 = sbr.rel (%p304) target = $region40
      $region39: #{gsa_forward_pallas.3} parent=11 // pred_region
        %p307 = scmp.lt.s32.totalorder %s25, 0
        %s308 = scalar_select %p307, %s25, 0
        %s309 = smul.addr %s308, 4
        %s310 = scalar_lea.vmem %s8, %s309
      $region40: #{gsa_forward_pallas.3} parent=11 // pred_fallthru
        _
    $region12: #{gsa_forward_pallas.3} parent=5 // pred_fallthru
      _
    %p311 = scmp.lt.s32.totalorder %s15, 2
    // Predicated region
    $region41: #{gsa_forward_pallas.3} parent=5 // pred_check
      %p312 = pneg %p311
    $region42: #{gsa_forward_pallas.3} parent=5 // pred_check_branch
      %314 = sbr.rel (%p312) target = $region44
    $region43: #{gsa_forward_pallas.3} parent=5 // pred_region
      // Predicated region
      $region45: #{gsa_forward_pallas.3} parent=43 // pred_check
        %p315 = pneg %p47
      $region46: #{gsa_forward_pallas.3} parent=43 // pred_check_branch
        %317 = sbr.rel (%p315) target = $region48
      $region47: #{gsa_forward_pallas.3} parent=43 // pred_region
        %p318 = scmp.lt.s32.totalorder %s22, 1
        %s319 = scalar_select %p318, %s22, 1
        %s320 = smul.addr %s319, 2
        %s321 = smul.addr %s320, 8
        %s322 = scalar_lea.vmem %s0, %s321
      $region48: #{gsa_forward_pallas.3} parent=43 // pred_fallthru
        _
      // Predicated region
      $region49: #{gsa_forward_pallas.3} parent=43 // pred_check
        %p323 = pneg %p185
      $region50: #{gsa_forward_pallas.3} parent=43 // pred_check_branch
        %325 = sbr.rel (%p323) target = $region52
      $region51: #{gsa_forward_pallas.3} parent=43 // pred_region
        %s326 = sadd.s32 %s22, %s23
        %s327 = smul.u32 2, %s326
        %p328 = scmp.lt.s32.totalorder %s327, 3
        %s329 = scalar_select %p328, %s327, 3
        %s330 = smul.addr %s329, 4
        %s331 = smul.addr %s330, 4
        %s332 = scalar_lea.vmem %s6, %s331
        %s333 = sadd.s32 %s22, %s23
        %s334 = smul.u32 2, %s333
      $region52: #{gsa_forward_pallas.3} parent=43 // pred_fallthru
        _
    $region44: #{gsa_forward_pallas.3} parent=5 // pred_fallthru
      _
    %p335 = scmp.le.s32.totalorder 1, %s15
    %p336 = scmp.lt.s32.totalorder %s15, 3
    %p337 = pnand %p335, %p336
    %p338 = pneg %p337
    // Predicated region
    $region53: #{gsa_forward_pallas.3} parent=5 // pred_check
      _
    $region54: #{gsa_forward_pallas.3} parent=5 // pred_check_branch
      %340 = sbr.rel (%p337) target = $region56
    $region55: #{gsa_forward_pallas.3} parent=5 // pred_region
      %s341 = ssub.s32 %s15, 1
      %p342 = scmp.lt.s32.totalorder %s24, 1
      %s343 = scalar_select %p342, %s24, 1
      %s344 = smul.addr %s343, 2
      %s345 = smul.addr %s344, 8
      %s346 = scalar_lea.vmem %s0, %s345
      %p347 = pneg %p53
      %p348 = pneg %p50
      %p349 = scmp.lt.s32.totalorder %s25, 0
      %s350 = scalar_select %p349, %s25, 0
      %s351 = smul.addr %s350, 8
      %s352 = smul.addr %s351, 8
      %s353 = scalar_lea.vmem %s1, %s352
      %p354 = pneg %p79
      %p355 = pneg %p76
      %p356 = pneg %p100
      %p357 = pneg %p97
      %p358 = pneg %p121
      %p359 = pneg %p118
      %p360 = pneg %p142
      %p361 = pneg %p139
      %p362 = pneg %p163
      %p363 = pneg %p160
      %s364 = sadd.s32 %s24, %s25
      %s365 = smul.u32 2, %s364
      %p366 = scmp.lt.s32.totalorder %s365, 3
      %s367 = scalar_select %p366, %s365, 3
      %s368 = smul.addr %s367, 4
      %s369 = smul.addr %s368, 4
      %s370 = scalar_lea.vmem %s6, %s369
      %p371 = pneg %p191
      %p372 = pneg %p188
      %p373 = pneg %p212
      %p374 = pneg %p209
      %p375 = scmp.lt.s32.totalorder %s25, 0
      %s376 = scalar_select %p375, %s25, 0
      %s377 = smul.addr %s376, 4
      %s378 = scalar_lea.vmem %s8, %s377
      %p379 = pneg %p238
      %p380 = pneg %p235
      %p381 = pneg %p266
      %p382 = pneg %p263
      %s383 = sadd.s32 %s24, %s25
      %p384 = scmp.lt.s32.totalorder %s383, 1
      %s385 = scalar_select %p384, %s383, 1
      %s386 = smul.addr %s385, 2
      %s387 = smul.addr %s386, 4
      %s388 = scalar_lea.vmem %s9, %s387
      %p389 = scmp.lt.s32.totalorder %s24, 1
      %s390 = scalar_select %p389, %s24, 1
      %s391 = smul.addr %s390, 2
      %s392 = smul.addr %s391, 8
      %s393 = scalar_lea.vmem %s0, %s392
      %p394 = scmp.lt.s32.totalorder %s25, 0
      %s395 = scalar_select %p394, %s25, 0
      %s396 = smul.addr %s395, 8
      %s397 = smul.addr %s396, 8
      %s398 = scalar_lea.vmem %s1, %s397
      %s399 = sadd.s32 %s24, %s25
      %s400 = smul.u32 2, %s399
      %p401 = scmp.lt.s32.totalorder %s400, 3
      %s402 = scalar_select %p401, %s400, 3
      %s403 = smul.addr %s402, 4
      %s404 = smul.addr %s403, 4
      %s405 = scalar_lea.vmem %s6, %s404
      %s406 = sadd.s32 %s24, %s25
      %s407 = smul.u32 2, %s406
      %p408 = scmp.lt.s32.totalorder %s25, 0
      %s409 = scalar_select %p408, %s25, 0
      %s410 = smul.addr %s409, 4
      %s411 = scalar_lea.vmem %s8, %s410
      %s412 = sadd.s32 %s24, %s25
      %p413 = scmp.lt.s32.totalorder %s412, 1
      %s414 = scalar_select %p413, %s412, 1
      %s415 = smul.addr %s414, 2
      %s416 = smul.addr %s415, 4
      %s417 = scalar_lea.vmem %s9, %s416
      %s418 = sadd.s32 %s24, %s25
      %v419 = vld [vmem:[%s393] sm:$0xff]
      %v420 = vld [vmem:[%s393 + $0x8] sm:$0xff]
      %v421 = vld [vmem:[%s398] sm:$0xff]
      %v422 = vld [vmem:[%s398 + $0x8] sm:$0xff]
      %v423 = vld [vmem:[%s398 + $0x10] sm:$0xff]
      %v424 = vld [vmem:[%s398 + $0x18] sm:$0xff]
      %v425 = vld [vmem:[%s398 + $0x20] sm:$0xff]
      %v426 = vld [vmem:[%s398 + $0x28] sm:$0xff]
      %v427 = vld [vmem:[%s398 + $0x30] sm:$0xff]
      %v428 = vld [vmem:[%s398 + $0x38] sm:$0xff]
      %vm429 = vcmask 64512
      %v431 = vsel %vm429, %v421, 0
      %v434 = vsel %vm429, %v422, 0
      %v437 = vsel %vm429, %v423, 0
      %v440 = vsel %vm429, %v424, 0
      %v443 = vsel %vm429, %v425, 0
      %v446 = vsel %vm429, %v426, 0
      %v449 = vsel %vm429, %v427, 0
      %v452 = vsel %vm429, %v428, 0
      %454 = vmatprep.subr.mxu0 %v420
      %455 = vmatpush1.msra.mxu0 %v419
      %456 = vmatprep.subr.mxu0 0.0
      %457 = vmatpush1.msra.mxu0 0.0
      %458 = vmatprep.subr.mxu0 0.0
      %459 = vmatpush1.msra.mxu0 0.0
      %460 = vmatprep.subr.mxu0 0.0
      %461 = vmatpush1.msra.mxu0 0.0
      %462 = vmatprep.subr.mxu0 0.0
      %463 = vmatpush1.msra.mxu0 0.0
      %464 = vmatprep.subr.mxu0 0.0
      %465 = vmatpush1.msra.mxu0 0.0
      %466 = vmatprep.subr.mxu0 0.0
      %467 = vmatpush1.msra.mxu0 0.0
      %468 = vmatprep.subr.mxu0 0.0
      %469 = vmatpush1.msra.mxu0 0.0
      %470 = vmatprep.subr.mxu0 0.0
      %471 = vmatpush1.msra.mxu0 0.0
      %472 = vmatprep.subr.mxu0 0.0
      %473 = vmatpush1.msra.mxu0 0.0
      %474 = vmatprep.subr.mxu0 0.0
      %475 = vmatpush1.msra.mxu0 0.0
      %476 = vmatprep.subr.mxu0 0.0
      %477 = vmatpush1.msra.mxu0 0.0
      %478 = vmatprep.subr.mxu0 0.0
      %479 = vmatpush1.msra.mxu0 0.0
      %480 = vmatprep.subr.mxu0 0.0
      %481 = vmatpush1.msra.mxu0 0.0
      %482 = vmatprep.subr.mxu0 0.0
      %483 = vmatpush1.msra.mxu0 0.0
      %484 = vmatprep.subr.mxu0 0.0
      %485 = vmatpush1.msra.mxu0 0.0
      %486 = vmatprep.subr.mxu0 0.0
      %487 = vmatpush1.msra.mxu0 0.0
      %488 = vmatprep.subr.mxu0 0.0
      %489 = vmatpush1.msra.mxu0 0.0
      %490 = vmatprep.subr.mxu0 0.0
      %491 = vmatpush1.msra.mxu0 0.0
      %492 = vmatprep.subr.mxu0 0.0
      %493 = vmatpush1.msra.mxu0 0.0
      %494 = vmatprep.subr.mxu0 0.0
      %495 = vmatpush1.msra.mxu0 0.0
      %496 = vmatprep.subr.mxu0 0.0
      %497 = vmatpush1.msra.mxu0 0.0
      %498 = vmatprep.subr.mxu0 0.0
      %499 = vmatpush1.msra.mxu0 0.0
      %500 = vmatprep.subr.mxu0 0.0
      %501 = vmatpush1.msra.mxu0 0.0
      %502 = vmatprep.subr.mxu0 0.0
      %503 = vmatpush1.msra.mxu0 0.0
      %504 = vmatprep.subr.mxu0 0.0
      %505 = vmatpush1.msra.mxu0 0.0
      %506 = vmatprep.subr.mxu0 0.0
      %507 = vmatpush1.msra.mxu0 0.0
      %508 = vmatprep.subr.mxu0 0.0
      %509 = vmatpush1.msra.mxu0 0.0
      %510 = vmatprep.subr.mxu0 0.0
      %511 = vmatpush1.msra.mxu0 0.0
      %512 = vmatprep.subr.mxu0 0.0
      %513 = vmatpush1.msra.mxu0 0.0
      %514 = vmatprep.subr.mxu0 0.0
      %515 = vmatpush1.msra.mxu0 0.0
      %516 = vmatprep.subr.mxu0 0.0
      %517 = vmatpush1.msra.mxu0 0.0
      %518 = vmatprep.mubr.f32.mxu0 0.0
      %519 = vmatmul.mubr.f32.gmra.mrb[0].mxu0 %v431
      %v520 = vpop.f32.mrb[0].mxu0
      %v521 = vadd.f32 0.0, %v520
      %v522 = vpop.f32.mrb[0].mxu0
      %v523 = vadd.f32 0.0, %v522
      %524 = vmatprep.mubr.f32.mxu0 0.0
      %525 = vmatmul.mubr.f32.gmra.mrb[0].mxu0 %v434
      %v526 = vpop.f32.mrb[0].mxu0
      %v527 = vadd.f32 0.0, %v526
      %v528 = vpop.f32.mrb[0].mxu0
      %v529 = vadd.f32 0.0, %v528
      %530 = vmatprep.mubr.f32.mxu0 0.0
      %531 = vmatmul.mubr.f32.gmra.mrb[0].mxu0 %v437
      %v532 = vpop.f32.mrb[0].mxu0
      %v533 = vadd.f32 0.0, %v532
      %v534 = vpop.f32.mrb[0].mxu0
      %v535 = vadd.f32 0.0, %v534
      %536 = vmatprep.mubr.f32.mxu0 0.0
      %537 = vmatmul.mubr.f32.gmra.mrb[0].mxu0 %v440
      %v538 = vpop.f32.mrb[0].mxu0
      %v539 = vadd.f32 0.0, %v538
      %v540 = vpop.f32.mrb[0].mxu0
      %v541 = vadd.f32 0.0, %v540
      %542 = vmatprep.mubr.f32.mxu0 0.0
      %543 = vmatmul.mubr.f32.gmra.mrb[0].mxu0 %v443
      %v544 = vpop.f32.mrb[0].mxu0
      %v545 = vadd.f32 0.0, %v544
      %v546 = vpop.f32.mrb[0].mxu0
      %v547 = vadd.f32 0.0, %v546
      %548 = vmatprep.mubr.f32.mxu0 0.0
      %549 = vmatmul.mubr.f32.gmra.mrb[0].mxu0 %v446
      %v550 = vpop.f32.mrb[0].mxu0
      %v551 = vadd.f32 0.0, %v550
      %v552 = vpop.f32.mrb[0].mxu0
      %v553 = vadd.f32 0.0, %v552
      %554 = vmatprep.mubr.f32.mxu0 0.0
      %555 = vmatmul.mubr.f32.gmra.mrb[0].mxu0 %v449
      %v556 = vpop.f32.mrb[0].mxu0
      %v557 = vadd.f32 0.0, %v556
      %v558 = vpop.f32.mrb[0].mxu0
      %v559 = vadd.f32 0.0, %v558
      %560 = vmatprep.mubr.f32.mxu0 0.0
      %561 = vmatmul.mubr.f32.gmra.mrb[0].mxu0 %v452
      %v562 = vpop.f32.mrb[0].mxu0
      %v563 = vadd.f32 0.0, %v562
      %v564 = vpop.f32.mrb[0].mxu0
      %v565 = vadd.f32 0.0, %v564
      %566 = vdwg.mxu0
      %v567 = vld [vmem:[%s2] sm:$0x1f]
      %v568 = vld [vmem:[%s2 + $0x8] sm:$0x1f]
      %vm569 = vcmask 130048
      %v571 = vsel %vm569, %v567, 0
      %573 = vmatprep.subr.mxu0 %v523
      %574 = vmatpush1.msra.mxu0 %v521
      %575 = vmatprep.subr.mxu0 %v529
      %576 = vmatpush1.msra.mxu0 %v527
      %577 = vmatprep.subr.mxu0 0.0
      %578 = vmatpush1.msra.mxu0 0.0
      %579 = vmatprep.subr.mxu0 0.0
      %580 = vmatpush1.msra.mxu0 0.0
      %581 = vmatprep.subr.mxu0 0.0
      %582 = vmatpush1.msra.mxu0 0.0
      %583 = vmatprep.subr.mxu0 0.0
      %584 = vmatpush1.msra.mxu0 0.0
      %585 = vmatprep.subr.mxu0 0.0
      %586 = vmatpush1.msra.mxu0 0.0
      %587 = vmatprep.subr.mxu0 0.0
      %588 = vmatpush1.msra.mxu0 0.0
      %589 = vmatprep.subr.mxu0 0.0
      %590 = vmatpush1.msra.mxu0 0.0
      %591 = vmatprep.subr.mxu0 0.0
      %592 = vmatpush1.msra.mxu0 0.0
      %593 = vmatprep.subr.mxu0 0.0
      %594 = vmatpush1.msra.mxu0 0.0
      %595 = vmatprep.subr.mxu0 0.0
      %596 = vmatpush1.msra.mxu0 0.0
      %597 = vmatprep.subr.mxu0 0.0
      %598 = vmatpush1.msra.mxu0 0.0
      %599 = vmatprep.subr.mxu0 0.0
      %600 = vmatpush1.msra.mxu0 0.0
      %601 = vmatprep.subr.mxu0 0.0
      %602 = vmatpush1.msra.mxu0 0.0
      %603 = vmatprep.subr.mxu0 0.0
      %604 = vmatpush1.msra.mxu0 0.0
      %605 = vmatprep.subr.mxu0 0.0
      %606 = vmatpush1.msra.mxu0 0.0
      %607 = vmatprep.subr.mxu0 0.0
      %608 = vmatpush1.msra.mxu0 0.0
      %609 = vmatprep.subr.mxu0 0.0
      %610 = vmatpush1.msra.mxu0 0.0
      %611 = vmatprep.subr.mxu0 0.0
      %612 = vmatpush1.msra.mxu0 0.0
      %613 = vmatprep.subr.mxu0 0.0
      %614 = vmatpush1.msra.mxu0 0.0
      %615 = vmatprep.subr.mxu0 0.0
      %616 = vmatpush1.msra.mxu0 0.0
      %617 = vmatprep.subr.mxu0 0.0
      %618 = vmatpush1.msra.mxu0 0.0
      %619 = vmatprep.subr.mxu0 0.0
      %620 = vmatpush1.msra.mxu0 0.0
      %621 = vmatprep.subr.mxu0 0.0
      %622 = vmatpush1.msra.mxu0 0.0
      %623 = vmatprep.subr.mxu0 0.0
      %624 = vmatpush1.msra.mxu0 0.0
      %625 = vmatprep.subr.mxu0 0.0
      %626 = vmatpush1.msra.mxu0 0.0
      %627 = vmatprep.subr.mxu0 0.0
      %628 = vmatpush1.msra.mxu0 0.0
      %629 = vmatprep.subr.mxu0 0.0
      %630 = vmatpush1.msra.mxu0 0.0
      %631 = vmatprep.subr.mxu0 0.0
      %632 = vmatpush1.msra.mxu0 0.0
      %633 = vmatprep.subr.mxu0 0.0
      %634 = vmatpush1.msra.mxu0 0.0
      %635 = vmatprep.subr.mxu0 0.0
      %636 = vmatpush1.msra.mxu0 0.0
      %637 = vmatprep.mubr.f32.mxu0 0.0
      %638 = vmatmul.mubr.f32.gmra.mrb[0].mxu0 %v571
      %v639 = vpop.f32.mrb[0].mxu0
      %v640 = vadd.f32 0.0, %v639
      %v641 = vpop.f32.mrb[0].mxu0
      %v642 = vadd.f32 0.0, %v641
      %643 = vdwg.mxu0
      %v645 = vsel %vm569, %v568, 0
      %647 = vmatprep.subr.mxu0 %v535
      %648 = vmatpush1.msra.mxu0 %v533
      %649 = vmatprep.subr.mxu0 %v541
      %650 = vmatpush1.msra.mxu0 %v539
      %651 = vmatprep.subr.mxu0 0.0
      %652 = vmatpush1.msra.mxu0 0.0
      %653 = vmatprep.subr.mxu0 0.0
      %654 = vmatpush1.msra.mxu0 0.0
      %655 = vmatprep.subr.mxu0 0.0
      %656 = vmatpush1.msra.mxu0 0.0
      %657 = vmatprep.subr.mxu0 0.0
      %658 = vmatpush1.msra.mxu0 0.0
      %659 = vmatprep.subr.mxu0 0.0
      %660 = vmatpush1.msra.mxu0 0.0
      %661 = vmatprep.subr.mxu0 0.0
      %662 = vmatpush1.msra.mxu0 0.0
      %663 = vmatprep.subr.mxu0 0.0
      %664 = vmatpush1.msra.mxu0 0.0
      %665 = vmatprep.subr.mxu0 0.0
      %666 = vmatpush1.msra.mxu0 0.0
      %667 = vmatprep.subr.mxu0 0.0
      %668 = vmatpush1.msra.mxu0 0.0
      %669 = vmatprep.subr.mxu0 0.0
      %670 = vmatpush1.msra.mxu0 0.0
      %671 = vmatprep.subr.mxu0 0.0
      %672 = vmatpush1.msra.mxu0 0.0
      %673 = vmatprep.subr.mxu0 0.0
      %674 = vmatpush1.msra.mxu0 0.0
      %675 = vmatprep.subr.mxu0 0.0
      %676 = vmatpush1.msra.mxu0 0.0
      %677 = vmatprep.subr.mxu0 0.0
      %678 = vmatpush1.msra.mxu0 0.0
      %679 = vmatprep.subr.mxu0 0.0
      %680 = vmatpush1.msra.mxu0 0.0
      %681 = vmatprep.subr.mxu0 0.0
      %682 = vmatpush1.msra.mxu0 0.0
      %683 = vmatprep.subr.mxu0 0.0
      %684 = vmatpush1.msra.mxu0 0.0
      %685 = vmatprep.subr.mxu0 0.0
      %686 = vmatpush1.msra.mxu0 0.0
      %687 = vmatprep.subr.mxu0 0.0
      %688 = vmatpush1.msra.mxu0 0.0
      %689 = vmatprep.subr.mxu0 0.0
      %690 = vmatpush1.msra.mxu0 0.0
      %691 = vmatprep.subr.mxu0 0.0
      %692 = vmatpush1.msra.mxu0 0.0
      %693 = vmatprep.subr.mxu0 0.0
      %694 = vmatpush1.msra.mxu0 0.0
      %695 = vmatprep.subr.mxu0 0.0
      %696 = vmatpush1.msra.mxu0 0.0
      %697 = vmatprep.subr.mxu0 0.0
      %698 = vmatpush1.msra.mxu0 0.0
      %699 = vmatprep.subr.mxu0 0.0
      %700 = vmatpush1.msra.mxu0 0.0
      %701 = vmatprep.subr.mxu0 0.0
      %702 = vmatpush1.msra.mxu0 0.0
      %703 = vmatprep.subr.mxu0 0.0
      %704 = vmatpush1.msra.mxu0 0.0
      %705 = vmatprep.subr.mxu0 0.0
      %706 = vmatpush1.msra.mxu0 0.0
      %707 = vmatprep.subr.mxu0 0.0
      %708 = vmatpush1.msra.mxu0 0.0
      %709 = vmatprep.subr.mxu0 0.0
      %710 = vmatpush1.msra.mxu0 0.0
      %711 = vmatprep.mubr.f32.mxu0 0.0
      %712 = vmatmul.mubr.f32.gmra.mrb[0].mxu0 %v645
      %v713 = vpop.f32.mrb[0].mxu0
      %v714 = vadd.f32 0.0, %v713
      %v715 = vpop.f32.mrb[0].mxu0
      %v716 = vadd.f32 0.0, %v715
      %717 = vdwg.mxu0
      %v718 = vld [vmem:[%s4] sm:$0x1f]
      %v719 = vld [vmem:[%s4 + $0x8] sm:$0x1f]
      %v720 = vmul.f32 %v640, %v718
      %v721 = vmul.f32 %v642, %v719
      %v722 = vmul.f32 %v714, %v718
      %v723 = vmul.f32 %v716, %v719
      %724 = vrot.lane.b32.xlu0 %v545, 32
      %v725 = vpop.permute.xlu0 %724
      %726 = vrot.lane.b32.xlu0 %v551, 32
      %v727 = vpop.permute.xlu0 %726
      %728 = vrot.lane.b32.xlu0 %v557, 32
      %v729 = vpop.permute.xlu0 %728
      %730 = vrot.lane.b32.xlu0 %v563, 32
      %v731 = vpop.permute.xlu0 %730
      %732 = vrot.lane.b32.xlu0 %v547, 32
      %v733 = vpop.permute.xlu0 %732
      %734 = vrot.lane.b32.xlu0 %v553, 32
      %v735 = vpop.permute.xlu0 %734
      %736 = vrot.lane.b32.xlu0 %v559, 32
      %v737 = vpop.permute.xlu0 %736
      %738 = vrot.lane.b32.xlu0 %v565, 32
      %v739 = vpop.permute.xlu0 %738
      %v740 = vlaneseq
      %v741 = vand.u32 %v740, 127
      %vm742 = vcmp.lt.s32.totalorder %v741, 32
      %v743 = vsel %vm742, %v725, %v733
      %v744 = vsel %vm742, %v727, %v735
      %v745 = vsel %vm742, %v729, %v737
      %v746 = vsel %vm742, %v731, %v739
      %v747 = vsel %vm742, %v733, %v725
      %v748 = vsel %vm742, %v735, %v727
      %v749 = vsel %vm742, %v737, %v729
      %v750 = vsel %vm742, %v739, %v731
      %v751 = vlaneseq
      %v752 = vshrl.u32 %v751, 7
      %v753 = vsub.s32 0, %v752
      %v754 = vrot.slane %v720, %v753
      %v755 = vlaneseq
      %v756 = vshrl.u32 %v755, 7
      %v757 = vsub.s32 0, %v756
      %v758 = vrot.slane %v721, %v757
      %v759 = vlaneseq
      %v760 = vshrl.u32 %v759, 7
      %v761 = vsub.s32 0, %v760
      %v762 = vrot.slane %v722, %v761
      %v763 = vlaneseq
      %v764 = vshrl.u32 %v763, 7
      %v765 = vsub.s32 0, %v764
      %v766 = vrot.slane %v723, %v765
      %v767 = vmul.f32 %v754, %v747
      %v768 = vmul.f32 %v758, %v743
      %v769 = vmul.f32 %v754, %v748
      %v770 = vmul.f32 %v758, %v744
      %v771 = vmul.f32 %v762, %v749
      %v772 = vmul.f32 %v766, %v745
      %v773 = vmul.f32 %v762, %v750
      %v774 = vmul.f32 %v766, %v746
      %v775 = vadd.f32 %v767, 0.0
      %v776 = vadd.f32 %v768, 0.0
      %v777 = vadd.f32 %v769, 0.0
      %v778 = vadd.f32 %v770, 0.0
      %v779 = vadd.f32 %v771, 0.0
      %v780 = vadd.f32 %v772, 0.0
      %v781 = vadd.f32 %v773, 0.0
      %v782 = vadd.f32 %v774, 0.0
      %783 = vrot.lane.b32.xlu0 %v545, 16
      %v784 = vpop.permute.xlu0 %783
      %785 = vrot.lane.b32.xlu0 %v551, 16
      %v786 = vpop.permute.xlu0 %785
      %787 = vrot.lane.b32.xlu0 %v557, 16
      %v788 = vpop.permute.xlu0 %787
      %789 = vrot.lane.b32.xlu0 %v563, 16
      %v790 = vpop.permute.xlu0 %789
      %791 = vrot.lane.b32.xlu0 %v547, 16
      %v792 = vpop.permute.xlu0 %791
      %793 = vrot.lane.b32.xlu0 %v553, 16
      %v794 = vpop.permute.xlu0 %793
      %795 = vrot.lane.b32.xlu0 %v559, 16
      %v796 = vpop.permute.xlu0 %795
      %797 = vrot.lane.b32.xlu0 %v565, 16
      %v798 = vpop.permute.xlu0 %797
      %vm799 = vcmp.lt.s32.totalorder %v741, 16
      %v800 = vsel %vm799, %v784, %v792
      %v801 = vsel %vm799, %v786, %v794
      %v802 = vsel %vm799, %v788, %v796
      %v803 = vsel %vm799, %v790, %v798
      %v804 = vsel %vm799, %v792, %v784
      %v805 = vsel %vm799, %v794, %v786
      %v806 = vsel %vm799, %v796, %v788
      %v807 = vsel %vm799, %v798, %v790
      %v808 = vlaneseq
      %v809 = vshrl.u32 %v808, 7
      %v810 = vsub.s32 1, %v809
      %v811 = vrot.slane %v720, %v810
      %v812 = vlaneseq
      %v813 = vshrl.u32 %v812, 7
      %v814 = vsub.s32 1, %v813
      %v815 = vrot.slane %v721, %v814
      %v816 = vlaneseq
      %v817 = vshrl.u32 %v816, 7
      %v818 = vsub.s32 1, %v817
      %v819 = vrot.slane %v722, %v818
      %v820 = vlaneseq
      %v821 = vshrl.u32 %v820, 7
      %v822 = vsub.s32 1, %v821
      %v823 = vrot.slane %v723, %v822
      %v824 = vmul.f32 %v811, %v804
      %v825 = vmul.f32 %v815, %v800
      %v826 = vmul.f32 %v811, %v805
      %v827 = vmul.f32 %v815, %v801
      %v828 = vmul.f32 %v819, %v806
      %v829 = vmul.f32 %v823, %v802
      %v830 = vmul.f32 %v819, %v807
      %v831 = vmul.f32 %v823, %v803
      %v832 = vadd.f32 %v775, %v824
      %v833 = vadd.f32 %v776, %v825
      %v834 = vadd.f32 %v777, %v826
      %v835 = vadd.f32 %v778, %v827
      %v836 = vadd.f32 %v779, %v828
      %v837 = vadd.f32 %v780, %v829
      %v838 = vadd.f32 %v781, %v830
      %v839 = vadd.f32 %v782, %v831
      %v840 = vlaneseq
      %v841 = vshrl.u32 %v840, 7
      %v842 = vsub.s32 2, %v841
      %v843 = vrot.slane %v720, %v842
      %v844 = vlaneseq
      %v845 = vshrl.u32 %v844, 7
      %v846 = vsub.s32 2, %v845
      %v847 = vrot.slane %v721, %v846
      %v848 = vlaneseq
      %v849 = vshrl.u32 %v848, 7
      %v850 = vsub.s32 2, %v849
      %v851 = vrot.slane %v722, %v850
      %v852 = vlaneseq
      %v853 = vshrl.u32 %v852, 7
      %v854 = vsub.s32 2, %v853
      %v855 = vrot.slane %v723, %v854
      %v856 = vmul.f32 %v843, %v545
      %v857 = vmul.f32 %v847, %v547
      %v858 = vmul.f32 %v843, %v551
      %v859 = vmul.f32 %v847, %v553
      %v860 = vmul.f32 %v851, %v557
      %v861 = vmul.f32 %v855, %v559
      %v862 = vmul.f32 %v851, %v563
      %v863 = vmul.f32 %v855, %v565
      %v864 = vadd.f32 %v832, %v856
      %v865 = vadd.f32 %v833, %v857
      %v866 = vadd.f32 %v834, %v858
      %v867 = vadd.f32 %v835, %v859
      %v868 = vadd.f32 %v836, %v860
      %v869 = vadd.f32 %v837, %v861
      %v870 = vadd.f32 %v838, %v862
      %v871 = vadd.f32 %v839, %v863
      %872 = vrot.lane.b32.xlu0 %v545, 112
      %v873 = vpop.permute.xlu0 %872
      %874 = vrot.lane.b32.xlu0 %v551, 112
      %v875 = vpop.permute.xlu0 %874
      %876 = vrot.lane.b32.xlu0 %v557, 112
      %v877 = vpop.permute.xlu0 %876
      %878 = vrot.lane.b32.xlu0 %v563, 112
      %v879 = vpop.permute.xlu0 %878
      %880 = vrot.lane.b32.xlu0 %v547, 112
      %v881 = vpop.permute.xlu0 %880
      %882 = vrot.lane.b32.xlu0 %v553, 112
      %v883 = vpop.permute.xlu0 %882
      %884 = vrot.lane.b32.xlu0 %v559, 112
      %v885 = vpop.permute.xlu0 %884
      %886 = vrot.lane.b32.xlu0 %v565, 112
      %v887 = vpop.permute.xlu0 %886
      %vm888 = vcmp.lt.s32.totalorder %v741, 112
      %v889 = vsel %vm888, %v873, %v881
      %v890 = vsel %vm888, %v875, %v883
      %v891 = vsel %vm888, %v877, %v885
      %v892 = vsel %vm888, %v879, %v887
      %v893 = vsel %vm888, %v881, %v873
      %v894 = vsel %vm888, %v883, %v875
      %v895 = vsel %vm888, %v885, %v877
      %v896 = vsel %vm888, %v887, %v879
      %v897 = vlaneseq
      %v898 = vshrl.u32 %v897, 7
      %v899 = vsub.s32 3, %v898
      %v900 = vrot.slane %v720, %v899
      %v901 = vlaneseq
      %v902 = vshrl.u32 %v901, 7
      %v903 = vsub.s32 3, %v902
      %v904 = vrot.slane %v721, %v903
      %v905 = vlaneseq
      %v906 = vshrl.u32 %v905, 7
      %v907 = vsub.s32 3, %v906
      %v908 = vrot.slane %v722, %v907
      %v909 = vlaneseq
      %v910 = vshrl.u32 %v909, 7
      %v911 = vsub.s32 3, %v910
      %v912 = vrot.slane %v723, %v911
      %v913 = vmul.f32 %v900, %v889
      %v914 = vmul.f32 %v904, %v893
      %v915 = vmul.f32 %v900, %v890
      %v916 = vmul.f32 %v904, %v894
      %v917 = vmul.f32 %v908, %v891
      %v918 = vmul.f32 %v912, %v895
      %v919 = vmul.f32 %v908, %v892
      %v920 = vmul.f32 %v912, %v896
      %v921 = vadd.f32 %v864, %v913
      %v922 = vadd.f32 %v865, %v914
      %v923 = vadd.f32 %v866, %v915
      %v924 = vadd.f32 %v867, %v916
      %v925 = vadd.f32 %v868, %v917
      %v926 = vadd.f32 %v869, %v918
      %v927 = vadd.f32 %v870, %v919
      %v928 = vadd.f32 %v871, %v920
      %929 = vrot.lane.b32.xlu0 %v545, 96
      %v930 = vpop.permute.xlu0 %929
      %931 = vrot.lane.b32.xlu0 %v551, 96
      %v932 = vpop.permute.xlu0 %931
      %933 = vrot.lane.b32.xlu0 %v557, 96
      %v934 = vpop.permute.xlu0 %933
      %935 = vrot.lane.b32.xlu0 %v563, 96
      %v936 = vpop.permute.xlu0 %935
      %937 = vrot.lane.b32.xlu0 %v547, 96
      %v938 = vpop.permute.xlu0 %937
      %939 = vrot.lane.b32.xlu0 %v553, 96
      %v940 = vpop.permute.xlu0 %939
      %941 = vrot.lane.b32.xlu0 %v559, 96
      %v942 = vpop.permute.xlu0 %941
      %943 = vrot.lane.b32.xlu0 %v565, 96
      %v944 = vpop.permute.xlu0 %943
      %vm945 = vcmp.lt.s32.totalorder %v741, 96
      %v946 = vsel %vm945, %v930, %v938
      %v947 = vsel %vm945, %v932, %v940
      %v948 = vsel %vm945, %v934, %v942
      %v949 = vsel %vm945, %v936, %v944
      %v950 = vsel %vm945, %v938, %v930
      %v951 = vsel %vm945, %v940, %v932
      %v952 = vsel %vm945, %v942, %v934
      %v953 = vsel %vm945, %v944, %v936
      %v954 = vlaneseq
      %v955 = vshrl.u32 %v954, 7
      %v956 = vsub.s32 4, %v955
      %v957 = vrot.slane %v720, %v956
      %v958 = vlaneseq
      %v959 = vshrl.u32 %v958, 7
      %v960 = vsub.s32 4, %v959
      %v961 = vrot.slane %v721, %v960
      %v962 = vlaneseq
      %v963 = vshrl.u32 %v962, 7
      %v964 = vsub.s32 4, %v963
      %v965 = vrot.slane %v722, %v964
      %v966 = vlaneseq
      %v967 = vshrl.u32 %v966, 7
      %v968 = vsub.s32 4, %v967
      %v969 = vrot.slane %v723, %v968
      %v970 = vmul.f32 %v957, %v946
      %v971 = vmul.f32 %v961, %v950
      %v972 = vmul.f32 %v957, %v947
      %v973 = vmul.f32 %v961, %v951
      %v974 = vmul.f32 %v965, %v948
      %v975 = vmul.f32 %v969, %v952
      %v976 = vmul.f32 %v965, %v949
      %v977 = vmul.f32 %v969, %v953
      %v978 = vadd.f32 %v921, %v970
      %v979 = vadd.f32 %v922, %v971
      %v980 = vadd.f32 %v923, %v972
      %v981 = vadd.f32 %v924, %v973
      %v982 = vadd.f32 %v925, %v974
      %v983 = vadd.f32 %v926, %v975
      %v984 = vadd.f32 %v927, %v976
      %v985 = vadd.f32 %v928, %v977
      %v986 = vld [vmem:[%s7] sm:$0xff]
      %v987 = vld [vmem:[%s7 + $0x8] sm:$0xff]
      %v988 = vld [vmem:[%s7 + $0x10] sm:$0xff]
      %v989 = vld [vmem:[%s7 + $0x18] sm:$0xff]
      %991 = vset.pattern.permute.xlu0 0
      %992 = vperm.xlu0 %991, %v986
      %v993 = vpop.permute.xlu0 %992
      %996 = vset.pattern.permute.xlu0 0
      %997 = vperm.xlu0 %996, %v987
      %v998 = vpop.permute.xlu0 %997
      %1001 = vset.pattern.permute.xlu0 0
      %1002 = vperm.xlu0 %1001, %v988
      %v1003 = vpop.permute.xlu0 %1002
      %1006 = vset.pattern.permute.xlu0 0
      %1007 = vperm.xlu0 %1006, %v989
      %v1008 = vpop.permute.xlu0 %1007
      %v1010 = vmul.f32 %v978, %v993
      %v1011 = vmul.f32 %v979, %v993
      %v1012 = vmul.f32 %v980, %v998
      %v1013 = vmul.f32 %v981, %v998
      %v1014 = vmul.f32 %v982, %v1003
      %v1015 = vmul.f32 %v983, %v1003
      %v1016 = vmul.f32 %v984, %v1008
      %v1017 = vmul.f32 %v985, %v1008
      %1018 = vset.pattern.permute.xlu0 1
      %1019 = vperm.xlu0 %1018, %v986
      %v1020 = vpop.permute.xlu0 %1019
      %1022 = vset.pattern.permute.xlu0 1
      %1023 = vperm.xlu0 %1022, %v987
      %v1024 = vpop.permute.xlu0 %1023
      %1026 = vset.pattern.permute.xlu0 1
      %1027 = vperm.xlu0 %1026, %v988
      %v1028 = vpop.permute.xlu0 %1027
      %1030 = vset.pattern.permute.xlu0 1
      %1031 = vperm.xlu0 %1030, %v989
      %v1032 = vpop.permute.xlu0 %1031
      %v1034 = vadd.f32 %v1010, %v1020
      %v1035 = vadd.f32 %v1011, %v1020
      %v1036 = vadd.f32 %v1012, %v1024
      %v1037 = vadd.f32 %v1013, %v1024
      %v1038 = vadd.f32 %v1014, %v1028
      %v1039 = vadd.f32 %v1015, %v1028
      %v1040 = vadd.f32 %v1016, %v1032
      %v1041 = vadd.f32 %v1017, %v1032
      %v1042 = vld [vmem:[%s3] sm:$0x1f]
      %v1043 = vld [vmem:[%s3 + $0x8] sm:$0x1f]
      %v1045 = vsel %vm569, %v1042, 0
      %1047 = vmatprep.subr.mxu0 %v523
      %1048 = vmatpush1.msra.mxu0 %v521
      %1049 = vmatprep.subr.mxu0 %v529
      %1050 = vmatpush1.msra.mxu0 %v527
      %1051 = vmatprep.subr.mxu0 0.0
      %1052 = vmatpush1.msra.mxu0 0.0
      %1053 = vmatprep.subr.mxu0 0.0
      %1054 = vmatpush1.msra.mxu0 0.0
      %1055 = vmatprep.subr.mxu0 0.0
      %1056 = vmatpush1.msra.mxu0 0.0
      %1057 = vmatprep.subr.mxu0 0.0
      %1058 = vmatpush1.msra.mxu0 0.0
      %1059 = vmatprep.subr.mxu0 0.0
      %1060 = vmatpush1.msra.mxu0 0.0
      %1061 = vmatprep.subr.mxu0 0.0
      %1062 = vmatpush1.msra.mxu0 0.0
      %1063 = vmatprep.subr.mxu0 0.0
      %1064 = vmatpush1.msra.mxu0 0.0
      %1065 = vmatprep.subr.mxu0 0.0
      %1066 = vmatpush1.msra.mxu0 0.0
      %1067 = vmatprep.subr.mxu0 0.0
      %1068 = vmatpush1.msra.mxu0 0.0
      %1069 = vmatprep.subr.mxu0 0.0
      %1070 = vmatpush1.msra.mxu0 0.0
      %1071 = vmatprep.subr.mxu0 0.0
      %1072 = vmatpush1.msra.mxu0 0.0
      %1073 = vmatprep.subr.mxu0 0.0
      %1074 = vmatpush1.msra.mxu0 0.0
      %1075 = vmatprep.subr.mxu0 0.0
      %1076 = vmatpush1.msra.mxu0 0.0
      %1077 = vmatprep.subr.mxu0 0.0
      %1078 = vmatpush1.msra.mxu0 0.0
      %1079 = vmatprep.subr.mxu0 0.0
      %1080 = vmatpush1.msra.mxu0 0.0
      %1081 = vmatprep.subr.mxu0 0.0
      %1082 = vmatpush1.msra.mxu0 0.0
      %1083 = vmatprep.subr.mxu0 0.0
      %1084 = vmatpush1.msra.mxu0 0.0
      %1085 = vmatprep.subr.mxu0 0.0
      %1086 = vmatpush1.msra.mxu0 0.0
      %1087 = vmatprep.subr.mxu0 0.0
      %1088 = vmatpush1.msra.mxu0 0.0
      %1089 = vmatprep.subr.mxu0 0.0
      %1090 = vmatpush1.msra.mxu0 0.0
      %1091 = vmatprep.subr.mxu0 0.0
      %1092 = vmatpush1.msra.mxu0 0.0
      %1093 = vmatprep.subr.mxu0 0.0
      %1094 = vmatpush1.msra.mxu0 0.0
      %1095 = vmatprep.subr.mxu0 0.0
      %1096 = vmatpush1.msra.mxu0 0.0
      %1097 = vmatprep.subr.mxu0 0.0
      %1098 = vmatpush1.msra.mxu0 0.0
      %1099 = vmatprep.subr.mxu0 0.0
      %1100 = vmatpush1.msra.mxu0 0.0
      %1101 = vmatprep.subr.mxu0 0.0
      %1102 = vmatpush1.msra.mxu0 0.0
      %1103 = vmatprep.subr.mxu0 0.0
      %1104 = vmatpush1.msra.mxu0 0.0
      %1105 = vmatprep.subr.mxu0 0.0
      %1106 = vmatpush1.msra.mxu0 0.0
      %1107 = vmatprep.subr.mxu0 0.0
      %1108 = vmatpush1.msra.mxu0 0.0
      %1109 = vmatprep.subr.mxu0 0.0
      %1110 = vmatpush1.msra.mxu0 0.0
      %1111 = vmatprep.mubr.f32.mxu0 0.0
      %1112 = vmatmul.mubr.f32.gmra.mrb[0].mxu0 %v1045
      %v1113 = vpop.f32.mrb[0].mxu0
      %v1114 = vadd.f32 0.0, %v1113
      %v1115 = vpop.f32.mrb[0].mxu0
      %v1116 = vadd.f32 0.0, %v1115
      %1117 = vdwg.mxu0
      %v1119 = vsel %vm569, %v1043, 0
      %1121 = vmatprep.subr.mxu0 %v535
      %1122 = vmatpush1.msra.mxu0 %v533
      %1123 = vmatprep.subr.mxu0 %v541
      %1124 = vmatpush1.msra.mxu0 %v539
      %1125 = vmatprep.subr.mxu0 0.0
      %1126 = vmatpush1.msra.mxu0 0.0
      %1127 = vmatprep.subr.mxu0 0.0
      %1128 = vmatpush1.msra.mxu0 0.0
      %1129 = vmatprep.subr.mxu0 0.0
      %1130 = vmatpush1.msra.mxu0 0.0
      %1131 = vmatprep.subr.mxu0 0.0
      %1132 = vmatpush1.msra.mxu0 0.0
      %1133 = vmatprep.subr.mxu0 0.0
      %1134 = vmatpush1.msra.mxu0 0.0
      %1135 = vmatprep.subr.mxu0 0.0
      %1136 = vmatpush1.msra.mxu0 0.0
      %1137 = vmatprep.subr.mxu0 0.0
      %1138 = vmatpush1.msra.mxu0 0.0
      %1139 = vmatprep.subr.mxu0 0.0
      %1140 = vmatpush1.msra.mxu0 0.0
      %1141 = vmatprep.subr.mxu0 0.0
      %1142 = vmatpush1.msra.mxu0 0.0
      %1143 = vmatprep.subr.mxu0 0.0
      %1144 = vmatpush1.msra.mxu0 0.0
      %1145 = vmatprep.subr.mxu0 0.0
      %1146 = vmatpush1.msra.mxu0 0.0
      %1147 = vmatprep.subr.mxu0 0.0
      %1148 = vmatpush1.msra.mxu0 0.0
      %1149 = vmatprep.subr.mxu0 0.0
      %1150 = vmatpush1.msra.mxu0 0.0
      %1151 = vmatprep.subr.mxu0 0.0
      %1152 = vmatpush1.msra.mxu0 0.0
      %1153 = vmatprep.subr.mxu0 0.0
      %1154 = vmatpush1.msra.mxu0 0.0
      %1155 = vmatprep.subr.mxu0 0.0
      %1156 = vmatpush1.msra.mxu0 0.0
      %1157 = vmatprep.subr.mxu0 0.0
      %1158 = vmatpush1.msra.mxu0 0.0
      %1159 = vmatprep.subr.mxu0 0.0
      %1160 = vmatpush1.msra.mxu0 0.0
      %1161 = vmatprep.subr.mxu0 0.0
      %1162 = vmatpush1.msra.mxu0 0.0
      %1163 = vmatprep.subr.mxu0 0.0
      %1164 = vmatpush1.msra.mxu0 0.0
      %1165 = vmatprep.subr.mxu0 0.0
      %1166 = vmatpush1.msra.mxu0 0.0
      %1167 = vmatprep.subr.mxu0 0.0
      %1168 = vmatpush1.msra.mxu0 0.0
      %1169 = vmatprep.subr.mxu0 0.0
      %1170 = vmatpush1.msra.mxu0 0.0
      %1171 = vmatprep.subr.mxu0 0.0
      %1172 = vmatpush1.msra.mxu0 0.0
      %1173 = vmatprep.subr.mxu0 0.0
      %1174 = vmatpush1.msra.mxu0 0.0
      %1175 = vmatprep.subr.mxu0 0.0
      %1176 = vmatpush1.msra.mxu0 0.0
      %1177 = vmatprep.subr.mxu0 0.0
      %1178 = vmatpush1.msra.mxu0 0.0
      %1179 = vmatprep.subr.mxu0 0.0
      %1180 = vmatpush1.msra.mxu0 0.0
      %1181 = vmatprep.subr.mxu0 0.0
      %1182 = vmatpush1.msra.mxu0 0.0
      %1183 = vmatprep.subr.mxu0 0.0
      %1184 = vmatpush1.msra.mxu0 0.0
      %1185 = vmatprep.mubr.f32.mxu0 0.0
      %1186 = vmatmul.mubr.f32.gmra.mrb[0].mxu0 %v1119
      %v1187 = vpop.f32.mrb[0].mxu0
      %v1188 = vadd.f32 0.0, %v1187
      %v1189 = vpop.f32.mrb[0].mxu0
      %v1190 = vadd.f32 0.0, %v1189
      %1191 = vdwg.mxu0
      %v1192 = vld [vmem:[%s5] sm:$0x1f]
      %v1193 = vld [vmem:[%s5 + $0x8] sm:$0x1f]
      %v1194 = vmul.f32 %v1114, %v1192
      %v1195 = vmul.f32 %v1116, %v1193
      %v1196 = vmul.f32 %v1188, %v1192
      %v1197 = vmul.f32 %v1190, %v1193
      %v1198 = vld [vmem:[%s405] sm:$0xff]
      %v1199 = vld [vmem:[%s405 + $0x8] sm:$0xff]
      %v1200 = vld [vmem:[%s405 + $0x10] sm:$0xff]
      %v1201 = vld [vmem:[%s405 + $0x18] sm:$0xff]
      %v1202 = vunpack.c.l.bf16 %v1198
      %v1203 = vunpack.c.h.bf16 %v1198
      %v1204 = vunpack.c.l.bf16 %v1199
      %v1205 = vunpack.c.h.bf16 %v1199
      %v1206 = vunpack.c.l.bf16 %v1200
      %v1207 = vunpack.c.h.bf16 %v1200
      %v1208 = vunpack.c.l.bf16 %v1201
      %v1209 = vunpack.c.h.bf16 %v1201
      %1210 = vrot.lane.b32.xlu0 %v1034, 2
      %v1211 = vpop.permute.xlu0 %1210
      %1212 = vrot.lane.b32.xlu0 %v1036, 2
      %v1213 = vpop.permute.xlu0 %1212
      %1214 = vrot.lane.b32.xlu0 %v1038, 2
      %v1215 = vpop.permute.xlu0 %1214
      %1216 = vrot.lane.b32.xlu0 %v1040, 2
      %v1217 = vpop.permute.xlu0 %1216
      %1218 = vrot.lane.b32.xlu0 %v1035, 2
      %v1219 = vpop.permute.xlu0 %1218
      %1220 = vrot.lane.b32.xlu0 %v1037, 2
      %v1221 = vpop.permute.xlu0 %1220
      %1222 = vrot.lane.b32.xlu0 %v1039, 2
      %v1223 = vpop.permute.xlu0 %1222
      %1224 = vrot.lane.b32.xlu0 %v1041, 2
      %v1225 = vpop.permute.xlu0 %1224
      %vm1226 = vcmp.lt.s32.totalorder %v741, 2
      %v1227 = vsel %vm1226, %v1211, %v1219
      %v1228 = vsel %vm1226, %v1213, %v1221
      %v1229 = vsel %vm1226, %v1215, %v1223
      %v1230 = vsel %vm1226, %v1217, %v1225
      %v1231 = vsel %vm1226, %v1219, %v1211
      %v1232 = vsel %vm1226, %v1221, %v1213
      %v1233 = vsel %vm1226, %v1223, %v1215
      %v1234 = vsel %vm1226, %v1225, %v1217
      %v1235 = vlaneseq
      %v1236 = vshrl.u32 %v1235, 7
      %v1237 = vsub.s32 0, %v1236
      %v1238 = vrot.slane %v1194, %v1237
      %v1239 = vlaneseq
      %v1240 = vshrl.u32 %v1239, 7
      %v1241 = vsub.s32 0, %v1240
      %v1242 = vrot.slane %v1195, %v1241
      %v1243 = vlaneseq
      %v1244 = vshrl.u32 %v1243, 7
      %v1245 = vsub.s32 0, %v1244
      %v1246 = vrot.slane %v1196, %v1245
      %v1247 = vlaneseq
      %v1248 = vshrl.u32 %v1247, 7
      %v1249 = vsub.s32 0, %v1248
      %v1250 = vrot.slane %v1197, %v1249
      %v1251 = vmul.f32 %v1238, %v1231
      %v1252 = vmul.f32 %v1242, %v1227
      %v1253 = vmul.f32 %v1238, %v1232
      %v1254 = vmul.f32 %v1242, %v1228
      %v1255 = vmul.f32 %v1246, %v1233
      %v1256 = vmul.f32 %v1250, %v1229
      %v1257 = vmul.f32 %v1246, %v1234
      %v1258 = vmul.f32 %v1250, %v1230
      %v1259 = vadd.f32 %v1202, %v1251
      %v1260 = vadd.f32 %v1203, %v1252
      %v1261 = vadd.f32 %v1204, %v1253
      %v1262 = vadd.f32 %v1205, %v1254
      %v1263 = vadd.f32 %v1206, %v1255
      %v1264 = vadd.f32 %v1207, %v1256
      %v1265 = vadd.f32 %v1208, %v1257
      %v1266 = vadd.f32 %v1209, %v1258
      %1267 = vrot.lane.b32.xlu0 %v1034, 1
      %v1268 = vpop.permute.xlu0 %1267
      %1269 = vrot.lane.b32.xlu0 %v1036, 1
      %v1270 = vpop.permute.xlu0 %1269
      %1271 = vrot.lane.b32.xlu0 %v1038, 1
      %v1272 = vpop.permute.xlu0 %1271
      %1273 = vrot.lane.b32.xlu0 %v1040, 1
      %v1274 = vpop.permute.xlu0 %1273
      %1275 = vrot.lane.b32.xlu0 %v1035, 1
      %v1276 = vpop.permute.xlu0 %1275
      %1277 = vrot.lane.b32.xlu0 %v1037, 1
      %v1278 = vpop.permute.xlu0 %1277
      %1279 = vrot.lane.b32.xlu0 %v1039, 1
      %v1280 = vpop.permute.xlu0 %1279
      %1281 = vrot.lane.b32.xlu0 %v1041, 1
      %v1282 = vpop.permute.xlu0 %1281
      %vm1283 = vcmp.lt.s32.totalorder %v741, 1
      %v1284 = vsel %vm1283, %v1268, %v1276
      %v1285 = vsel %vm1283, %v1270, %v1278
      %v1286 = vsel %vm1283, %v1272, %v1280
      %v1287 = vsel %vm1283, %v1274, %v1282
      %v1288 = vsel %vm1283, %v1276, %v1268
      %v1289 = vsel %vm1283, %v1278, %v1270
      %v1290 = vsel %vm1283, %v1280, %v1272
      %v1291 = vsel %vm1283, %v1282, %v1274
      %v1292 = vlaneseq
      %v1293 = vshrl.u32 %v1292, 7
      %v1294 = vsub.s32 1, %v1293
      %v1295 = vrot.slane %v1194, %v1294
      %v1296 = vlaneseq
      %v1297 = vshrl.u32 %v1296, 7
      %v1298 = vsub.s32 1, %v1297
      %v1299 = vrot.slane %v1195, %v1298
      %v1300 = vlaneseq
      %v1301 = vshrl.u32 %v1300, 7
      %v1302 = vsub.s32 1, %v1301
      %v1303 = vrot.slane %v1196, %v1302
      %v1304 = vlaneseq
      %v1305 = vshrl.u32 %v1304, 7
      %v1306 = vsub.s32 1, %v1305
      %v1307 = vrot.slane %v1197, %v1306
      %v1308 = vmul.f32 %v1295, %v1288
      %v1309 = vmul.f32 %v1299, %v1284
      %v1310 = vmul.f32 %v1295, %v1289
      %v1311 = vmul.f32 %v1299, %v1285
      %v1312 = vmul.f32 %v1303, %v1290
      %v1313 = vmul.f32 %v1307, %v1286
      %v1314 = vmul.f32 %v1303, %v1291
      %v1315 = vmul.f32 %v1307, %v1287
      %v1316 = vadd.f32 %v1259, %v1308
      %v1317 = vadd.f32 %v1260, %v1309
      %v1318 = vadd.f32 %v1261, %v1310
      %v1319 = vadd.f32 %v1262, %v1311
      %v1320 = vadd.f32 %v1263, %v1312
      %v1321 = vadd.f32 %v1264, %v1313
      %v1322 = vadd.f32 %v1265, %v1314
      %v1323 = vadd.f32 %v1266, %v1315
      %v1324 = vlaneseq
      %v1325 = vshrl.u32 %v1324, 7
      %v1326 = vsub.s32 2, %v1325
      %v1327 = vrot.slane %v1194, %v1326
      %v1328 = vlaneseq
      %v1329 = vshrl.u32 %v1328, 7
      %v1330 = vsub.s32 2, %v1329
      %v1331 = vrot.slane %v1195, %v1330
      %v1332 = vlaneseq
      %v1333 = vshrl.u32 %v1332, 7
      %v1334 = vsub.s32 2, %v1333
      %v1335 = vrot.slane %v1196, %v1334
      %v1336 = vlaneseq
      %v1337 = vshrl.u32 %v1336, 7
      %v1338 = vsub.s32 2, %v1337
      %v1339 = vrot.slane %v1197, %v1338
      %v1340 = vmul.f32 %v1327, %v1034
      %v1341 = vmul.f32 %v1331, %v1035
      %v1342 = vmul.f32 %v1327, %v1036
      %v1343 = vmul.f32 %v1331, %v1037
      %v1344 = vmul.f32 %v1335, %v1038
      %v1345 = vmul.f32 %v1339, %v1039
      %v1346 = vmul.f32 %v1335, %v1040
      %v1347 = vmul.f32 %v1339, %v1041
      %v1348 = vadd.f32 %v1316, %v1340
      %v1349 = vadd.f32 %v1317, %v1341
      %v1350 = vadd.f32 %v1318, %v1342
      %v1351 = vadd.f32 %v1319, %v1343
      %v1352 = vadd.f32 %v1320, %v1344
      %v1353 = vadd.f32 %v1321, %v1345
      %v1354 = vadd.f32 %v1322, %v1346
      %v1355 = vadd.f32 %v1323, %v1347
      %1356 = vrot.lane.b32.xlu0 %v1034, 127
      %v1357 = vpop.permute.xlu0 %1356
      %1358 = vrot.lane.b32.xlu0 %v1036, 127
      %v1359 = vpop.permute.xlu0 %1358
      %1360 = vrot.lane.b32.xlu0 %v1038, 127
      %v1361 = vpop.permute.xlu0 %1360
      %1362 = vrot.lane.b32.xlu0 %v1040, 127
      %v1363 = vpop.permute.xlu0 %1362
      %1364 = vrot.lane.b32.xlu0 %v1035, 127
      %v1365 = vpop.permute.xlu0 %1364
      %1366 = vrot.lane.b32.xlu0 %v1037, 127
      %v1367 = vpop.permute.xlu0 %1366
      %1368 = vrot.lane.b32.xlu0 %v1039, 127
      %v1369 = vpop.permute.xlu0 %1368
      %1370 = vrot.lane.b32.xlu0 %v1041, 127
      %v1371 = vpop.permute.xlu0 %1370
      %vm1372 = vcmp.lt.s32.totalorder %v741, 127
      %v1373 = vsel %vm1372, %v1357, %v1365
      %v1374 = vsel %vm1372, %v1359, %v1367
      %v1375 = vsel %vm1372, %v1361, %v1369
      %v1376 = vsel %vm1372, %v1363, %v1371
      %v1377 = vsel %vm1372, %v1365, %v1357
      %v1378 = vsel %vm1372, %v1367, %v1359
      %v1379 = vsel %vm1372, %v1369, %v1361
      %v1380 = vsel %vm1372, %v1371, %v1363
      %v1381 = vlaneseq
      %v1382 = vshrl.u32 %v1381, 7
      %v1383 = vsub.s32 3, %v1382
      %v1384 = vrot.slane %v1194, %v1383
      %v1385 = vlaneseq
      %v1386 = vshrl.u32 %v1385, 7
      %v1387 = vsub.s32 3, %v1386
      %v1388 = vrot.slane %v1195, %v1387
      %v1389 = vlaneseq
      %v1390 = vshrl.u32 %v1389, 7
      %v1391 = vsub.s32 3, %v1390
      %v1392 = vrot.slane %v1196, %v1391
      %v1393 = vlaneseq
      %v1394 = vshrl.u32 %v1393, 7
      %v1395 = vsub.s32 3, %v1394
      %v1396 = vrot.slane %v1197, %v1395
      %v1397 = vmul.f32 %v1384, %v1373
      %v1398 = vmul.f32 %v1388, %v1377
      %v1399 = vmul.f32 %v1384, %v1374
      %v1400 = vmul.f32 %v1388, %v1378
      %v1401 = vmul.f32 %v1392, %v1375
      %v1402 = vmul.f32 %v1396, %v1379
      %v1403 = vmul.f32 %v1392, %v1376
      %v1404 = vmul.f32 %v1396, %v1380
      %v1405 = vadd.f32 %v1348, %v1397
      %v1406 = vadd.f32 %v1349, %v1398
      %v1407 = vadd.f32 %v1350, %v1399
      %v1408 = vadd.f32 %v1351, %v1400
      %v1409 = vadd.f32 %v1352, %v1401
      %v1410 = vadd.f32 %v1353, %v1402
      %v1411 = vadd.f32 %v1354, %v1403
      %v1412 = vadd.f32 %v1355, %v1404
      %1413 = vrot.lane.b32.xlu0 %v1034, 126
      %v1414 = vpop.permute.xlu0 %1413
      %1415 = vrot.lane.b32.xlu0 %v1036, 126
      %v1416 = vpop.permute.xlu0 %1415
      %1417 = vrot.lane.b32.xlu0 %v1038, 126
      %v1418 = vpop.permute.xlu0 %1417
      %1419 = vrot.lane.b32.xlu0 %v1040, 126
      %v1420 = vpop.permute.xlu0 %1419
      %1421 = vrot.lane.b32.xlu0 %v1035, 126
      %v1422 = vpop.permute.xlu0 %1421
      %1423 = vrot.lane.b32.xlu0 %v1037, 126
      %v1424 = vpop.permute.xlu0 %1423
      %1425 = vrot.lane.b32.xlu0 %v1039, 126
      %v1426 = vpop.permute.xlu0 %1425
      %1427 = vrot.lane.b32.xlu0 %v1041, 126
      %v1428 = vpop.permute.xlu0 %1427
      %vm1429 = vcmp.lt.s32.totalorder %v741, 126
      %v1430 = vsel %vm1429, %v1414, %v1422
      %v1431 = vsel %vm1429, %v1416, %v1424
      %v1432 = vsel %vm1429, %v1418, %v1426
      %v1433 = vsel %vm1429, %v1420, %v1428
      %v1434 = vsel %vm1429, %v1422, %v1414
      %v1435 = vsel %vm1429, %v1424, %v1416
      %v1436 = vsel %vm1429, %v1426, %v1418
      %v1437 = vsel %vm1429, %v1428, %v1420
      %v1438 = vlaneseq
      %v1439 = vshrl.u32 %v1438, 7
      %v1440 = vsub.s32 4, %v1439
      %v1441 = vrot.slane %v1194, %v1440
      %v1442 = vlaneseq
      %v1443 = vshrl.u32 %v1442, 7
      %v1444 = vsub.s32 4, %v1443
      %v1445 = vrot.slane %v1195, %v1444
      %v1446 = vlaneseq
      %v1447 = vshrl.u32 %v1446, 7
      %v1448 = vsub.s32 4, %v1447
      %v1449 = vrot.slane %v1196, %v1448
      %v1450 = vlaneseq
      %v1451 = vshrl.u32 %v1450, 7
      %v1452 = vsub.s32 4, %v1451
      %v1453 = vrot.slane %v1197, %v1452
      %v1454 = vmul.f32 %v1441, %v1430
      %v1455 = vmul.f32 %v1445, %v1434
      %v1456 = vmul.f32 %v1441, %v1431
      %v1457 = vmul.f32 %v1445, %v1435
      %v1458 = vmul.f32 %v1449, %v1432
      %v1459 = vmul.f32 %v1453, %v1436
      %v1460 = vmul.f32 %v1449, %v1433
      %v1461 = vmul.f32 %v1453, %v1437
      %v1462 = vadd.f32 %v1405, %v1454
      %v1463 = vadd.f32 %v1406, %v1455
      %v1464 = vadd.f32 %v1407, %v1456
      %v1465 = vadd.f32 %v1408, %v1457
      %v1466 = vadd.f32 %v1409, %v1458
      %v1467 = vadd.f32 %v1410, %v1459
      %v1468 = vadd.f32 %v1411, %v1460
      %v1469 = vadd.f32 %v1412, %v1461
      %v1470 = vld [vmem:[%s411] sm:$0xf]
      %vm1471 = vcmask 261120
      %v1473 = vsel %vm1471, %v1470, 0
      %1475 = vmatprep.subr.mxu0 %v1463
      %1476 = vmatpush1.msra.mxu0 %v1462
      %1477 = vmatprep.subr.mxu0 %v1465
      %1478 = vmatpush1.msra.mxu0 %v1464
      %1479 = vmatprep.subr.mxu0 %v1467
      %1480 = vmatpush1.msra.mxu0 %v1466
      %1481 = vmatprep.subr.mxu0 %v1469
      %1482 = vmatpush1.msra.mxu0 %v1468
      %1483 = vmatprep.subr.mxu0 0.0
      %1484 = vmatpush1.msra.mxu0 0.0
      %1485 = vmatprep.subr.mxu0 0.0
      %1486 = vmatpush1.msra.mxu0 0.0
      %1487 = vmatprep.subr.mxu0 0.0
      %1488 = vmatpush1.msra.mxu0 0.0
      %1489 = vmatprep.subr.mxu0 0.0
      %1490 = vmatpush1.msra.mxu0 0.0
      %1491 = vmatprep.subr.mxu0 0.0
      %1492 = vmatpush1.msra.mxu0 0.0
      %1493 = vmatprep.subr.mxu0 0.0
      %1494 = vmatpush1.msra.mxu0 0.0
      %1495 = vmatprep.subr.mxu0 0.0
      %1496 = vmatpush1.msra.mxu0 0.0
      %1497 = vmatprep.subr.mxu0 0.0
      %1498 = vmatpush1.msra.mxu0 0.0
      %1499 = vmatprep.subr.mxu0 0.0
      %1500 = vmatpush1.msra.mxu0 0.0
      %1501 = vmatprep.subr.mxu0 0.0
      %1502 = vmatpush1.msra.mxu0 0.0
      %1503 = vmatprep.subr.mxu0 0.0
      %1504 = vmatpush1.msra.mxu0 0.0
      %1505 = vmatprep.subr.mxu0 0.0
      %1506 = vmatpush1.msra.mxu0 0.0
      %1507 = vmatprep.subr.mxu0 0.0
      %1508 = vmatpush1.msra.mxu0 0.0
      %1509 = vmatprep.subr.mxu0 0.0
      %1510 = vmatpush1.msra.mxu0 0.0
      %1511 = vmatprep.subr.mxu0 0.0
      %1512 = vmatpush1.msra.mxu0 0.0
      %1513 = vmatprep.subr.mxu0 0.0
      %1514 = vmatpush1.msra.mxu0 0.0
      %1515 = vmatprep.subr.mxu0 0.0
      %1516 = vmatpush1.msra.mxu0 0.0
      %1517 = vmatprep.subr.mxu0 0.0
      %1518 = vmatpush1.msra.mxu0 0.0
      %1519 = vmatprep.subr.mxu0 0.0
      %1520 = vmatpush1.msra.mxu0 0.0
      %1521 = vmatprep.subr.mxu0 0.0
      %1522 = vmatpush1.msra.mxu0 0.0
      %1523 = vmatprep.subr.mxu0 0.0
      %1524 = vmatpush1.msra.mxu0 0.0
      %1525 = vmatprep.subr.mxu0 0.0
      %1526 = vmatpush1.msra.mxu0 0.0
      %1527 = vmatprep.subr.mxu0 0.0
      %1528 = vmatpush1.msra.mxu0 0.0
      %1529 = vmatprep.subr.mxu0 0.0
      %1530 = vmatpush1.msra.mxu0 0.0
      %1531 = vmatprep.subr.mxu0 0.0
      %1532 = vmatpush1.msra.mxu0 0.0
      %1533 = vmatprep.subr.mxu0 0.0
      %1534 = vmatpush1.msra.mxu0 0.0
      %1535 = vmatprep.subr.mxu0 0.0
      %1536 = vmatpush1.msra.mxu0 0.0
      %1537 = vmatprep.subr.mxu0 0.0
      %1538 = vmatpush1.msra.mxu0 0.0
      %1539 = vmatprep.mubr.f32.mxu0 0.0
      %1540 = vmatmul.mubr.f32.gmra.mrb[0].mxu0 %v1473
      %v1541 = vpop.f32.mrb[0].mxu0
      %v1542 = vadd.f32 0.0, %v1541
      %v1543 = vpop.f32.mrb[0].mxu0
      %v1544 = vadd.f32 0.0, %v1543
      %1545 = vdwg.mxu0
      %v1548 = vcombine.low %v1542, %v1544
      %1550 = vst [vmem:[%s417] sm:$0xff] %v1548
      %s1551 = sadd.s32 %s24, %s25
      %p1552 = scmp.lt.s32.totalorder %s1551, 1
      %s1553 = scalar_select %p1552, %s1551, 1
      %s1554 = smul.addr %s1553, 2
      %s1555 = smul.addr %s1554, 4
      %s1556 = scalar_lea.vmem %s9, %s1555
      // Predicated region
      $region57: #{gsa_forward_pallas.3} parent=55 // pred_check
        %p1557 = pneg %p263
      $region58: #{gsa_forward_pallas.3} parent=55 // pred_check_branch
        %1559 = sbr.rel (%p1557) target = $region60
      $region59: #{gsa_forward_pallas.3} parent=55 // pred_region
        %s1560 = sadd.s32 %s24, %s25
      $region60: #{gsa_forward_pallas.3} parent=55 // pred_fallthru
        _
    $region56: #{gsa_forward_pallas.3} parent=5 // pred_fallthru
      _
    %p1561 = scmp.le.s32.totalorder 2, %s15
    // Predicated region
    $region61: #{gsa_forward_pallas.3} parent=5 // pred_check
      %p1562 = pneg %p1561
    $region62: #{gsa_forward_pallas.3} parent=5 // pred_check_branch
      %1564 = sbr.rel (%p1562) target = $region64
    $region63: #{gsa_forward_pallas.3} parent=5 // pred_region
      %s1565 = ssub.s32 %s15, 2
      // Predicated region
      $region65: #{gsa_forward_pallas.3} parent=63 // pred_check
        %p1566 = pneg %p269
      $region66: #{gsa_forward_pallas.3} parent=63 // pred_check_branch
        %1568 = sbr.rel (%p1566) target = $region68
      $region67: #{gsa_forward_pallas.3} parent=63 // pred_region
        %s1569 = sadd.s32 %s26, %s27
        %p1570 = scmp.lt.s32.totalorder %s1569, 1
        %s1571 = scalar_select %p1570, %s1569, 1
        %s1572 = smul.addr %s1571, 2
        %s1573 = smul.addr %s1572, 4
        %s1574 = scalar_lea.vmem %s9, %s1573
      $region68: #{gsa_forward_pallas.3} parent=63 // pred_fallthru
        _
    $region64: #{gsa_forward_pallas.3} parent=5 // pred_fallthru
      _
  $region6: #{gsa_forward_pallas.3} parent=0 // loop_footer
    %s19 = sadd.s32 1, %s15
  $region7: #{gsa_forward_pallas.3} parent=0 // loop_footer_branch
    %14 = sbr.rel target = $region3
  $region8: #{gsa_forward_pallas.3} parent=0 // loop_exit
    _

</llo_original>
